<compile_context>
chip_gen: v7x
topology: tpu7x:2x2x1
jax: 0.10.0
libtpu: 0.0.40
codegen_flags: <defaults>
</compile_context>

<pallas_src>
import math
from functools import partial

import jax
import jax.numpy as jnp
import numpy as np
from jax import lax
from jax.experimental import pallas as pl
from jax.experimental.pallas import tpu as pltpu

PAD_ID = 0      # bert-base-uncased tokenizer.pad_token_id (hard-coded; no HF download)
MAX_LEN = 400
LN_EPS = 1e-5   # torch nn.LayerNorm default


def _derive_vmem_limit():
    # ~3/4 of physical VMEM: ~96-100 MiB on v5e/v6e (128 MiB), ~48 MiB on v7x (64 MiB).
    try:
        cap = int(getattr(pltpu.get_tpu_info(), "vmem_capacity_bytes", 0) or 0)
    except Exception:
        cap = 0
    if cap <= 0:
        cap = 128 * 1024 * 1024
    return max(32 * 1024 * 1024, (cap * 3) // 4)


VMEM_LIMIT = _derive_vmem_limit()


def _cparams(dim_sem):
    return pltpu.CompilerParams(dimension_semantics=dim_sem,
                                vmem_limit_bytes=VMEM_LIMIT)


# ---------------- positional encoding (same math as the PyTorch reference) ------------
def get_angles(pos, i, d_model):
    angle_rates = 1 / np.power(10000, 2 * (i // 2) / np.float32(d_model))
    return pos * angle_rates


def positional_encoding(position, d_model):
    angle_rads = get_angles(np.arange(position)[:, None],
                            np.arange(d_model)[None, :], d_model)
    angle_rads[:, 0::2] = np.sin(angle_rads[:, 0::2])
    angle_rads[:, 1::2] = np.cos(angle_rads[:, 1::2])
    return jnp.asarray(angle_rads[None, ...], dtype=jnp.float32)  # (1, max_len, D)


def _row_tile(m, target=512):
    return m if m <= target else target


def _dff_tile(dff, target=512):
    if dff <= target:
        return dff
    for t in (512, 384, 256, 128):       # lane/sublane aligned AND divides DFF
        if dff % t == 0:
            return t
    return dff                            # fallback: un-tiled reduction axis


# ---------------- kernel 1: fused QKV projection ---------------------------------------
def _qkv_kernel(x_ref, w_ref, b_ref, q_ref, k_ref, v_ref):
    x = x_ref[...].astype(w_ref.dtype)                     # bf16 (or f32) MXU operands
    for j, o_ref in enumerate((q_ref, k_ref, v_ref)):
        y = jnp.dot(x, w_ref[j], preferred_element_type=jnp.float32) + b_ref[j]
        o_ref[...] = y.astype(o_ref.dtype)


def qkv_projection(xf, wqkv3, bqkv3, out_dtype):
    """xf: (M, D) f32; wqkv3: (3, D, D); bqkv3: (3, 1, D) f32 -> three (M, D) arrays."""
    M, D = xf.shape
    tm = _row_tile(M)
    out = jax.ShapeDtypeStruct((M, D), out_dtype)
    out_spec = pl.BlockSpec((tm, D), lambda i: (i, 0))
    return pl.pallas_call(
        _qkv_kernel,
        grid=(pl.cdiv(M, tm),),
        in_specs=[pl.BlockSpec((tm, D), lambda i: (i, 0)),
                  pl.BlockSpec((3, D, D), lambda i: (0, 0, 0)),
                  pl.BlockSpec((3, 1, D), lambda i: (0, 0, 0))],
        out_specs=(out_spec, out_spec, out_spec),
        out_shape=(out, out, out),
        compiler_params=_cparams(("parallel",)),
    )(xf, wqkv3, bqkv3)


# ---------------- kernel 2: attention + output projection + residual + LayerNorm -------
def _attn_out_ln_kernel(q_ref, k_ref, v_ref, mb_ref, wo_ref, bo_ref,
                        xres_ref, g_ref, beta_ref, o_ref, *, scale, eps):
    q = q_ref[...]                                   # (H, tq, d_k)
    k = k_ref[...]                                   # (H, S,  d_k)
    s = jnp.einsum('hqd,hkd->hqk', q, k,
                   preferred_element_type=jnp.float32) * scale     # (H, tq, S) f32
    s = s + mb_ref[...]                              # (1, S) additive key mask
    s = s - jnp.max(s, axis=-1, keepdims=True)
    p = jnp.exp(s)
    denom = jnp.sum(p, axis=-1, keepdims=True)
    r = pl.reciprocal(denom, approx=True)            # EUP slot
    r = r * (2.0 - denom * r)                        # one Newton step -> ~f32 exact
    p = p * r
    ctx = jnp.einsum('hqk,hkd->hqd', p.astype(v_ref.dtype), v_ref[...],
                     preferred_element_type=jnp.float32)            # (H, tq, d_k) f32
    # Fused output projection: accumulate per-head (tq,d_k)@(d_k,D) into (tq,D);
    # the (H, tq, D) intermediate is never materialized.
    y = xres_ref[...] + bo_ref[...]                  # residual + bias, (tq, D) f32
    wo = wo_ref[...]                                 # (H, d_k, D)
    for h in range(wo.shape[0]):
        y = y + jnp.dot(ctx[h].astype(wo.dtype), wo[h],
                        preferred_element_type=jnp.float32)
    # LayerNorm (biased variance, eps=1e-5)
    mean = jnp.mean(y, axis=-1, keepdims=True)
    yc = y - mean
    var = jnp.mean(yc * yc, axis=-1, keepdims=True)
    o_ref[...] = yc * lax.rsqrt(var + eps) * g_ref[...] + beta_ref[...]


def attention_block(q, k, v, mask_bias, wo_r, bo, x_res, ln_g, ln_b):
    """q,k,v: (B,H,S,d_k); mask_bias: (B,1,S); wo_r: (H,d_k,D) -> LN(attn_proj + x_res)."""
    B, H, S, d_k = q.shape
    D = x_res.shape[-1]
    tq = S if S <= 128 else 128                       # query tile bounds (H,tq,S) scores
    kv_spec = pl.BlockSpec((None, H, S, d_k), lambda b, qi: (b, 0, 0, 0))
    return pl.pallas_call(
        partial(_attn_out_ln_kernel, scale=1.0 / math.sqrt(d_k), eps=LN_EPS),
        grid=(B, pl.cdiv(S, tq)),
        in_specs=[pl.BlockSpec((None, H, tq, d_k), lambda b, qi: (b, 0, qi, 0)),
                  kv_spec, kv_spec,
                  pl.BlockSpec((None, 1, S), lambda b, qi: (b, 0, 0)),
                  pl.BlockSpec((H, d_k, D), lambda b, qi: (0, 0, 0)),
                  pl.BlockSpec((1, D), lambda b, qi: (0, 0)),
                  pl.BlockSpec((None, tq, D), lambda b, qi: (b, qi, 0)),
                  pl.BlockSpec((1, D), lambda b, qi: (0, 0)),
                  pl.BlockSpec((1, D), lambda b, qi: (0, 0))],
        out_specs=pl.BlockSpec((None, tq, D), lambda b, qi: (b, qi, 0)),
        out_shape=jax.ShapeDtypeStruct((B, S, D), jnp.float32),
        compiler_params=_cparams(("parallel", "parallel")),
    )(q, k, v, mask_bias, wo_r, bo, x_res, ln_g, ln_b)


# ---------------- kernel 3: FFN1 + ReLU + FFN2 + residual + LayerNorm (DFF-tiled) ------
def _ffn_ln_kernel(x_ref, w1_ref, b1_ref, w2_ref, b2_ref, g_ref, beta_ref,
                   o_ref, acc_ref, *, eps):
    kk = pl.program_id(1)

    @pl.when(kk == 0)
    def _():
        acc_ref[...] = jnp.zeros_like(acc_ref)

    x = x_ref[...]
    h = jnp.dot(x.astype(w1_ref.dtype), w1_ref[...],
                preferred_element_type=jnp.float32) + b1_ref[...]
    h = jnp.maximum(h, 0.0)
    acc_ref[...] += jnp.dot(h.astype(w2_ref.dtype), w2_ref[...],
                            preferred_element_type=jnp.float32)

    @pl.when(kk == pl.num_programs(1) - 1)
    def _():
        y = acc_ref[...] + b2_ref[...] + x            # + residual
        mean = jnp.mean(y, axis=-1, keepdims=True)
        yc = y - mean
        var = jnp.mean(yc * yc, axis=-1, keepdims=True)
        o_ref[...] = yc * lax.rsqrt(var + eps) * g_ref[...] + beta_ref[...]


def ffn_block(x1, w1, b1, w2, b2, ln_g, ln_b):
    M, D = x1.shape
    DFF = w1.shape[1]
    tm = _row_tile(M)
    tf = _dff_tile(DFF)
    return pl.pallas_call(
        partial(_ffn_ln_kernel, eps=LN_EPS),
        grid=(pl.cdiv(M, tm), DFF // tf),
        in_specs=[pl.BlockSpec((tm, D), lambda i, k: (i, 0)),
                  pl.BlockSpec((D, tf), lambda i, k: (0, k)),
                  pl.BlockSpec((1, tf), lambda i, k: (0, k)),
                  pl.BlockSpec((tf, D), lambda i, k: (k, 0)),
                  pl.BlockSpec((1, D), lambda i, k: (0, 0)),
                  pl.BlockSpec((1, D), lambda i, k: (0, 0)),
                  pl.BlockSpec((1, D), lambda i, k: (0, 0))],
        out_specs=pl.BlockSpec((tm, D), lambda i, k: (i, 0)),
        out_shape=jax.ShapeDtypeStruct((M, D), jnp.float32),
        scratch_shapes=[pltpu.VMEM((tm, D), jnp.float32)],
        compiler_params=_cparams(("parallel", "arbitrary")),
    )(x1, w1, b1, w2, b2, ln_g, ln_b)


# ---------------- kernel 4: classifier head (vocab-tiled linear) ------------------------
def _linear_kernel(x_ref, w_ref, b_ref, o_ref):
    o_ref[...] = (jnp.dot(x_ref[...].astype(w_ref.dtype), w_ref[...],
                          preferred_element_type=jnp.float32) + b_ref[...])


def linear(x, w, b):
    M, K = x.shape
    N = w.shape[1]
    tm = _row_tile(M)
    tn = N if N <= 2048 else 2048        # streams a 30k-vocab weight through VMEM
    return pl.pallas_call(
        _linear_kernel,
        grid=(pl.cdiv(M, tm), pl.cdiv(N, tn)),
        in_specs=[pl.BlockSpec((tm, K), lambda i, j: (i, 0)),
                  pl.BlockSpec((K, tn), lambda i, j: (0, j)),
                  pl.BlockSpec((1, tn), lambda i, j: (0, j))],
        out_specs=pl.BlockSpec((tm, tn), lambda i, j: (i, j)),
        out_shape=jax.ShapeDtypeStruct((M, N), jnp.float32),
        compiler_params=_cparams(("parallel", "parallel")),
    )(x, w, b)


# ---------------- model forward (glue in plain JAX, hot path in Pallas) ----------------
def transformer_layer(x, mask_bias, p, num_heads):
    B, S, D = x.shape
    d_k = D // num_heads
    xf = x.reshape(B * S, D)
    q, k, v = qkv_projection(xf, p["wqkv"], p["bqkv"], p["wqkv"].dtype)
    # matches PyTorch __split_heads: view(B, num_heads, S, d_k) (no transpose);
    # contiguous reshape only.
    q = q.reshape(B, num_heads, S, d_k)
    k = k.reshape(B, num_heads, S, d_k)
    v = v.reshape(B, num_heads, S, d_k)
    # TODO(synk): nn.Dropout(p=0.1) is identity here (inference mode).
    x1 = attention_block(q, k, v, mask_bias, p["wo_r"], p["dense_b"], x,
                         p["ln_g"], p["ln_b"])                        # LN(mha(x) + x)
    x2 = ffn_block(x1.reshape(B * S, D), p["ffn1_w"], p["ffn1_b"],
                   p["ffn2_w"], p["ffn2_b"], p["ln_g"], p["ln_b"])    # LN(ffn(x1)+x1)
    return x2.reshape(B, S, D)


def text_classifier_forward(tokens, params, *, d_model, num_heads):
    B, S = tokens.shape
    mask_bias = (tokens == PAD_ID).astype(jnp.float32)[:, None, :] * -1e9  # (B,1,S)
    # TODO(synk): embedding gather stays in XLA (no clean dense-Pallas equivalent).
    # TODO(synk): S is NOT padded to a lane multiple: the reference's head-split
    # view(B,H,S,d_k) makes the function depend on S, so padding would change semantics.
    x = params["emb"][tokens] * math.sqrt(d_model) + params["pos"][:, :S]
    for lp in params["layers"]:
        x = transformer_layer(x, mask_bias, lp, num_heads)
    cls = x[:, 0]                                                  # (B, D)
    return linear(cls, params["cls_w"], params["cls_b"])           # (B, vocab)


# ---------------- pure-JAX reference (for correctness check) ---------------------------
def reference_forward(tokens, params, *, d_model, num_heads):
    B, S = tokens.shape
    d_k = d_model // num_heads

    def lin(z, w, b):
        return jnp.matmul(z, w, precision=jax.lax.Precision.HIGHEST) + b[0]

    mask4 = (tokens == PAD_ID).astype(jnp.float32)[:, None, None, :]
    x = params["emb"][tokens] * math.sqrt(d_model) + params["pos"][:, :S]
    for p in params["layers"]:
        q = lin(x, p["wq_w"], p["wq_b"]).reshape(B, num_heads, S, d_k)
        k = lin(x, p["wk_w"], p["wk_b"]).reshape(B, num_heads, S, d_k)
        v = lin(x, p["wv_w"], p["wv_b"]).reshape(B, num_heads, S, d_k)
        s = jnp.matmul(q, jnp.swapaxes(k, -1, -2),
                       precision=jax.lax.Precision.HIGHEST) / math.sqrt(d_k)
        s = s + mask4 * -1e9
        a = jax.nn.softmax(s, axis=-1)
        ctx = jnp.matmul(a, v, precision=jax.lax.Precision.HIGHEST)
        ctx = ctx.transpose(0, 2, 1, 3).reshape(B, S, d_model)
        x1 = lin(ctx, p["dense_w"], p["dense_b"])

        def ln(z):
            m = z.mean(-1, keepdims=True)
            c = z - m
            v_ = (c * c).mean(-1, keepdims=True)
            return c * jax.lax.rsqrt(v_ + LN_EPS) * p["ln_g"][0] + p["ln_b"][0]

        x1 = ln(x1 + x)
        h = jnp.maximum(lin(x1, p["ffn1_w"], p["ffn1_b"]), 0.0)
        x = ln(lin(h, p["ffn2_w"], p["ffn2_b"]) + x1)
    return lin(x[:, 0], params["cls_w"], params["cls_b"])


# ---------------- parameter init + kernel-layout / dtype packing -----------------------
def init_linear(key, fan_in, fan_out):
    kw, kb = jax.random.split(key)
    bound = 1.0 / math.sqrt(fan_in)
    w = jax.random.uniform(kw, (fan_in, fan_out), jnp.float32, -bound, bound)
    b = jax.random.uniform(kb, (1, fan_out), jnp.float32, -bound, bound)
    return w, b


def init_params(key, vocab, d_model, n_layers, dff, num_heads):
    keys = jax.random.split(key, 2 + n_layers)
    emb = jax.random.normal(keys[0], (vocab, d_model), jnp.float32)
    cls_w, cls_b = init_linear(keys[1], d_model, vocab)
    layers = []
    for i in range(n_layers):
        lk = jax.random.split(keys[2 + i], 6)
        wq_w, wq_b = init_linear(lk[0], d_model, d_model)
        wk_w, wk_b = init_linear(lk[1], d_model, d_model)
        wv_w, wv_b = init_linear(lk[2], d_model, d_model)
        de_w, de_b = init_linear(lk[3], d_model, d_model)
        f1_w, f1_b = init_linear(lk[4], d_model, dff)
        f2_w, f2_b = init_linear(lk[5], dff, d_model)
        layers.append(dict(
            wq_w=wq_w, wq_b=wq_b, wk_w=wk_w, wk_b=wk_b, wv_w=wv_w, wv_b=wv_b,
            dense_w=de_w, dense_b=de_b,
            ffn1_w=f1_w, ffn1_b=f1_b, ffn2_w=f2_w, ffn2_b=f2_b,
            # one LayerNorm per layer, shared by both sublayers (matches the spec)
            ln_g=jnp.ones((1, d_model), jnp.float32),
            ln_b=jnp.zeros((1, d_model), jnp.float32),
        ))
    return dict(emb=emb, pos=positional_encoding(MAX_LEN, d_model),
                cls_w=cls_w, cls_b=cls_b, layers=layers)


def to_pallas_params(params, num_heads, compute_dtype):
    """Re-lay-out / cast weights for the Pallas path (biases & LN stay f32)."""
    out = dict(emb=params["emb"], pos=params["pos"],
               cls_w=params["cls_w"].astype(compute_dtype),
               cls_b=params["cls_b"], layers=[])
    for p in params["layers"]:
        d_model = p["wq_w"].shape[0]
        d_k = d_model // num_heads
        out["layers"].append(dict(
            wqkv=jnp.stack([p["wq_w"], p["wk_w"], p["wv_w"]]).astype(compute_dtype),
            bqkv=jnp.stack([p["wq_b"], p["wk_b"], p["wv_b"]]),           # (3,1,D) f32
            wo_r=p["dense_w"].reshape(num_heads, d_k, d_model).astype(compute_dtype),
            dense_b=p["dense_b"],
            ffn1_w=p["ffn1_w"].astype(compute_dtype), ffn1_b=p["ffn1_b"],
            ffn2_w=p["ffn2_w"].astype(compute_dtype), ffn2_b=p["ffn2_b"],
            ln_g=p["ln_g"], ln_b=p["ln_b"],
        ))
    return out


# ---------------- main ------------------------------------------------------------------
if __name__ == "__main__":
    VOCAB, D_MODEL, N_LAYERS, DFF, NUM_HEADS = 64, 32, 2, 64, 4
    B, S = 2, 8

    root = jax.random.PRNGKey(0)
    pkey, tkey = jax.random.split(root)
    params = init_params(pkey, VOCAB, D_MODEL, N_LAYERS, DFF, NUM_HEADS)

    tokens = jax.random.randint(tkey, (B, S), 1, VOCAB, dtype=jnp.int32)
    tokens = tokens.at[:, -2:].set(PAD_ID)   # exercise the padding mask

    ref = jax.block_until_ready(
        reference_forward(tokens, params, d_model=D_MODEL, num_heads=NUM_HEADS))

    fwd = jax.jit(partial(text_classifier_forward,
                          d_model=D_MODEL, num_heads=NUM_HEADS))

    # strict check: f32 kernel path vs f32 HIGHEST-precision reference
    p_f32 = to_pallas_params(params, NUM_HEADS, jnp.float32)
    logits_f32 = jax.block_until_ready(fwd(tokens, p_f32))
    assert logits_f32.shape == (B, VOCAB) and logits_f32.dtype == jnp.float32
    err32 = float(jnp.max(jnp.abs(logits_f32 - ref)))
    if not jnp.allclose(logits_f32, ref, atol=2e-3, rtol=2e-3):
        raise AssertionError(f"f32 mismatch vs reference, max abs err {err32}")

    # performance configuration: bf16 MXU operands, f32 accumulation (loose sanity bound)
    p_bf16 = to_pallas_params(params, NUM_HEADS, jnp.bfloat16)
    logits_bf16 = jax.block_until_ready(fwd(tokens, p_bf16))
    err16 = float(jnp.max(jnp.abs(logits_bf16 - ref)))
    if not jnp.allclose(logits_bf16, ref, atol=2.5e-1, rtol=2.5e-1):
        raise AssertionError(f"bf16 mismatch vs reference, max abs err {err16}")

    print("KERNEL_OK")
</pallas_src>

<mosaic_0001>
module attributes {stable_mosaic.version = 11 : i64} {
  func.func @_qkv_kernel(%arg0: i32, %arg1: memref<16x32xf32, #tpu.memory_space<vmem>>, %arg2: memref<3x32x32xf32, #tpu.memory_space<vmem>>, %arg3: memref<3x1x32xf32, #tpu.memory_space<vmem>>, %arg4: memref<16x32xf32, #tpu.memory_space<vmem>>, %arg5: memref<16x32xf32, #tpu.memory_space<vmem>>, %arg6: memref<16x32xf32, #tpu.memory_space<vmem>>) attributes {dimension_semantics = [#tpu.dimension_semantics<parallel>], iteration_bounds = array<i64: 1>, scalar_prefetch = 0 : i64, scratch_operands = 0 : i64, tpu.core_type = #tpu.core_type<tc>, window_params = [{transform_indices = @transform_0, window_bounds = array<i64: 16, 32>}, {pipeline_mode = #tpu.pipeline_mode<synchronous>, transform_indices = @transform_1, window_bounds = array<i64: 3, 32, 32>}, {pipeline_mode = #tpu.pipeline_mode<synchronous>, transform_indices = @transform_2, window_bounds = array<i64: 3, 1, 32>}, {transform_indices = @transform_3, window_bounds = array<i64: 16, 32>}, {transform_indices = @transform_4, window_bounds = array<i64: 16, 32>}, {transform_indices = @transform_5, window_bounds = array<i64: 16, 32>}]} {
    %c0 = arith.constant 0 : index
    %c0_0 = arith.constant 0 : index
    %0 = vector.load %arg1[%c0, %c0_0] : memref<16x32xf32, #tpu.memory_space<vmem>>, vector<16x32xf32>
    %c0_1 = arith.constant 0 : index
    %c0_2 = arith.constant 0 : index
    %c0_3 = arith.constant 0 : index
    %1 = vector.load %arg2[%c0_1, %c0_2, %c0_3] : memref<3x32x32xf32, #tpu.memory_space<vmem>>, vector<1x32x32xf32>
    %2 = vector.shape_cast %1 : vector<1x32x32xf32> to vector<32x32xf32>
    %cst = arith.constant dense<0.000000e+00> : vector<16x32xf32>
    %3 = tpu.matmul %0, %2, %cst {dimension_numbers = #tpu.dot_dimension_numbers<[1], [0], [0], [1], [0, 0, 1, 1], [], []>} : vector<16x32xf32>, vector<32x32xf32>, vector<16x32xf32> -> vector<16x32xf32>
    %c0_4 = arith.constant 0 : index
    %c0_5 = arith.constant 0 : index
    %c0_6 = arith.constant 0 : index
    %4 = vector.load %arg3[%c0_4, %c0_5, %c0_6] : memref<3x1x32xf32, #tpu.memory_space<vmem>>, vector<1x1x32xf32>
    %5 = vector.shape_cast %4 : vector<1x1x32xf32> to vector<1x32xf32>
    %6 = vector.broadcast %5 : vector<1x32xf32> to vector<16x32xf32>
    %7 = arith.addf %3, %6 : vector<16x32xf32>
    %c0_7 = arith.constant 0 : index
    %c0_8 = arith.constant 0 : index
    %8 = vector.load %arg4[%c0_7, %c0_8] : memref<16x32xf32, #tpu.memory_space<vmem>>, vector<16x32xf32>
    tpu.vector_store %arg4[%c0_7, %c0_8], %7 {strides = array<i32>} : memref<16x32xf32, #tpu.memory_space<vmem>>, vector<16x32xf32>,
    %c1 = arith.constant 1 : index
    %c0_9 = arith.constant 0 : index
    %c0_10 = arith.constant 0 : index
    %9 = vector.load %arg2[%c1, %c0_9, %c0_10] : memref<3x32x32xf32, #tpu.memory_space<vmem>>, vector<1x32x32xf32>
    %10 = vector.shape_cast %9 : vector<1x32x32xf32> to vector<32x32xf32>
    %cst_11 = arith.constant dense<0.000000e+00> : vector<16x32xf32>
    %11 = tpu.matmul %0, %10, %cst_11 {dimension_numbers = #tpu.dot_dimension_numbers<[1], [0], [0], [1], [0, 0, 1, 1], [], []>} : vector<16x32xf32>, vector<32x32xf32>, vector<16x32xf32> -> vector<16x32xf32>
    %c1_12 = arith.constant 1 : index
    %c0_13 = arith.constant 0 : index
    %c0_14 = arith.constant 0 : index
    %12 = vector.load %arg3[%c1_12, %c0_13, %c0_14] : memref<3x1x32xf32, #tpu.memory_space<vmem>>, vector<1x1x32xf32>
    %13 = vector.shape_cast %12 : vector<1x1x32xf32> to vector<1x32xf32>
    %14 = vector.broadcast %13 : vector<1x32xf32> to vector<16x32xf32>
    %15 = arith.addf %11, %14 : vector<16x32xf32>
    %c0_15 = arith.constant 0 : index
    %c0_16 = arith.constant 0 : index
    %16 = vector.load %arg5[%c0_15, %c0_16] : memref<16x32xf32, #tpu.memory_space<vmem>>, vector<16x32xf32>
    tpu.vector_store %arg5[%c0_15, %c0_16], %15 {strides = array<i32>} : memref<16x32xf32, #tpu.memory_space<vmem>>, vector<16x32xf32>,
    %c2 = arith.constant 2 : index
    %c0_17 = arith.constant 0 : index
    %c0_18 = arith.constant 0 : index
    %17 = vector.load %arg2[%c2, %c0_17, %c0_18] : memref<3x32x32xf32, #tpu.memory_space<vmem>>, vector<1x32x32xf32>
    %18 = vector.shape_cast %17 : vector<1x32x32xf32> to vector<32x32xf32>
    %cst_19 = arith.constant dense<0.000000e+00> : vector<16x32xf32>
    %19 = tpu.matmul %0, %18, %cst_19 {dimension_numbers = #tpu.dot_dimension_numbers<[1], [0], [0], [1], [0, 0, 1, 1], [], []>} : vector<16x32xf32>, vector<32x32xf32>, vector<16x32xf32> -> vector<16x32xf32>
    %c2_20 = arith.constant 2 : index
    %c0_21 = arith.constant 0 : index
    %c0_22 = arith.constant 0 : index
    %20 = vector.load %arg3[%c2_20, %c0_21, %c0_22] : memref<3x1x32xf32, #tpu.memory_space<vmem>>, vector<1x1x32xf32>
    %21 = vector.shape_cast %20 : vector<1x1x32xf32> to vector<1x32xf32>
    %22 = vector.broadcast %21 : vector<1x32xf32> to vector<16x32xf32>
    %23 = arith.addf %19, %22 : vector<16x32xf32>
    %c0_23 = arith.constant 0 : index
    %c0_24 = arith.constant 0 : index
    %24 = vector.load %arg6[%c0_23, %c0_24] : memref<16x32xf32, #tpu.memory_space<vmem>>, vector<16x32xf32>
    tpu.vector_store %arg6[%c0_23, %c0_24], %23 {strides = array<i32>} : memref<16x32xf32, #tpu.memory_space<vmem>>, vector<16x32xf32>,
    return
  }
  func.func @transform_0(%arg0: i32) -> (i32, i32) {
    %c0_i32 = arith.constant 0 : i32
    %c0_i32_0 = arith.constant 0 : i32
    return %arg0, %c0_i32 : i32, i32
  }
  func.func @transform_1(%arg0: i32) -> (i32, i32, i32) {
    %c0_i32 = arith.constant 0 : i32
    %c0_i32_0 = arith.constant 0 : i32
    %c0_i32_1 = arith.constant 0 : i32
    %c0_i32_2 = arith.constant 0 : i32
    return %c0_i32, %c0_i32_0, %c0_i32_1 : i32, i32, i32
  }
  func.func @transform_2(%arg0: i32) -> (i32, i32, i32) {
    %c0_i32 = arith.constant 0 : i32
    %c0_i32_0 = arith.constant 0 : i32
    %c0_i32_1 = arith.constant 0 : i32
    %c0_i32_2 = arith.constant 0 : i32
    return %c0_i32, %c0_i32_0, %c0_i32_1 : i32, i32, i32
  }
  func.func @transform_3(%arg0: i32) -> (i32, i32) {
    %c0_i32 = arith.constant 0 : i32
    %c0_i32_0 = arith.constant 0 : i32
    return %arg0, %c0_i32 : i32, i32
  }
  func.func @transform_4(%arg0: i32) -> (i32, i32) {
    %c0_i32 = arith.constant 0 : i32
    %c0_i32_0 = arith.constant 0 : i32
    return %arg0, %c0_i32 : i32, i32
  }
  func.func @transform_5(%arg0: i32) -> (i32, i32) {
    %c0_i32 = arith.constant 0 : i32
    %c0_i32_0 = arith.constant 0 : i32
    return %arg0, %c0_i32 : i32, i32
  }
}

module attributes {stable_mosaic.version = 11 : i64} {
  func.func @_ffn_ln_kernel(%arg0: i32, %arg1: i32, %arg2: memref<16x32xf32, #tpu.memory_space<vmem>>, %arg3: memref<32x64xf32, #tpu.memory_space<vmem>>, %arg4: memref<1x64xf32, #tpu.memory_space<vmem>>, %arg5: memref<64x32xf32, #tpu.memory_space<vmem>>, %arg6: memref<1x32xf32, #tpu.memory_space<vmem>>, %arg7: memref<1x32xf32, #tpu.memory_space<vmem>>, %arg8: memref<1x32xf32, #tpu.memory_space<vmem>>, %arg9: memref<16x32xf32, #tpu.memory_space<vmem>>, %arg10: memref<16x32xf32, #tpu.memory_space<vmem>>) attributes {dimension_semantics = [#tpu.dimension_semantics<parallel>, #tpu.dimension_semantics<arbitrary>], iteration_bounds = array<i64: 1, 1>, scalar_prefetch = 0 : i64, scratch_operands = 1 : i64, tpu.core_type = #tpu.core_type<tc>, window_params = [{transform_indices = @transform_0, window_bounds = array<i64: 16, 32>}, {transform_indices = @transform_1, window_bounds = array<i64: 32, 64>}, {transform_indices = @transform_2, window_bounds = array<i64: 1, 64>}, {transform_indices = @transform_3, window_bounds = array<i64: 64, 32>}, {pipeline_mode = #tpu.pipeline_mode<synchronous>, transform_indices = @transform_4, window_bounds = array<i64: 1, 32>}, {pipeline_mode = #tpu.pipeline_mode<synchronous>, transform_indices = @transform_5, window_bounds = array<i64: 1, 32>}, {pipeline_mode = #tpu.pipeline_mode<synchronous>, transform_indices = @transform_6, window_bounds = array<i64: 1, 32>}, {transform_indices = @transform_7, window_bounds = array<i64: 16, 32>}]} {
    %c0_i32 = arith.constant 0 : i32
    %0 = arith.cmpi eq, %arg1, %c0_i32 : i32
    %1 = arith.extui %0 : i1 to i32
    %c0_i32_0 = arith.constant 0 : i32
    %2 = arith.cmpi ne, %1, %c0_i32_0 : i32
    scf.if %2 {
      %cst_16 = arith.constant 0.000000e+00 : f32
      %19 = vector.broadcast %cst_16 : f32 to vector<16x32xf32>
      %c0_17 = arith.constant 0 : index
      %c0_18 = arith.constant 0 : index
      %20 = vector.load %arg10[%c0_17, %c0_18] : memref<16x32xf32, #tpu.memory_space<vmem>>, vector<16x32xf32>
      tpu.vector_store %arg10[%c0_17, %c0_18], %19 {strides = array<i32>} : memref<16x32xf32, #tpu.memory_space<vmem>>, vector<16x32xf32>,
    } else {
    }
    %c0 = arith.constant 0 : index
    %c0_1 = arith.constant 0 : index
    %3 = vector.load %arg2[%c0, %c0_1] : memref<16x32xf32, #tpu.memory_space<vmem>>, vector<16x32xf32>
    %c0_2 = arith.constant 0 : index
    %c0_3 = arith.constant 0 : index
    %4 = vector.load %arg3[%c0_2, %c0_3] : memref<32x64xf32, #tpu.memory_space<vmem>>, vector<32x64xf32>
    %cst = arith.constant dense<0.000000e+00> : vector<16x64xf32>
    %5 = tpu.matmul %3, %4, %cst {dimension_numbers = #tpu.dot_dimension_numbers<[1], [0], [0], [1], [0, 0, 1, 1], [], []>} : vector<16x32xf32>, vector<32x64xf32>, vector<16x64xf32> -> vector<16x64xf32>
    %c0_4 = arith.constant 0 : index
    %c0_5 = arith.constant 0 : index
    %6 = vector.load %arg4[%c0_4, %c0_5] : memref<1x64xf32, #tpu.memory_space<vmem>>, vector<1x64xf32>
    %7 = vector.broadcast %6 : vector<1x64xf32> to vector<16x64xf32>
    %8 = arith.addf %5, %7 : vector<16x64xf32>
    %cst_6 = arith.constant 0.000000e+00 : f32
    %9 = vector.broadcast %cst_6 : f32 to vector<16x64xf32>
    %10 = arith.maximumf %8, %9 : vector<16x64xf32>
    %c0_7 = arith.constant 0 : index
    %c0_8 = arith.constant 0 : index
    %11 = vector.load %arg10[%c0_7, %c0_8] : memref<16x32xf32, #tpu.memory_space<vmem>>, vector<16x32xf32>
    %c0_9 = arith.constant 0 : index
    %c0_10 = arith.constant 0 : index
    %12 = vector.load %arg5[%c0_9, %c0_10] : memref<64x32xf32, #tpu.memory_space<vmem>>, vector<64x32xf32>
    %cst_11 = arith.constant dense<0.000000e+00> : vector<16x32xf32>
    %13 = tpu.matmul %10, %12, %cst_11 {dimension_numbers = #tpu.dot_dimension_numbers<[1], [0], [0], [1], [0, 0, 1, 1], [], []>} : vector<16x64xf32>, vector<64x32xf32>, vector<16x32xf32> -> vector<16x32xf32>
    %14 = arith.addf %11, %13 : vector<16x32xf32>
    %c0_12 = arith.constant 0 : index
    %c0_13 = arith.constant 0 : index
    %15 = vector.load %arg10[%c0_12, %c0_13] : memref<16x32xf32, #tpu.memory_space<vmem>>, vector<16x32xf32>
    tpu.vector_store %arg10[%c0_12, %c0_13], %14 {strides = array<i32>} : memref<16x32xf32, #tpu.memory_space<vmem>>, vector<16x32xf32>,
    %c0_i32_14 = arith.constant 0 : i32
    %16 = arith.cmpi eq, %arg1, %c0_i32_14 : i32
    %17 = arith.extui %16 : i1 to i32
    %c0_i32_15 = arith.constant 0 : i32
    %18 = arith.cmpi ne, %17, %c0_i32_15 : i32
    scf.if %18 {
      %c0_16 = arith.constant 0 : index
      %c0_17 = arith.constant 0 : index
      %19 = vector.load %arg10[%c0_16, %c0_17] : memref<16x32xf32, #tpu.memory_space<vmem>>, vector<16x32xf32>
      %c0_18 = arith.constant 0 : index
      %c0_19 = arith.constant 0 : index
      %20 = vector.load %arg6[%c0_18, %c0_19] : memref<1x32xf32, #tpu.memory_space<vmem>>, vector<1x32xf32>
      %21 = vector.broadcast %20 : vector<1x32xf32> to vector<16x32xf32>
      %22 = arith.addf %19, %21 : vector<16x32xf32>
      %23 = arith.addf %22, %3 : vector<16x32xf32>
      %cst_20 = arith.constant dense<0.000000e+00> : vector<16xf32>
      %24 = vector.multi_reduction <add>, %23, %cst_20 [1] : vector<16x32xf32> to vector<16xf32>
      %25 = vector.shape_cast %24 : vector<16xf32> to vector<16x1xf32>
      %cst_21 = arith.constant 3.200000e+01 : f32
      %26 = vector.broadcast %cst_21 : f32 to vector<16x1xf32>
      %27 = arith.divf %25, %26 : vector<16x1xf32>
      %28 = vector.broadcast %27 : vector<16x1xf32> to vector<16x32xf32>
      %29 = arith.subf %23, %28 : vector<16x32xf32>
      %30 = arith.mulf %29, %29 : vector<16x32xf32>
      %cst_22 = arith.constant dense<0.000000e+00> : vector<16xf32>
      %31 = vector.multi_reduction <add>, %30, %cst_22 [1] : vector<16x32xf32> to vector<16xf32>
      %32 = vector.shape_cast %31 : vector<16xf32> to vector<16x1xf32>
      %cst_23 = arith.constant 3.200000e+01 : f32
      %33 = vector.broadcast %cst_23 : f32 to vector<16x1xf32>
      %34 = arith.divf %32, %33 : vector<16x1xf32>
      %cst_24 = arith.constant 9.99999974E-6 : f32
      %35 = vector.broadcast %cst_24 : f32 to vector<16x1xf32>
      %36 = arith.addf %34, %35 : vector<16x1xf32>
      %37 = math.rsqrt %36 : vector<16x1xf32>
      %38 = vector.broadcast %37 : vector<16x1xf32> to vector<16x32xf32>
      %39 = arith.mulf %29, %38 : vector<16x32xf32>
      %c0_25 = arith.constant 0 : index
      %c0_26 = arith.constant 0 : index
      %40 = vector.load %arg7[%c0_25, %c0_26] : memref<1x32xf32, #tpu.memory_space<vmem>>, vector<1x32xf32>
      %41 = vector.broadcast %40 : vector<1x32xf32> to vector<16x32xf32>
      %42 = arith.mulf %39, %41 : vector<16x32xf32>
      %c0_27 = arith.constant 0 : index
      %c0_28 = arith.constant 0 : index
      %43 = vector.load %arg8[%c0_27, %c0_28] : memref<1x32xf32, #tpu.memory_space<vmem>>, vector<1x32xf32>
      %44 = vector.broadcast %43 : vector<1x32xf32> to vector<16x32xf32>
      %45 = arith.addf %42, %44 : vector<16x32xf32>
      %c0_29 = arith.constant 0 : index
      %c0_30 = arith.constant 0 : index
      %46 = vector.load %arg9[%c0_29, %c0_30] : memref<16x32xf32, #tpu.memory_space<vmem>>, vector<16x32xf32>
      tpu.vector_store %arg9[%c0_29, %c0_30], %45 {strides = array<i32>} : memref<16x32xf32, #tpu.memory_space<vmem>>, vector<16x32xf32>,
    } else {
    }
    return
  }
  func.func @transform_0(%arg0: i32, %arg1: i32) -> (i32, i32) {
    %c0_i32 = arith.constant 0 : i32
    %c0_i32_0 = arith.constant 0 : i32
    return %arg0, %c0_i32 : i32, i32
  }
  func.func @transform_1(%arg0: i32, %arg1: i32) -> (i32, i32) {
    %c0_i32 = arith.constant 0 : i32
    %c0_i32_0 = arith.constant 0 : i32
    return %c0_i32, %arg1 : i32, i32
  }
  func.func @transform_2(%arg0: i32, %arg1: i32) -> (i32, i32) {
    %c0_i32 = arith.constant 0 : i32
    %c0_i32_0 = arith.constant 0 : i32
    return %c0_i32, %arg1 : i32, i32
  }
  func.func @transform_3(%arg0: i32, %arg1: i32) -> (i32, i32) {
    %c0_i32 = arith.constant 0 : i32
    %c0_i32_0 = arith.constant 0 : i32
    return %arg1, %c0_i32 : i32, i32
  }
  func.func @transform_4(%arg0: i32, %arg1: i32) -> (i32, i32) {
    %c0_i32 = arith.constant 0 : i32
    %c0_i32_0 = arith.constant 0 : i32
    %c0_i32_1 = arith.constant 0 : i32
    return %c0_i32, %c0_i32_0 : i32, i32
  }
  func.func @transform_5(%arg0: i32, %arg1: i32) -> (i32, i32) {
    %c0_i32 = arith.constant 0 : i32
    %c0_i32_0 = arith.constant 0 : i32
    %c0_i32_1 = arith.constant 0 : i32
    return %c0_i32, %c0_i32_0 : i32, i32
  }
  func.func @transform_6(%arg0: i32, %arg1: i32) -> (i32, i32) {
    %c0_i32 = arith.constant 0 : i32
    %c0_i32_0 = arith.constant 0 : i32
    %c0_i32_1 = arith.constant 0 : i32
    return %c0_i32, %c0_i32_0 : i32, i32
  }
  func.func @transform_7(%arg0: i32, %arg1: i32) -> (i32, i32) {
    %c0_i32 = arith.constant 0 : i32
    %c0_i32_0 = arith.constant 0 : i32
    return %arg0, %c0_i32 : i32, i32
  }
}

module attributes {stable_mosaic.version = 11 : i64} {
  func.func @_linear_kernel(%arg0: i32, %arg1: i32, %arg2: memref<2x32xf32, #tpu.memory_space<vmem>>, %arg3: memref<32x64xf32, #tpu.memory_space<vmem>>, %arg4: memref<1x64xf32, #tpu.memory_space<vmem>>, %arg5: memref<2x64xf32, #tpu.memory_space<vmem>>) attributes {dimension_semantics = [#tpu.dimension_semantics<parallel>, #tpu.dimension_semantics<parallel>], iteration_bounds = array<i64: 1, 1>, scalar_prefetch = 0 : i64, scratch_operands = 0 : i64, tpu.core_type = #tpu.core_type<tc>, window_params = [{transform_indices = @transform_0, window_bounds = array<i64: 2, 32>}, {transform_indices = @transform_1, window_bounds = array<i64: 32, 64>}, {transform_indices = @transform_2, window_bounds = array<i64: 1, 64>}, {transform_indices = @transform_3, window_bounds = array<i64: 2, 64>}]} {
    %c0 = arith.constant 0 : index
    %c0_0 = arith.constant 0 : index
    %0 = vector.load %arg2[%c0, %c0_0] : memref<2x32xf32, #tpu.memory_space<vmem>>, vector<2x32xf32>
    %c0_1 = arith.constant 0 : index
    %c0_2 = arith.constant 0 : index
    %1 = vector.load %arg3[%c0_1, %c0_2] : memref<32x64xf32, #tpu.memory_space<vmem>>, vector<32x64xf32>
    %cst = arith.constant dense<0.000000e+00> : vector<2x64xf32>
    %2 = tpu.matmul %0, %1, %cst {dimension_numbers = #tpu.dot_dimension_numbers<[1], [0], [0], [1], [0, 0, 1, 1], [], []>} : vector<2x32xf32>, vector<32x64xf32>, vector<2x64xf32> -> vector<2x64xf32>
    %c0_3 = arith.constant 0 : index
    %c0_4 = arith.constant 0 : index
    %3 = vector.load %arg4[%c0_3, %c0_4] : memref<1x64xf32, #tpu.memory_space<vmem>>, vector<1x64xf32>
    %4 = vector.broadcast %3 : vector<1x64xf32> to vector<2x64xf32>
    %5 = arith.addf %2, %4 : vector<2x64xf32>
    %c0_5 = arith.constant 0 : index
    %c0_6 = arith.constant 0 : index
    %6 = vector.load %arg5[%c0_5, %c0_6] : memref<2x64xf32, #tpu.memory_space<vmem>>, vector<2x64xf32>
    tpu.vector_store %arg5[%c0_5, %c0_6], %5 {strides = array<i32>} : memref<2x64xf32, #tpu.memory_space<vmem>>, vector<2x64xf32>,
    return
  }
  func.func @transform_0(%arg0: i32, %arg1: i32) -> (i32, i32) {
    %c0_i32 = arith.constant 0 : i32
    %c0_i32_0 = arith.constant 0 : i32
    return %arg0, %c0_i32 : i32, i32
  }
  func.func @transform_1(%arg0: i32, %arg1: i32) -> (i32, i32) {
    %c0_i32 = arith.constant 0 : i32
    %c0_i32_0 = arith.constant 0 : i32
    return %c0_i32, %arg1 : i32, i32
  }
  func.func @transform_2(%arg0: i32, %arg1: i32) -> (i32, i32) {
    %c0_i32 = arith.constant 0 : i32
    %c0_i32_0 = arith.constant 0 : i32
    return %c0_i32, %arg1 : i32, i32
  }
  func.func @transform_3(%arg0: i32, %arg1: i32) -> (i32, i32) {
    %c0_i32 = arith.constant 0 : i32
    return %arg0, %arg1 : i32, i32
  }
}

module attributes {stable_mosaic.version = 11 : i64} {
  func.func @_attn_out_ln_kernel(%arg0: i32, %arg1: i32, %arg2: memref<1x4x8x8xf32, #tpu.memory_space<vmem>>, %arg3: memref<1x4x8x8xf32, #tpu.memory_space<vmem>>, %arg4: memref<1x4x8x8xf32, #tpu.memory_space<vmem>>, %arg5: memref<1x1x8xf32, #tpu.memory_space<vmem>>, %arg6: memref<4x8x32xf32, #tpu.memory_space<vmem>>, %arg7: memref<1x32xf32, #tpu.memory_space<vmem>>, %arg8: memref<1x8x32xf32, #tpu.memory_space<vmem>>, %arg9: memref<1x32xf32, #tpu.memory_space<vmem>>, %arg10: memref<1x32xf32, #tpu.memory_space<vmem>>, %arg11: memref<1x8x32xf32, #tpu.memory_space<vmem>>) attributes {dimension_semantics = [#tpu.dimension_semantics<parallel>, #tpu.dimension_semantics<parallel>], iteration_bounds = array<i64: 2, 1>, scalar_prefetch = 0 : i64, scratch_operands = 0 : i64, tpu.core_type = #tpu.core_type<tc>, window_params = [{transform_indices = @transform_0, window_bounds = array<i64: 1, 4, 8, 8>}, {transform_indices = @transform_1, window_bounds = array<i64: 1, 4, 8, 8>}, {transform_indices = @transform_2, window_bounds = array<i64: 1, 4, 8, 8>}, {transform_indices = @transform_3, window_bounds = array<i64: 1, 1, 8>}, {pipeline_mode = #tpu.pipeline_mode<synchronous>, transform_indices = @transform_4, window_bounds = array<i64: 4, 8, 32>}, {pipeline_mode = #tpu.pipeline_mode<synchronous>, transform_indices = @transform_5, window_bounds = array<i64: 1, 32>}, {transform_indices = @transform_6, window_bounds = array<i64: 1, 8, 32>}, {pipeline_mode = #tpu.pipeline_mode<synchronous>, transform_indices = @transform_7, window_bounds = array<i64: 1, 32>}, {pipeline_mode = #tpu.pipeline_mode<synchronous>, transform_indices = @transform_8, window_bounds = array<i64: 1, 32>}, {transform_indices = @transform_9, window_bounds = array<i64: 1, 8, 32>}]} {
    %c0 = arith.constant 0 : index
    %c0_0 = arith.constant 0 : index
    %c0_1 = arith.constant 0 : index
    %c0_2 = arith.constant 0 : index
    %0 = vector.load %arg2[%c0, %c0_0, %c0_1, %c0_2] : memref<1x4x8x8xf32, #tpu.memory_space<vmem>>, vector<1x4x8x8xf32>
    %1 = vector.shape_cast %0 : vector<1x4x8x8xf32> to vector<4x8x8xf32>
    %c0_3 = arith.constant 0 : index
    %c0_4 = arith.constant 0 : index
    %c0_5 = arith.constant 0 : index
    %c0_6 = arith.constant 0 : index
    %2 = vector.load %arg3[%c0_3, %c0_4, %c0_5, %c0_6] : memref<1x4x8x8xf32, #tpu.memory_space<vmem>>, vector<1x4x8x8xf32>
    %3 = vector.shape_cast %2 : vector<1x4x8x8xf32> to vector<4x8x8xf32>
    "tpu.trace_start"() <{level = 10 : i32, message = "hqd,hkd->hqk"}> : () -> ()
    %cst = arith.constant dense<0.000000e+00> : vector<4x8x8xf32>
    %4 = tpu.matmul %1, %3, %cst {dimension_numbers = #tpu.dot_dimension_numbers<[2], [2], [1], [1], [0, 0, 0, 1, 1, 1], [0], [0]>} : vector<4x8x8xf32>, vector<4x8x8xf32>, vector<4x8x8xf32> -> vector<4x8x8xf32>
    "tpu.trace_stop"() : () -> ()
    %cst_7 = arith.constant 0.353553385 : f32
    %5 = vector.broadcast %cst_7 : f32 to vector<4x8x8xf32>
    %6 = arith.mulf %4, %5 : vector<4x8x8xf32>
    %c0_8 = arith.constant 0 : index
    %c0_9 = arith.constant 0 : index
    %c0_10 = arith.constant 0 : index
    %7 = vector.load %arg5[%c0_8, %c0_9, %c0_10] : memref<1x1x8xf32, #tpu.memory_space<vmem>>, vector<1x1x8xf32>
    %8 = vector.shape_cast %7 : vector<1x1x8xf32> to vector<1x8xf32>
    %9 = vector.shape_cast %8 : vector<1x8xf32> to vector<1x1x8xf32>
    %10 = vector.broadcast %9 : vector<1x1x8xf32> to vector<4x8x8xf32>
    %11 = arith.addf %6, %10 : vector<4x8x8xf32>
    %cst_11 = arith.constant dense<0xFF800000> : vector<4x8xf32>
    %12 = vector.multi_reduction <maximumf>, %11, %cst_11 [2] : vector<4x8x8xf32> to vector<4x8xf32>
    %13 = vector.shape_cast %12 : vector<4x8xf32> to vector<4x8x1xf32>
    %14 = vector.broadcast %13 : vector<4x8x1xf32> to vector<4x8x8xf32>
    %15 = arith.subf %11, %14 : vector<4x8x8xf32>
    %16 = math.exp %15 : vector<4x8x8xf32>
    %cst_12 = arith.constant dense<0.000000e+00> : vector<4x8xf32>
    %17 = vector.multi_reduction <add>, %16, %cst_12 [2] : vector<4x8x8xf32> to vector<4x8xf32>
    %18 = vector.shape_cast %17 : vector<4x8xf32> to vector<4x8x1xf32>
    %19 = tpu.reciprocal %18 {approx = true} : vector<4x8x1xf32> -> vector<4x8x1xf32>
    %20 = arith.mulf %18, %19 : vector<4x8x1xf32>
    %cst_13 = arith.constant 2.000000e+00 : f32
    %21 = vector.broadcast %cst_13 : f32 to vector<4x8x1xf32>
    %22 = arith.subf %21, %20 : vector<4x8x1xf32>
    %23 = arith.mulf %19, %22 : vector<4x8x1xf32>
    %24 = vector.broadcast %23 : vector<4x8x1xf32> to vector<4x8x8xf32>
    %25 = arith.mulf %16, %24 : vector<4x8x8xf32>
    %c0_14 = arith.constant 0 : index
    %c0_15 = arith.constant 0 : index
    %c0_16 = arith.constant 0 : index
    %c0_17 = arith.constant 0 : index
    %26 = vector.load %arg4[%c0_14, %c0_15, %c0_16, %c0_17] : memref<1x4x8x8xf32, #tpu.memory_space<vmem>>, vector<1x4x8x8xf32>
    %27 = vector.shape_cast %26 : vector<1x4x8x8xf32> to vector<4x8x8xf32>
    "tpu.trace_start"() <{level = 10 : i32, message = "hqk,hkd->hqd"}> : () -> ()
    %cst_18 = arith.constant dense<0.000000e+00> : vector<4x8x8xf32>
    %28 = tpu.matmul %25, %27, %cst_18 {dimension_numbers = #tpu.dot_dimension_numbers<[2], [1], [1], [2], [0, 0, 0, 1, 1, 2], [0], [0]>} : vector<4x8x8xf32>, vector<4x8x8xf32>, vector<4x8x8xf32> -> vector<4x8x8xf32>
    "tpu.trace_stop"() : () -> ()
    %c0_19 = arith.constant 0 : index
    %c0_20 = arith.constant 0 : index
    %c0_21 = arith.constant 0 : index
    %29 = vector.load %arg8[%c0_19, %c0_20, %c0_21] : memref<1x8x32xf32, #tpu.memory_space<vmem>>, vector<1x8x32xf32>
    %30 = vector.shape_cast %29 : vector<1x8x32xf32> to vector<8x32xf32>
    %c0_22 = arith.constant 0 : index
    %c0_23 = arith.constant 0 : index
    %31 = vector.load %arg7[%c0_22, %c0_23] : memref<1x32xf32, #tpu.memory_space<vmem>>, vector<1x32xf32>
    %32 = vector.broadcast %31 : vector<1x32xf32> to vector<8x32xf32>
    %33 = arith.addf %30, %32 : vector<8x32xf32>
    %c0_24 = arith.constant 0 : index
    %c0_25 = arith.constant 0 : index
    %c0_26 = arith.constant 0 : index
    %34 = vector.load %arg6[%c0_24, %c0_25, %c0_26] : memref<4x8x32xf32, #tpu.memory_space<vmem>>, vector<4x8x32xf32>
    %35 = vector.extract_strided_slice %28 {offsets = [0, 0, 0], sizes = [1, 8, 8], strides = [1, 1, 1]} : vector<4x8x8xf32> to vector<1x8x8xf32>
    %36 = vector.shape_cast %35 : vector<1x8x8xf32> to vector<8x8xf32>
    %37 = vector.extract_strided_slice %34 {offsets = [0, 0, 0], sizes = [1, 8, 32], strides = [1, 1, 1]} : vector<4x8x32xf32> to vector<1x8x32xf32>
    %38 = vector.shape_cast %37 : vector<1x8x32xf32> to vector<8x32xf32>
    %cst_27 = arith.constant dense<0.000000e+00> : vector<8x32xf32>
    %39 = tpu.matmul %36, %38, %cst_27 {dimension_numbers = #tpu.dot_dimension_numbers<[1], [0], [0], [1], [0, 0, 1, 1], [], []>} : vector<8x8xf32>, vector<8x32xf32>, vector<8x32xf32> -> vector<8x32xf32>
    %40 = arith.addf %33, %39 : vector<8x32xf32>
    %41 = vector.extract_strided_slice %28 {offsets = [1, 0, 0], sizes = [1, 8, 8], strides = [1, 1, 1]} : vector<4x8x8xf32> to vector<1x8x8xf32>
    %42 = vector.shape_cast %41 : vector<1x8x8xf32> to vector<8x8xf32>
    %43 = vector.extract_strided_slice %34 {offsets = [1, 0, 0], sizes = [1, 8, 32], strides = [1, 1, 1]} : vector<4x8x32xf32> to vector<1x8x32xf32>
    %44 = vector.shape_cast %43 : vector<1x8x32xf32> to vector<8x32xf32>
    %cst_28 = arith.constant dense<0.000000e+00> : vector<8x32xf32>
    %45 = tpu.matmul %42, %44, %cst_28 {dimension_numbers = #tpu.dot_dimension_numbers<[1], [0], [0], [1], [0, 0, 1, 1], [], []>} : vector<8x8xf32>, vector<8x32xf32>, vector<8x32xf32> -> vector<8x32xf32>
    %46 = arith.addf %40, %45 : vector<8x32xf32>
    %47 = vector.extract_strided_slice %28 {offsets = [2, 0, 0], sizes = [1, 8, 8], strides = [1, 1, 1]} : vector<4x8x8xf32> to vector<1x8x8xf32>
    %48 = vector.shape_cast %47 : vector<1x8x8xf32> to vector<8x8xf32>
    %49 = vector.extract_strided_slice %34 {offsets = [2, 0, 0], sizes = [1, 8, 32], strides = [1, 1, 1]} : vector<4x8x32xf32> to vector<1x8x32xf32>
    %50 = vector.shape_cast %49 : vector<1x8x32xf32> to vector<8x32xf32>
    %cst_29 = arith.constant dense<0.000000e+00> : vector<8x32xf32>
    %51 = tpu.matmul %48, %50, %cst_29 {dimension_numbers = #tpu.dot_dimension_numbers<[1], [0], [0], [1], [0, 0, 1, 1], [], []>} : vector<8x8xf32>, vector<8x32xf32>, vector<8x32xf32> -> vector<8x32xf32>
    %52 = arith.addf %46, %51 : vector<8x32xf32>
    %53 = vector.extract_strided_slice %28 {offsets = [3, 0, 0], sizes = [1, 8, 8], strides = [1, 1, 1]} : vector<4x8x8xf32> to vector<1x8x8xf32>
    %54 = vector.shape_cast %53 : vector<1x8x8xf32> to vector<8x8xf32>
    %55 = vector.extract_strided_slice %34 {offsets = [3, 0, 0], sizes = [1, 8, 32], strides = [1, 1, 1]} : vector<4x8x32xf32> to vector<1x8x32xf32>
    %56 = vector.shape_cast %55 : vector<1x8x32xf32> to vector<8x32xf32>
    %cst_30 = arith.constant dense<0.000000e+00> : vector<8x32xf32>
    %57 = tpu.matmul %54, %56, %cst_30 {dimension_numbers = #tpu.dot_dimension_numbers<[1], [0], [0], [1], [0, 0, 1, 1], [], []>} : vector<8x8xf32>, vector<8x32xf32>, vector<8x32xf32> -> vector<8x32xf32>
    %58 = arith.addf %52, %57 : vector<8x32xf32>
    %cst_31 = arith.constant dense<0.000000e+00> : vector<8xf32>
    %59 = vector.multi_reduction <add>, %58, %cst_31 [1] : vector<8x32xf32> to vector<8xf32>
    %60 = vector.shape_cast %59 : vector<8xf32> to vector<8x1xf32>
    %cst_32 = arith.constant 3.200000e+01 : f32
    %61 = vector.broadcast %cst_32 : f32 to vector<8x1xf32>
    %62 = arith.divf %60, %61 : vector<8x1xf32>
    %63 = vector.broadcast %62 : vector<8x1xf32> to vector<8x32xf32>
    %64 = arith.subf %58, %63 : vector<8x32xf32>
    %65 = arith.mulf %64, %64 : vector<8x32xf32>
    %cst_33 = arith.constant dense<0.000000e+00> : vector<8xf32>
    %66 = vector.multi_reduction <add>, %65, %cst_33 [1] : vector<8x32xf32> to vector<8xf32>
    %67 = vector.shape_cast %66 : vector<8xf32> to vector<8x1xf32>
    %cst_34 = arith.constant 3.200000e+01 : f32
    %68 = vector.broadcast %cst_34 : f32 to vector<8x1xf32>
    %69 = arith.divf %67, %68 : vector<8x1xf32>
    %cst_35 = arith.constant 9.99999974E-6 : f32
    %70 = vector.broadcast %cst_35 : f32 to vector<8x1xf32>
    %71 = arith.addf %69, %70 : vector<8x1xf32>
    %72 = math.rsqrt %71 : vector<8x1xf32>
    %73 = vector.broadcast %72 : vector<8x1xf32> to vector<8x32xf32>
    %74 = arith.mulf %64, %73 : vector<8x32xf32>
    %c0_36 = arith.constant 0 : index
    %c0_37 = arith.constant 0 : index
    %75 = vector.load %arg9[%c0_36, %c0_37] : memref<1x32xf32, #tpu.memory_space<vmem>>, vector<1x32xf32>
    %76 = vector.broadcast %75 : vector<1x32xf32> to vector<8x32xf32>
    %77 = arith.mulf %74, %76 : vector<8x32xf32>
    %c0_38 = arith.constant 0 : index
    %c0_39 = arith.constant 0 : index
    %78 = vector.load %arg10[%c0_38, %c0_39] : memref<1x32xf32, #tpu.memory_space<vmem>>, vector<1x32xf32>
    %79 = vector.broadcast %78 : vector<1x32xf32> to vector<8x32xf32>
    %80 = arith.addf %77, %79 : vector<8x32xf32>
    %c0_40 = arith.constant 0 : index
    %c0_41 = arith.constant 0 : index
    %c0_42 = arith.constant 0 : index
    %81 = vector.load %arg11[%c0_40, %c0_41, %c0_42] : memref<1x8x32xf32, #tpu.memory_space<vmem>>, vector<1x8x32xf32>
    %82 = vector.shape_cast %81 : vector<1x8x32xf32> to vector<8x32xf32>
    %83 = vector.shape_cast %80 : vector<8x32xf32> to vector<1x8x32xf32>
    tpu.vector_store %arg11[%c0_40, %c0_41, %c0_42], %83 {strides = array<i32>} : memref<1x8x32xf32, #tpu.memory_space<vmem>>, vector<1x8x32xf32>,
    return
  }
  func.func @transform_0(%arg0: i32, %arg1: i32) -> (i32, i32, i32, i32) {
    %c0_i32 = arith.constant 0 : i32
    %c0_i32_0 = arith.constant 0 : i32
    %c0_i32_1 = arith.constant 0 : i32
    return %arg0, %c0_i32, %arg1, %c0_i32_0 : i32, i32, i32, i32
  }
  func.func @transform_1(%arg0: i32, %arg1: i32) -> (i32, i32, i32, i32) {
    %c0_i32 = arith.constant 0 : i32
    %c0_i32_0 = arith.constant 0 : i32
    %c0_i32_1 = arith.constant 0 : i32
    %c0_i32_2 = arith.constant 0 : i32
    return %arg0, %c0_i32, %c0_i32_0, %c0_i32_1 : i32, i32, i32, i32
  }
  func.func @transform_2(%arg0: i32, %arg1: i32) -> (i32, i32, i32, i32) {
    %c0_i32 = arith.constant 0 : i32
    %c0_i32_0 = arith.constant 0 : i32
    %c0_i32_1 = arith.constant 0 : i32
    %c0_i32_2 = arith.constant 0 : i32
    return %arg0, %c0_i32, %c0_i32_0, %c0_i32_1 : i32, i32, i32, i32
  }
  func.func @transform_3(%arg0: i32, %arg1: i32) -> (i32, i32, i32) {
    %c0_i32 = arith.constant 0 : i32
    %c0_i32_0 = arith.constant 0 : i32
    %c0_i32_1 = arith.constant 0 : i32
    return %arg0, %c0_i32, %c0_i32_0 : i32, i32, i32
  }
  func.func @transform_4(%arg0: i32, %arg1: i32) -> (i32, i32, i32) {
    %c0_i32 = arith.constant 0 : i32
    %c0_i32_0 = arith.constant 0 : i32
    %c0_i32_1 = arith.constant 0 : i32
    %c0_i32_2 = arith.constant 0 : i32
    return %c0_i32, %c0_i32_0, %c0_i32_1 : i32, i32, i32
  }
  func.func @transform_5(%arg0: i32, %arg1: i32) -> (i32, i32) {
    %c0_i32 = arith.constant 0 : i32
    %c0_i32_0 = arith.constant 0 : i32
    %c0_i32_1 = arith.constant 0 : i32
    return %c0_i32, %c0_i32_0 : i32, i32
  }
  func.func @transform_6(%arg0: i32, %arg1: i32) -> (i32, i32, i32) {
    %c0_i32 = arith.constant 0 : i32
    %c0_i32_0 = arith.constant 0 : i32
    return %arg0, %arg1, %c0_i32 : i32, i32, i32
  }
  func.func @transform_7(%arg0: i32, %arg1: i32) -> (i32, i32) {
    %c0_i32 = arith.constant 0 : i32
    %c0_i32_0 = arith.constant 0 : i32
    %c0_i32_1 = arith.constant 0 : i32
    return %c0_i32, %c0_i32_0 : i32, i32
  }
  func.func @transform_8(%arg0: i32, %arg1: i32) -> (i32, i32) {
    %c0_i32 = arith.constant 0 : i32
    %c0_i32_0 = arith.constant 0 : i32
    %c0_i32_1 = arith.constant 0 : i32
    return %c0_i32, %c0_i32_0 : i32, i32
  }
  func.func @transform_9(%arg0: i32, %arg1: i32) -> (i32, i32, i32) {
    %c0_i32 = arith.constant 0 : i32
    %c0_i32_0 = arith.constant 0 : i32
    return %arg0, %arg1, %c0_i32 : i32, i32, i32
  }
}

</mosaic_0001>

<llo_original>
// kernel: text_classifier_forward.13
$region0: #{text_classifier_forward.13}
  #allocation0 [shape = 'u32[]', space=smem, size = 0x4, offset = 0x4, fixed_abs, tag = 'smem constant byte address 0x4 - core index']
  #allocation1 [shape = 'u32[144,128]{1,0:T(1,128)}', space=vmem, size = 0x12000, scoped, tag = 'internal scratch']
  %s0 = inlined_call_operand.hbm [shape: f32[2,32], index: 0, kind: input, shape index: {}]
  %s1 = inlined_call_operand.hbm [shape: f32[32,64], index: 1, kind: input, shape index: {}]
  %s2 = inlined_call_operand.hbm [shape: f32[1,64], index: 2, kind: input, shape index: {}]
  %s3 = inlined_call_operand.hbm [shape: f32[2,64], index: 3, kind: output, shape index: {}]
  %s4 = sld [smem:[#allocation0]]
  $region34: #{text_classifier_forward.13} parent=0
    _
  %s6 = ssub.s32 1, %s4
  %s7 = scalar_select 0, %s6, %s4
  $region1: #{text_classifier_forward.13} parent=0
    #allocation2 [shape = 'u8[1024]{0}', space=vmem, size = 0x400, scoped, tag = 'input window, operand 0, single buffered']
    #allocation3 [shape = 's32[1]{0}', space=sflag, size = 0x4, scoped, tag = 'scoped memory for text_classifier_forward.13']
    #allocation4 [shape = 's32[1]{0}', space=sflag, size = 0x4, scoped, tag = 'scoped memory for text_classifier_forward.13']
    #allocation5 [shape = 'u8[16384]{0}', space=vmem, size = 0x4000, scoped, tag = 'input window, operand 1, single buffered']
    #allocation6 [shape = 's32[1]{0}', space=sflag, size = 0x4, scoped, tag = 'scoped memory for text_classifier_forward.13']
    #allocation7 [shape = 'u8[512]{0}', space=vmem, size = 0x400, scoped, tag = 'input window, operand 2, single buffered']
    #allocation8 [shape = 'u8[1024]{0}', space=vmem, size = 0x400, scoped, tag = 'output window, operand 0, single buffered']
    %8 = vsyncpa [#allocation3], 0
    %9 = vsyncpa [#allocation6], 0
    %10 = vsyncpa [#allocation4], 0
    // Predicated region
    $region2: #{text_classifier_forward.13} parent=1 // pred_check
      _
    $region3: #{text_classifier_forward.13} parent=1 // pred_check_branch
      %12 = sbr.rel (0) target = $region5
    $region4: #{text_classifier_forward.13} parent=1 // pred_region
      %s14 = ssub.s32 32, 32
      %15 = vsyncadd [#allocation3], %s14
      %s17 = sshll.u32 [#allocation2], 4
      %s18 = int_to_ptr.vmem [resolvable:$true] %s17
      %20 = dma.hbm_to_vmem [thread:$0]  %s0, 32, %s18, [#allocation3]
    $region5: #{text_classifier_forward.13} parent=1 // pred_fallthru
      _
    // Predicated region
    $region6: #{text_classifier_forward.13} parent=1 // pred_check
      _
    $region7: #{text_classifier_forward.13} parent=1 // pred_check_branch
      %22 = sbr.rel (0) target = $region9
    $region8: #{text_classifier_forward.13} parent=1 // pred_region
      %s24 = ssub.s32 512, 512
      %25 = vsyncadd [#allocation6], %s24
      %s26 = sshll.u32 [#allocation5], 4
      %s27 = int_to_ptr.vmem [resolvable:$true] %s26
      %32 = dma.hbm_to_vmem [thread:$0]  %s1, 512, %s27, [#allocation6], 128, 128, 8
    $region9: #{text_classifier_forward.13} parent=1 // pred_fallthru
      _
    // Predicated region
    $region10: #{text_classifier_forward.13} parent=1 // pred_check
      _
    $region11: #{text_classifier_forward.13} parent=1 // pred_check_branch
      %34 = sbr.rel (0) target = $region13
    $region12: #{text_classifier_forward.13} parent=1 // pred_region
      %s36 = ssub.s32 16, 16
      %37 = vsyncadd [#allocation6], %s36
      %s39 = sshll.u32 [#allocation7], 4
      %s40 = int_to_ptr.vmem [resolvable:$true] %s39
      %42 = dma.hbm_to_vmem [thread:$0]  %s2, 16, %s40, [#allocation6]
    $region13: #{text_classifier_forward.13} parent=1 // pred_fallthru
      _
    // Predicated region
    $region14: #{text_classifier_forward.13} parent=1 // pred_check
      _
    $region15: #{text_classifier_forward.13} parent=1 // pred_check_branch
      %44 = sbr.rel (0) target = $region17
    $region16: #{text_classifier_forward.13} parent=1 // pred_region
      %45 = dma.done [#allocation3], 32
    $region17: #{text_classifier_forward.13} parent=1 // pred_fallthru
      _
    // Predicated region
    $region18: #{text_classifier_forward.13} parent=1 // pred_check
      _
    $region19: #{text_classifier_forward.13} parent=1 // pred_check_branch
      %47 = sbr.rel (0) target = $region21
    $region20: #{text_classifier_forward.13} parent=1 // pred_region
      %48 = dma.done [#allocation6], 512
    $region21: #{text_classifier_forward.13} parent=1 // pred_fallthru
      _
    // Predicated region
    $region22: #{text_classifier_forward.13} parent=1 // pred_check
      _
    $region23: #{text_classifier_forward.13} parent=1 // pred_check_branch
      %50 = sbr.rel (0) target = $region25
    $region24: #{text_classifier_forward.13} parent=1 // pred_region
      %51 = dma.done [#allocation6], 16
    $region25: #{text_classifier_forward.13} parent=1 // pred_fallthru
      _
    %v52 = vld [vmem:[#allocation2] sm:$0x3]
    %v53 = vld [vmem:[#allocation5] sm:$0xff]
    %v54 = vld [vmem:[#allocation5 + $0x8] sm:$0xff]
    %v55 = vld [vmem:[#allocation5 + $0x10] sm:$0xff]
    %v56 = vld [vmem:[#allocation5 + $0x18] sm:$0xff]
    %v57 = vld [vmem:[#allocation7] sm:$0x1]
    %v59 = vlaneseq
    %v60 = vshrl.u32 %v59, 7
    %v61 = vsub.s32 0, %v60
    %v62 = vrot.slane %v57, %v61
    %vm64 = vcmask 261120
    %v66 = vsel %vm64, %v52, 0
    %68 = vmatprep.subr.mxu0 0.0
    %69 = vmatpush1.msra.mxu0 %v53
    %70 = vmatprep.subr.mxu0 0.0
    %71 = vmatpush1.msra.mxu0 %v54
    %72 = vmatprep.subr.mxu0 0.0
    %73 = vmatpush1.msra.mxu0 %v55
    %74 = vmatprep.subr.mxu0 0.0
    %75 = vmatpush1.msra.mxu0 %v56
    %76 = vmatprep.subr.mxu0 0.0
    %77 = vmatpush1.msra.mxu0 0.0
    %78 = vmatprep.subr.mxu0 0.0
    %79 = vmatpush1.msra.mxu0 0.0
    %80 = vmatprep.subr.mxu0 0.0
    %81 = vmatpush1.msra.mxu0 0.0
    %82 = vmatprep.subr.mxu0 0.0
    %83 = vmatpush1.msra.mxu0 0.0
    %84 = vmatprep.subr.mxu0 0.0
    %85 = vmatpush1.msra.mxu0 0.0
    %86 = vmatprep.subr.mxu0 0.0
    %87 = vmatpush1.msra.mxu0 0.0
    %88 = vmatprep.subr.mxu0 0.0
    %89 = vmatpush1.msra.mxu0 0.0
    %90 = vmatprep.subr.mxu0 0.0
    %91 = vmatpush1.msra.mxu0 0.0
    %92 = vmatprep.subr.mxu0 0.0
    %93 = vmatpush1.msra.mxu0 0.0
    %94 = vmatprep.subr.mxu0 0.0
    %95 = vmatpush1.msra.mxu0 0.0
    %96 = vmatprep.subr.mxu0 0.0
    %97 = vmatpush1.msra.mxu0 0.0
    %98 = vmatprep.subr.mxu0 0.0
    %99 = vmatpush1.msra.mxu0 0.0
    %100 = vmatprep.subr.mxu0 0.0
    %101 = vmatpush1.msra.mxu0 0.0
    %102 = vmatprep.subr.mxu0 0.0
    %103 = vmatpush1.msra.mxu0 0.0
    %104 = vmatprep.subr.mxu0 0.0
    %105 = vmatpush1.msra.mxu0 0.0
    %106 = vmatprep.subr.mxu0 0.0
    %107 = vmatpush1.msra.mxu0 0.0
    %108 = vmatprep.subr.mxu0 0.0
    %109 = vmatpush1.msra.mxu0 0.0
    %110 = vmatprep.subr.mxu0 0.0
    %111 = vmatpush1.msra.mxu0 0.0
    %112 = vmatprep.subr.mxu0 0.0
    %113 = vmatpush1.msra.mxu0 0.0
    %114 = vmatprep.subr.mxu0 0.0
    %115 = vmatpush1.msra.mxu0 0.0
    %116 = vmatprep.subr.mxu0 0.0
    %117 = vmatpush1.msra.mxu0 0.0
    %118 = vmatprep.subr.mxu0 0.0
    %119 = vmatpush1.msra.mxu0 0.0
    %120 = vmatprep.subr.mxu0 0.0
    %121 = vmatpush1.msra.mxu0 0.0
    %122 = vmatprep.subr.mxu0 0.0
    %123 = vmatpush1.msra.mxu0 0.0
    %124 = vmatprep.subr.mxu0 0.0
    %125 = vmatpush1.msra.mxu0 0.0
    %126 = vmatprep.subr.mxu0 0.0
    %127 = vmatpush1.msra.mxu0 0.0
    %128 = vmatprep.subr.mxu0 0.0
    %129 = vmatpush1.msra.mxu0 0.0
    %130 = vmatprep.subr.mxu0 0.0
    %131 = vmatpush1.msra.mxu0 0.0
    %132 = vmatprep.mubr.f32.mxu0 0.0
    %133 = vmatmul.mubr.f32.gmra.mrb[0].mxu0 %v66
    %v134 = vpop.f32.mrb[0].mxu0
    %v135 = vadd.f32 %v62, %v134
    %v136 = vpop.f32.mrb[0].mxu0
    %137 = vdwg.mxu0
    %vm138 = vcmask 517120
    %139 = vst.msk [vmem:[#allocation8] sm:$0x3] %vm138, %v135
    // Predicated region
    $region26: #{text_classifier_forward.13} parent=1 // pred_check
      _
    $region27: #{text_classifier_forward.13} parent=1 // pred_check_branch
      %141 = sbr.rel (0) target = $region29
    $region28: #{text_classifier_forward.13} parent=1 // pred_region
      %s143 = ssub.s32 32, 32
      %144 = vsyncadd [#allocation4], %s143
      %s146 = sshll.u32 [#allocation8], 4
      %s147 = int_to_ptr.vmem [resolvable:$true] %s146
      %149 = dma.vmem_to_hbm [thread:$0]  %s147, 32, %s3, [#allocation4]
    $region29: #{text_classifier_forward.13} parent=1 // pred_fallthru
      _
    // Predicated region
    $region30: #{text_classifier_forward.13} parent=1 // pred_check
      _
    $region31: #{text_classifier_forward.13} parent=1 // pred_check_branch
      %151 = sbr.rel (0) target = $region33
    $region32: #{text_classifier_forward.13} parent=1 // pred_region
      %152 = dma.done [#allocation4], 32
    $region33: #{text_classifier_forward.13} parent=1 // pred_fallthru
      _
    %153 = vsyncpa [#allocation3], 1
    %154 = vsyncpa [#allocation6], 1
    %155 = vsyncpa [#allocation4], 1

// kernel: text_classifier_forward.7
$region0: #{text_classifier_forward.7}
  #allocation0 [shape = 'u32[]', space=smem, size = 0x4, offset = 0x4, fixed_abs, tag = 'smem constant byte address 0x4 - core index']
  #allocation1 [shape = 'u32[144,128]{1,0:T(1,128)}', space=vmem, size = 0x12000, scoped, tag = 'internal scratch']
  %s0 = inlined_call_operand.hbm [shape: f32[16,32], index: 0, kind: input, shape index: {}]
  %s1 = inlined_call_operand.hbm [shape: f32[3,32,32], index: 1, kind: input, shape index: {}]
  %s2 = inlined_call_operand.hbm [shape: f32[3,1,32], index: 2, kind: input, shape index: {}]
  %s3 = inlined_call_operand.hbm [shape: f32[16,32], index: 3, kind: output, shape index: {0}]
  %s4 = inlined_call_operand.hbm [shape: f32[16,32], index: 4, kind: output, shape index: {1}]
  %s5 = inlined_call_operand.hbm [shape: f32[16,32], index: 5, kind: output, shape index: {2}]
  %6 = xla_tuple %s3, %s4, %s5
  %s7 = sld [smem:[#allocation0]]
  $region50: #{text_classifier_forward.7} parent=0
    _
  %s9 = ssub.s32 1, %s7
  %s10 = scalar_select 0, %s9, %s7
  $region1: #{text_classifier_forward.7} parent=0
    #allocation2 [shape = 'u8[8192]{0}', space=vmem, size = 0x2000, scoped, tag = 'input window, operand 0, single buffered']
    #allocation3 [shape = 's32[1]{0}', space=sflag, size = 0x4, scoped, tag = 'scoped memory for text_classifier_forward.7']
    #allocation4 [shape = 's32[1]{0}', space=sflag, size = 0x4, scoped, tag = 'scoped memory for text_classifier_forward.7']
    #allocation5 [shape = 'u8[49152]{0}', space=vmem, size = 0xc000, scoped, tag = 'input window, operand 1, single buffered']
    #allocation6 [shape = 's32[1]{0}', space=sflag, size = 0x4, scoped, tag = 'scoped memory for text_classifier_forward.7']
    #allocation7 [shape = 'u8[1536]{0}', space=vmem, size = 0x800, scoped, tag = 'input window, operand 2, single buffered']
    #allocation8 [shape = 'u8[8192]{0}', space=vmem, size = 0x2000, scoped, tag = 'output window, operand 0, single buffered']
    #allocation9 [shape = 'u8[8192]{0}', space=vmem, size = 0x2000, scoped, tag = 'output window, operand 1, single buffered']
    #allocation10 [shape = 's32[1]{0}', space=sflag, size = 0x4, scoped, tag = 'scoped memory for text_classifier_forward.7']
    #allocation11 [shape = 'u8[8192]{0}', space=vmem, size = 0x2000, scoped, tag = 'output window, operand 2, single buffered']
    %11 = vsyncpa [#allocation3], 0
    %12 = vsyncpa [#allocation6], 0
    %13 = vsyncpa [#allocation4], 0
    %14 = vsyncpa [#allocation10], 0
    // Predicated region
    $region2: #{text_classifier_forward.7} parent=1 // pred_check
      _
    $region3: #{text_classifier_forward.7} parent=1 // pred_check_branch
      %16 = sbr.rel (0) target = $region5
    $region4: #{text_classifier_forward.7} parent=1 // pred_region
      %s18 = ssub.s32 256, 256
      %19 = vsyncadd [#allocation3], %s18
      %s20 = sshll.u32 [#allocation2], 4
      %s21 = int_to_ptr.vmem [resolvable:$true] %s20
      %26 = dma.hbm_to_vmem [thread:$0]  %s0, 256, %s21, [#allocation3], 128, 128, 8
    $region5: #{text_classifier_forward.7} parent=1 // pred_fallthru
      _
    // Predicated region
    $region6: #{text_classifier_forward.7} parent=1 // pred_check
      _
    $region7: #{text_classifier_forward.7} parent=1 // pred_check_branch
      %28 = sbr.rel (0) target = $region9
    $region8: #{text_classifier_forward.7} parent=1 // pred_region
      %s30 = ssub.s32 1536, 1536
      %31 = vsyncadd [#allocation6], %s30
      %s32 = sshll.u32 [#allocation5], 4
      %s33 = int_to_ptr.vmem [resolvable:$true] %s32
      %38 = dma.hbm_to_vmem [thread:$0]  %s1, 1536, %s33, [#allocation6], 128, 128, 8
    $region9: #{text_classifier_forward.7} parent=1 // pred_fallthru
      _
    // Predicated region
    $region10: #{text_classifier_forward.7} parent=1 // pred_check
      _
    $region11: #{text_classifier_forward.7} parent=1 // pred_check_branch
      %40 = sbr.rel (0) target = $region13
    $region12: #{text_classifier_forward.7} parent=1 // pred_region
      %s42 = ssub.s32 48, 48
      %43 = vsyncadd [#allocation6], %s42
      %s44 = sshll.u32 [#allocation7], 4
      %s45 = int_to_ptr.vmem [resolvable:$true] %s44
      %50 = dma.hbm_to_vmem [thread:$0]  %s2, 48, %s45, [#allocation6], 16, 16, 1
    $region13: #{text_classifier_forward.7} parent=1 // pred_fallthru
      _
    // Predicated region
    $region14: #{text_classifier_forward.7} parent=1 // pred_check
      _
    $region15: #{text_classifier_forward.7} parent=1 // pred_check_branch
      %52 = sbr.rel (0) target = $region17
    $region16: #{text_classifier_forward.7} parent=1 // pred_region
      %53 = dma.done [#allocation3], 256
    $region17: #{text_classifier_forward.7} parent=1 // pred_fallthru
      _
    // Predicated region
    $region18: #{text_classifier_forward.7} parent=1 // pred_check
      _
    $region19: #{text_classifier_forward.7} parent=1 // pred_check_branch
      %55 = sbr.rel (0) target = $region21
    $region20: #{text_classifier_forward.7} parent=1 // pred_region
      %56 = dma.done [#allocation6], 1536
    $region21: #{text_classifier_forward.7} parent=1 // pred_fallthru
      _
    // Predicated region
    $region22: #{text_classifier_forward.7} parent=1 // pred_check
      _
    $region23: #{text_classifier_forward.7} parent=1 // pred_check_branch
      %58 = sbr.rel (0) target = $region25
    $region24: #{text_classifier_forward.7} parent=1 // pred_region
      %59 = dma.done [#allocation6], 48
    $region25: #{text_classifier_forward.7} parent=1 // pred_fallthru
      _
    %v60 = vld [vmem:[#allocation2] sm:$0xff]
    %v61 = vld [vmem:[#allocation2 + $0x8] sm:$0xff]
    %v62 = vld [vmem:[#allocation5] sm:$0xff]
    %v63 = vld [vmem:[#allocation5 + $0x8] sm:$0xff]
    %v64 = vld [vmem:[#allocation5 + $0x10] sm:$0xff]
    %v65 = vld [vmem:[#allocation5 + $0x18] sm:$0xff]
    %v66 = vld [vmem:[#allocation7] sm:$0x1]
    %v68 = vlaneseq
    %v69 = vshrl.u32 %v68, 7
    %v70 = vsub.s32 0, %v69
    %v71 = vrot.slane %v66, %v70
    %vm73 = vcmask 261120
    %v75 = vsel %vm73, %v60, 0
    %v78 = vsel %vm73, %v61, 0
    %80 = vmatprep.subr.mxu0 0.0
    %81 = vmatpush1.msra.mxu0 %v62
    %82 = vmatprep.subr.mxu0 0.0
    %83 = vmatpush1.msra.mxu0 %v63
    %84 = vmatprep.subr.mxu0 0.0
    %85 = vmatpush1.msra.mxu0 %v64
    %86 = vmatprep.subr.mxu0 0.0
    %87 = vmatpush1.msra.mxu0 %v65
    %88 = vmatprep.subr.mxu0 0.0
    %89 = vmatpush1.msra.mxu0 0.0
    %90 = vmatprep.subr.mxu0 0.0
    %91 = vmatpush1.msra.mxu0 0.0
    %92 = vmatprep.subr.mxu0 0.0
    %93 = vmatpush1.msra.mxu0 0.0
    %94 = vmatprep.subr.mxu0 0.0
    %95 = vmatpush1.msra.mxu0 0.0
    %96 = vmatprep.subr.mxu0 0.0
    %97 = vmatpush1.msra.mxu0 0.0
    %98 = vmatprep.subr.mxu0 0.0
    %99 = vmatpush1.msra.mxu0 0.0
    %100 = vmatprep.subr.mxu0 0.0
    %101 = vmatpush1.msra.mxu0 0.0
    %102 = vmatprep.subr.mxu0 0.0
    %103 = vmatpush1.msra.mxu0 0.0
    %104 = vmatprep.subr.mxu0 0.0
    %105 = vmatpush1.msra.mxu0 0.0
    %106 = vmatprep.subr.mxu0 0.0
    %107 = vmatpush1.msra.mxu0 0.0
    %108 = vmatprep.subr.mxu0 0.0
    %109 = vmatpush1.msra.mxu0 0.0
    %110 = vmatprep.subr.mxu0 0.0
    %111 = vmatpush1.msra.mxu0 0.0
    %112 = vmatprep.subr.mxu0 0.0
    %113 = vmatpush1.msra.mxu0 0.0
    %114 = vmatprep.subr.mxu0 0.0
    %115 = vmatpush1.msra.mxu0 0.0
    %116 = vmatprep.subr.mxu0 0.0
    %117 = vmatpush1.msra.mxu0 0.0
    %118 = vmatprep.subr.mxu0 0.0
    %119 = vmatpush1.msra.mxu0 0.0
    %120 = vmatprep.subr.mxu0 0.0
    %121 = vmatpush1.msra.mxu0 0.0
    %122 = vmatprep.subr.mxu0 0.0
    %123 = vmatpush1.msra.mxu0 0.0
    %124 = vmatprep.subr.mxu0 0.0
    %125 = vmatpush1.msra.mxu0 0.0
    %126 = vmatprep.subr.mxu0 0.0
    %127 = vmatpush1.msra.mxu0 0.0
    %128 = vmatprep.subr.mxu0 0.0
    %129 = vmatpush1.msra.mxu0 0.0
    %130 = vmatprep.subr.mxu0 0.0
    %131 = vmatpush1.msra.mxu0 0.0
    %132 = vmatprep.subr.mxu0 0.0
    %133 = vmatpush1.msra.mxu0 0.0
    %134 = vmatprep.subr.mxu0 0.0
    %135 = vmatpush1.msra.mxu0 0.0
    %136 = vmatprep.subr.mxu0 0.0
    %137 = vmatpush1.msra.mxu0 0.0
    %138 = vmatprep.subr.mxu0 0.0
    %139 = vmatpush1.msra.mxu0 0.0
    %140 = vmatprep.subr.mxu0 0.0
    %141 = vmatpush1.msra.mxu0 0.0
    %142 = vmatprep.subr.mxu0 0.0
    %143 = vmatpush1.msra.mxu0 0.0
    %144 = vmatprep.mubr.f32.mxu0 0.0
    %145 = vmatmul.mubr.f32.gmra.mrb[0].mxu0 %v75
    %v146 = vpop.f32.mrb[0].mxu0
    %v147 = vadd.f32 %v71, %v146
    %v148 = vpop.f32.mrb[0].mxu0
    %149 = vmatprep.mubr.f32.mxu0 0.0
    %150 = vmatmul.mubr.f32.gmra.mrb[0].mxu0 %v78
    %v151 = vpop.f32.mrb[0].mxu0
    %v152 = vadd.f32 %v71, %v151
    %v153 = vpop.f32.mrb[0].mxu0
    %154 = vdwg.mxu0
    %155 = vst.msk [vmem:[#allocation8] sm:$0xff] %vm73, %v147
    %156 = vst.msk [vmem:[#allocation8 + $0x8] sm:$0xff] %vm73, %v152
    %s157 = scalar_lea.vmem [#allocation5], 32
    %v158 = vld [vmem:[%s157] sm:$0xff]
    %v159 = vld [vmem:[%s157 + $0x8] sm:$0xff]
    %v160 = vld [vmem:[%s157 + $0x10] sm:$0xff]
    %v161 = vld [vmem:[%s157 + $0x18] sm:$0xff]
    %s162 = scalar_lea.vmem [#allocation7], 1
    %v163 = vld [vmem:[%s162] sm:$0x1]
    %v165 = vlaneseq
    %v166 = vshrl.u32 %v165, 7
    %v167 = vsub.s32 0, %v166
    %v168 = vrot.slane %v163, %v167
    %170 = vmatprep.subr.mxu0 0.0
    %171 = vmatpush1.msra.mxu0 %v158
    %172 = vmatprep.subr.mxu0 0.0
    %173 = vmatpush1.msra.mxu0 %v159
    %174 = vmatprep.subr.mxu0 0.0
    %175 = vmatpush1.msra.mxu0 %v160
    %176 = vmatprep.subr.mxu0 0.0
    %177 = vmatpush1.msra.mxu0 %v161
    %178 = vmatprep.subr.mxu0 0.0
    %179 = vmatpush1.msra.mxu0 0.0
    %180 = vmatprep.subr.mxu0 0.0
    %181 = vmatpush1.msra.mxu0 0.0
    %182 = vmatprep.subr.mxu0 0.0
    %183 = vmatpush1.msra.mxu0 0.0
    %184 = vmatprep.subr.mxu0 0.0
    %185 = vmatpush1.msra.mxu0 0.0
    %186 = vmatprep.subr.mxu0 0.0
    %187 = vmatpush1.msra.mxu0 0.0
    %188 = vmatprep.subr.mxu0 0.0
    %189 = vmatpush1.msra.mxu0 0.0
    %190 = vmatprep.subr.mxu0 0.0
    %191 = vmatpush1.msra.mxu0 0.0
    %192 = vmatprep.subr.mxu0 0.0
    %193 = vmatpush1.msra.mxu0 0.0
    %194 = vmatprep.subr.mxu0 0.0
    %195 = vmatpush1.msra.mxu0 0.0
    %196 = vmatprep.subr.mxu0 0.0
    %197 = vmatpush1.msra.mxu0 0.0
    %198 = vmatprep.subr.mxu0 0.0
    %199 = vmatpush1.msra.mxu0 0.0
    %200 = vmatprep.subr.mxu0 0.0
    %201 = vmatpush1.msra.mxu0 0.0
    %202 = vmatprep.subr.mxu0 0.0
    %203 = vmatpush1.msra.mxu0 0.0
    %204 = vmatprep.subr.mxu0 0.0
    %205 = vmatpush1.msra.mxu0 0.0
    %206 = vmatprep.subr.mxu0 0.0
    %207 = vmatpush1.msra.mxu0 0.0
    %208 = vmatprep.subr.mxu0 0.0
    %209 = vmatpush1.msra.mxu0 0.0
    %210 = vmatprep.subr.mxu0 0.0
    %211 = vmatpush1.msra.mxu0 0.0
    %212 = vmatprep.subr.mxu0 0.0
    %213 = vmatpush1.msra.mxu0 0.0
    %214 = vmatprep.subr.mxu0 0.0
    %215 = vmatpush1.msra.mxu0 0.0
    %216 = vmatprep.subr.mxu0 0.0
    %217 = vmatpush1.msra.mxu0 0.0
    %218 = vmatprep.subr.mxu0 0.0
    %219 = vmatpush1.msra.mxu0 0.0
    %220 = vmatprep.subr.mxu0 0.0
    %221 = vmatpush1.msra.mxu0 0.0
    %222 = vmatprep.subr.mxu0 0.0
    %223 = vmatpush1.msra.mxu0 0.0
    %224 = vmatprep.subr.mxu0 0.0
    %225 = vmatpush1.msra.mxu0 0.0
    %226 = vmatprep.subr.mxu0 0.0
    %227 = vmatpush1.msra.mxu0 0.0
    %228 = vmatprep.subr.mxu0 0.0
    %229 = vmatpush1.msra.mxu0 0.0
    %230 = vmatprep.subr.mxu0 0.0
    %231 = vmatpush1.msra.mxu0 0.0
    %232 = vmatprep.subr.mxu0 0.0
    %233 = vmatpush1.msra.mxu0 0.0
    %234 = vmatprep.mubr.f32.mxu0 0.0
    %235 = vmatmul.mubr.f32.gmra.mrb[0].mxu0 %v75
    %v236 = vpop.f32.mrb[0].mxu0
    %v237 = vadd.f32 %v168, %v236
    %v238 = vpop.f32.mrb[0].mxu0
    %239 = vmatprep.mubr.f32.mxu0 0.0
    %240 = vmatmul.mubr.f32.gmra.mrb[0].mxu0 %v78
    %v241 = vpop.f32.mrb[0].mxu0
    %v242 = vadd.f32 %v168, %v241
    %v243 = vpop.f32.mrb[0].mxu0
    %244 = vdwg.mxu0
    %245 = vst.msk [vmem:[#allocation9] sm:$0xff] %vm73, %v237
    %246 = vst.msk [vmem:[#allocation9 + $0x8] sm:$0xff] %vm73, %v242
    %s247 = scalar_lea.vmem [#allocation5], 64
    %v248 = vld [vmem:[%s247] sm:$0xff]
    %v249 = vld [vmem:[%s247 + $0x8] sm:$0xff]
    %v250 = vld [vmem:[%s247 + $0x10] sm:$0xff]
    %v251 = vld [vmem:[%s247 + $0x18] sm:$0xff]
    %s252 = scalar_lea.vmem [#allocation7], 2
    %v253 = vld [vmem:[%s252] sm:$0x1]
    %v255 = vlaneseq
    %v256 = vshrl.u32 %v255, 7
    %v257 = vsub.s32 0, %v256
    %v258 = vrot.slane %v253, %v257
    %260 = vmatprep.subr.mxu0 0.0
    %261 = vmatpush1.msra.mxu0 %v248
    %262 = vmatprep.subr.mxu0 0.0
    %263 = vmatpush1.msra.mxu0 %v249
    %264 = vmatprep.subr.mxu0 0.0
    %265 = vmatpush1.msra.mxu0 %v250
    %266 = vmatprep.subr.mxu0 0.0
    %267 = vmatpush1.msra.mxu0 %v251
    %268 = vmatprep.subr.mxu0 0.0
    %269 = vmatpush1.msra.mxu0 0.0
    %270 = vmatprep.subr.mxu0 0.0
    %271 = vmatpush1.msra.mxu0 0.0
    %272 = vmatprep.subr.mxu0 0.0
    %273 = vmatpush1.msra.mxu0 0.0
    %274 = vmatprep.subr.mxu0 0.0
    %275 = vmatpush1.msra.mxu0 0.0
    %276 = vmatprep.subr.mxu0 0.0
    %277 = vmatpush1.msra.mxu0 0.0
    %278 = vmatprep.subr.mxu0 0.0
    %279 = vmatpush1.msra.mxu0 0.0
    %280 = vmatprep.subr.mxu0 0.0
    %281 = vmatpush1.msra.mxu0 0.0
    %282 = vmatprep.subr.mxu0 0.0
    %283 = vmatpush1.msra.mxu0 0.0
    %284 = vmatprep.subr.mxu0 0.0
    %285 = vmatpush1.msra.mxu0 0.0
    %286 = vmatprep.subr.mxu0 0.0
    %287 = vmatpush1.msra.mxu0 0.0
    %288 = vmatprep.subr.mxu0 0.0
    %289 = vmatpush1.msra.mxu0 0.0
    %290 = vmatprep.subr.mxu0 0.0
    %291 = vmatpush1.msra.mxu0 0.0
    %292 = vmatprep.subr.mxu0 0.0
    %293 = vmatpush1.msra.mxu0 0.0
    %294 = vmatprep.subr.mxu0 0.0
    %295 = vmatpush1.msra.mxu0 0.0
    %296 = vmatprep.subr.mxu0 0.0
    %297 = vmatpush1.msra.mxu0 0.0
    %298 = vmatprep.subr.mxu0 0.0
    %299 = vmatpush1.msra.mxu0 0.0
    %300 = vmatprep.subr.mxu0 0.0
    %301 = vmatpush1.msra.mxu0 0.0
    %302 = vmatprep.subr.mxu0 0.0
    %303 = vmatpush1.msra.mxu0 0.0
    %304 = vmatprep.subr.mxu0 0.0
    %305 = vmatpush1.msra.mxu0 0.0
    %306 = vmatprep.subr.mxu0 0.0
    %307 = vmatpush1.msra.mxu0 0.0
    %308 = vmatprep.subr.mxu0 0.0
    %309 = vmatpush1.msra.mxu0 0.0
    %310 = vmatprep.subr.mxu0 0.0
    %311 = vmatpush1.msra.mxu0 0.0
    %312 = vmatprep.subr.mxu0 0.0
    %313 = vmatpush1.msra.mxu0 0.0
    %314 = vmatprep.subr.mxu0 0.0
    %315 = vmatpush1.msra.mxu0 0.0
    %316 = vmatprep.subr.mxu0 0.0
    %317 = vmatpush1.msra.mxu0 0.0
    %318 = vmatprep.subr.mxu0 0.0
    %319 = vmatpush1.msra.mxu0 0.0
    %320 = vmatprep.subr.mxu0 0.0
    %321 = vmatpush1.msra.mxu0 0.0
    %322 = vmatprep.subr.mxu0 0.0
    %323 = vmatpush1.msra.mxu0 0.0
    %324 = vmatprep.mubr.f32.mxu0 0.0
    %325 = vmatmul.mubr.f32.gmra.mrb[0].mxu0 %v75
    %v326 = vpop.f32.mrb[0].mxu0
    %v327 = vadd.f32 %v258, %v326
    %v328 = vpop.f32.mrb[0].mxu0
    %329 = vmatprep.mubr.f32.mxu0 0.0
    %330 = vmatmul.mubr.f32.gmra.mrb[0].mxu0 %v78
    %v331 = vpop.f32.mrb[0].mxu0
    %v332 = vadd.f32 %v258, %v331
    %v333 = vpop.f32.mrb[0].mxu0
    %334 = vdwg.mxu0
    %335 = vst.msk [vmem:[#allocation11] sm:$0xff] %vm73, %v327
    %336 = vst.msk [vmem:[#allocation11 + $0x8] sm:$0xff] %vm73, %v332
    // Predicated region
    $region26: #{text_classifier_forward.7} parent=1 // pred_check
      _
    $region27: #{text_classifier_forward.7} parent=1 // pred_check_branch
      %338 = sbr.rel (0) target = $region29
    $region28: #{text_classifier_forward.7} parent=1 // pred_region
      %s340 = ssub.s32 256, 256
      %341 = vsyncadd [#allocation4], %s340
      %s342 = sshll.u32 [#allocation8], 4
      %s343 = int_to_ptr.vmem [resolvable:$true] %s342
      %348 = dma.vmem_to_hbm [thread:$0]  %s343, 256, %s3, [#allocation4], 128, 128, 8
    $region29: #{text_classifier_forward.7} parent=1 // pred_fallthru
      _
    // Predicated region
    $region30: #{text_classifier_forward.7} parent=1 // pred_check
      _
    $region31: #{text_classifier_forward.7} parent=1 // pred_check_branch
      %350 = sbr.rel (0) target = $region33
    $region32: #{text_classifier_forward.7} parent=1 // pred_region
      %s352 = ssub.s32 256, 256
      %353 = vsyncadd [#allocation10], %s352
      %s354 = sshll.u32 [#allocation9], 4
      %s355 = int_to_ptr.vmem [resolvable:$true] %s354
      %360 = dma.vmem_to_hbm [thread:$0]  %s355, 256, %s4, [#allocation10], 128, 128, 8
    $region33: #{text_classifier_forward.7} parent=1 // pred_fallthru
      _
    // Predicated region
    $region34: #{text_classifier_forward.7} parent=1 // pred_check
      _
    $region35: #{text_classifier_forward.7} parent=1 // pred_check_branch
      %362 = sbr.rel (0) target = $region37
    $region36: #{text_classifier_forward.7} parent=1 // pred_region
      %s364 = ssub.s32 256, 256
      %365 = vsyncadd [#allocation10], %s364
      %s366 = sshll.u32 [#allocation11], 4
      %s367 = int_to_ptr.vmem [resolvable:$true] %s366
      %372 = dma.vmem_to_hbm [thread:$0]  %s367, 256, %s5, [#allocation10], 128, 128, 8
    $region37: #{text_classifier_forward.7} parent=1 // pred_fallthru
      _
    // Predicated region
    $region38: #{text_classifier_forward.7} parent=1 // pred_check
      _
    $region39: #{text_classifier_forward.7} parent=1 // pred_check_branch
      %374 = sbr.rel (0) target = $region41
    $region40: #{text_classifier_forward.7} parent=1 // pred_region
      %375 = dma.done [#allocation4], 256
    $region41: #{text_classifier_forward.7} parent=1 // pred_fallthru
      _
    // Predicated region
    $region42: #{text_classifier_forward.7} parent=1 // pred_check
      _
    $region43: #{text_classifier_forward.7} parent=1 // pred_check_branch
      %377 = sbr.rel (0) target = $region45
    $region44: #{text_classifier_forward.7} parent=1 // pred_region
      %378 = dma.done [#allocation10], 256
    $region45: #{text_classifier_forward.7} parent=1 // pred_fallthru
      _
    // Predicated region
    $region46: #{text_classifier_forward.7} parent=1 // pred_check
      _
    $region47: #{text_classifier_forward.7} parent=1 // pred_check_branch
      %380 = sbr.rel (0) target = $region49
    $region48: #{text_classifier_forward.7} parent=1 // pred_region
      %381 = dma.done [#allocation10], 256
    $region49: #{text_classifier_forward.7} parent=1 // pred_fallthru
      _
    %382 = vsyncpa [#allocation3], 1
    %383 = vsyncpa [#allocation6], 1
    %384 = vsyncpa [#allocation4], 1
    %385 = vsyncpa [#allocation10], 1

// kernel: text_classifier_forward.9
$region0: #{text_classifier_forward.9}
  #allocation0 [shape = 'u32[]', space=smem, size = 0x4, offset = 0x4, fixed_abs, tag = 'smem constant byte address 0x4 - core index']
  #allocation1 [shape = 'u32[144,128]{1,0:T(1,128)}', space=vmem, size = 0x12000, scoped, tag = 'internal scratch']
  #allocation2 [shape = 'f32[16,32]{1,0:T(8,128)}', space=vmem, size = 0x2000, scoped, tag = 'scratch operand']
  %s0 = inlined_call_operand.hbm [shape: f32[16,32], index: 0, kind: input, shape index: {}]
  %s1 = inlined_call_operand.hbm [shape: f32[32,64], index: 1, kind: input, shape index: {}]
  %s2 = inlined_call_operand.hbm [shape: f32[1,64], index: 2, kind: input, shape index: {}]
  %s3 = inlined_call_operand.hbm [shape: f32[64,32], index: 3, kind: input, shape index: {}]
  %s4 = inlined_call_operand.hbm [shape: f32[1,32], index: 4, kind: input, shape index: {}]
  %s5 = inlined_call_operand.hbm [shape: f32[1,32], index: 5, kind: input, shape index: {}]
  %s6 = inlined_call_operand.hbm [shape: f32[1,32], index: 6, kind: input, shape index: {}]
  %s7 = inlined_call_operand.hbm [shape: f32[16,32], index: 7, kind: output, shape index: {}]
  %s8 = sld [smem:[#allocation0]]
  $region74: #{text_classifier_forward.9} parent=0
    _
  %s10 = ssub.s32 1, %s8
  %s11 = scalar_select 0, %s10, %s8
  $region1: #{text_classifier_forward.9} parent=0
    #allocation3 [shape = 'u8[8192]{0}', space=vmem, size = 0x2000, scoped, tag = 'input window, operand 0, single buffered']
    #allocation4 [shape = 's32[1]{0}', space=sflag, size = 0x4, scoped, tag = 'scoped memory for text_classifier_forward.9']
    #allocation5 [shape = 's32[1]{0}', space=sflag, size = 0x4, scoped, tag = 'scoped memory for text_classifier_forward.9']
    #allocation6 [shape = 'u8[16384]{0}', space=vmem, size = 0x4000, scoped, tag = 'input window, operand 1, single buffered']
    #allocation7 [shape = 's32[1]{0}', space=sflag, size = 0x4, scoped, tag = 'scoped memory for text_classifier_forward.9']
    #allocation8 [shape = 'u8[512]{0}', space=vmem, size = 0x400, scoped, tag = 'input window, operand 2, single buffered']
    #allocation9 [shape = 'u8[32768]{0}', space=vmem, size = 0x8000, scoped, tag = 'input window, operand 3, single buffered']
    #allocation10 [shape = 's32[1]{0}', space=sflag, size = 0x4, scoped, tag = 'scoped memory for text_classifier_forward.9']
    #allocation11 [shape = 'u8[512]{0}', space=vmem, size = 0x400, scoped, tag = 'input window, operand 4, single buffered']
    #allocation12 [shape = 'u8[512]{0}', space=vmem, size = 0x400, scoped, tag = 'input window, operand 5, single buffered']
    #allocation13 [shape = 's32[1]{0}', space=sflag, size = 0x4, scoped, tag = 'scoped memory for text_classifier_forward.9']
    #allocation14 [shape = 'u8[512]{0}', space=vmem, size = 0x400, scoped, tag = 'input window, operand 6, single buffered']
    #allocation15 [shape = 'u8[8192]{0}', space=vmem, size = 0x2000, scoped, tag = 'output window, operand 0, single buffered']
    %12 = vsyncpa [#allocation4], 0
    %13 = vsyncpa [#allocation7], 0
    %14 = vsyncpa [#allocation10], 0
    %15 = vsyncpa [#allocation13], 0
    %16 = vsyncpa [#allocation5], 0
    // Predicated region
    $region2: #{text_classifier_forward.9} parent=1 // pred_check
      _
    $region3: #{text_classifier_forward.9} parent=1 // pred_check_branch
      %18 = sbr.rel (0) target = $region5
    $region4: #{text_classifier_forward.9} parent=1 // pred_region
      %s20 = ssub.s32 256, 256
      %21 = vsyncadd [#allocation4], %s20
      %s22 = sshll.u32 [#allocation3], 4
      %s23 = int_to_ptr.vmem [resolvable:$true] %s22
      %28 = dma.hbm_to_vmem [thread:$0]  %s0, 256, %s23, [#allocation4], 128, 128, 8
    $region5: #{text_classifier_forward.9} parent=1 // pred_fallthru
      _
    // Predicated region
    $region6: #{text_classifier_forward.9} parent=1 // pred_check
      _
    $region7: #{text_classifier_forward.9} parent=1 // pred_check_branch
      %30 = sbr.rel (0) target = $region9
    $region8: #{text_classifier_forward.9} parent=1 // pred_region
      %s32 = ssub.s32 512, 512
      %33 = vsyncadd [#allocation7], %s32
      %s34 = sshll.u32 [#allocation6], 4
      %s35 = int_to_ptr.vmem [resolvable:$true] %s34
      %40 = dma.hbm_to_vmem [thread:$0]  %s1, 512, %s35, [#allocation7], 128, 128, 8
    $region9: #{text_classifier_forward.9} parent=1 // pred_fallthru
      _
    // Predicated region
    $region10: #{text_classifier_forward.9} parent=1 // pred_check
      _
    $region11: #{text_classifier_forward.9} parent=1 // pred_check_branch
      %42 = sbr.rel (0) target = $region13
    $region12: #{text_classifier_forward.9} parent=1 // pred_region
      %s44 = ssub.s32 16, 16
      %45 = vsyncadd [#allocation7], %s44
      %s47 = sshll.u32 [#allocation8], 4
      %s48 = int_to_ptr.vmem [resolvable:$true] %s47
      %50 = dma.hbm_to_vmem [thread:$0]  %s2, 16, %s48, [#allocation7]
    $region13: #{text_classifier_forward.9} parent=1 // pred_fallthru
      _
    // Predicated region
    $region14: #{text_classifier_forward.9} parent=1 // pred_check
      _
    $region15: #{text_classifier_forward.9} parent=1 // pred_check_branch
      %52 = sbr.rel (0) target = $region17
    $region16: #{text_classifier_forward.9} parent=1 // pred_region
      %s54 = ssub.s32 1024, 1024
      %55 = vsyncadd [#allocation10], %s54
      %s56 = sshll.u32 [#allocation9], 4
      %s57 = int_to_ptr.vmem [resolvable:$true] %s56
      %62 = dma.hbm_to_vmem [thread:$0]  %s3, 1024, %s57, [#allocation10], 128, 128, 8
    $region17: #{text_classifier_forward.9} parent=1 // pred_fallthru
      _
    // Predicated region
    $region18: #{text_classifier_forward.9} parent=1 // pred_check
      _
    $region19: #{text_classifier_forward.9} parent=1 // pred_check_branch
      %64 = sbr.rel (0) target = $region21
    $region20: #{text_classifier_forward.9} parent=1 // pred_region
      %s66 = ssub.s32 16, 16
      %67 = vsyncadd [#allocation10], %s66
      %s69 = sshll.u32 [#allocation11], 4
      %s70 = int_to_ptr.vmem [resolvable:$true] %s69
      %72 = dma.hbm_to_vmem [thread:$0]  %s4, 16, %s70, [#allocation10]
    $region21: #{text_classifier_forward.9} parent=1 // pred_fallthru
      _
    // Predicated region
    $region22: #{text_classifier_forward.9} parent=1 // pred_check
      _
    $region23: #{text_classifier_forward.9} parent=1 // pred_check_branch
      %74 = sbr.rel (0) target = $region25
    $region24: #{text_classifier_forward.9} parent=1 // pred_region
      %s76 = ssub.s32 16, 16
      %77 = vsyncadd [#allocation13], %s76
      %s79 = sshll.u32 [#allocation12], 4
      %s80 = int_to_ptr.vmem [resolvable:$true] %s79
      %82 = dma.hbm_to_vmem [thread:$0]  %s5, 16, %s80, [#allocation13]
    $region25: #{text_classifier_forward.9} parent=1 // pred_fallthru
      _
    // Predicated region
    $region26: #{text_classifier_forward.9} parent=1 // pred_check
      _
    $region27: #{text_classifier_forward.9} parent=1 // pred_check_branch
      %84 = sbr.rel (0) target = $region29
    $region28: #{text_classifier_forward.9} parent=1 // pred_region
      %s86 = ssub.s32 16, 16
      %87 = vsyncadd [#allocation13], %s86
      %s89 = sshll.u32 [#allocation14], 4
      %s90 = int_to_ptr.vmem [resolvable:$true] %s89
      %92 = dma.hbm_to_vmem [thread:$0]  %s6, 16, %s90, [#allocation13]
    $region29: #{text_classifier_forward.9} parent=1 // pred_fallthru
      _
    // Predicated region
    $region30: #{text_classifier_forward.9} parent=1 // pred_check
      _
    $region31: #{text_classifier_forward.9} parent=1 // pred_check_branch
      %94 = sbr.rel (0) target = $region33
    $region32: #{text_classifier_forward.9} parent=1 // pred_region
      %95 = dma.done [#allocation4], 256
    $region33: #{text_classifier_forward.9} parent=1 // pred_fallthru
      _
    // Predicated region
    $region34: #{text_classifier_forward.9} parent=1 // pred_check
      _
    $region35: #{text_classifier_forward.9} parent=1 // pred_check_branch
      %97 = sbr.rel (0) target = $region37
    $region36: #{text_classifier_forward.9} parent=1 // pred_region
      %98 = dma.done [#allocation7], 512
    $region37: #{text_classifier_forward.9} parent=1 // pred_fallthru
      _
    // Predicated region
    $region38: #{text_classifier_forward.9} parent=1 // pred_check
      _
    $region39: #{text_classifier_forward.9} parent=1 // pred_check_branch
      %100 = sbr.rel (0) target = $region41
    $region40: #{text_classifier_forward.9} parent=1 // pred_region
      %101 = dma.done [#allocation7], 16
    $region41: #{text_classifier_forward.9} parent=1 // pred_fallthru
      _
    // Predicated region
    $region42: #{text_classifier_forward.9} parent=1 // pred_check
      _
    $region43: #{text_classifier_forward.9} parent=1 // pred_check_branch
      %103 = sbr.rel (0) target = $region45
    $region44: #{text_classifier_forward.9} parent=1 // pred_region
      %104 = dma.done [#allocation10], 1024
    $region45: #{text_classifier_forward.9} parent=1 // pred_fallthru
      _
    // Predicated region
    $region46: #{text_classifier_forward.9} parent=1 // pred_check
      _
    $region47: #{text_classifier_forward.9} parent=1 // pred_check_branch
      %106 = sbr.rel (0) target = $region49
    $region48: #{text_classifier_forward.9} parent=1 // pred_region
      %107 = dma.done [#allocation10], 16
    $region49: #{text_classifier_forward.9} parent=1 // pred_fallthru
      _
    // Predicated region
    $region50: #{text_classifier_forward.9} parent=1 // pred_check
      _
    $region51: #{text_classifier_forward.9} parent=1 // pred_check_branch
      %109 = sbr.rel (0) target = $region53
    $region52: #{text_classifier_forward.9} parent=1 // pred_region
      %110 = dma.done [#allocation13], 16
    $region53: #{text_classifier_forward.9} parent=1 // pred_fallthru
      _
    // Predicated region
    $region54: #{text_classifier_forward.9} parent=1 // pred_check
      _
    $region55: #{text_classifier_forward.9} parent=1 // pred_check_branch
      %112 = sbr.rel (0) target = $region57
    $region56: #{text_classifier_forward.9} parent=1 // pred_region
      %113 = dma.done [#allocation13], 16
    $region57: #{text_classifier_forward.9} parent=1 // pred_fallthru
      _
    %p114 = scmp.eq.s32.totalorder 0, 0
    // Predicated region
    $region58: #{text_classifier_forward.9} parent=1 // pred_check
      %p115 = pneg %p114
    $region59: #{text_classifier_forward.9} parent=1 // pred_check_branch
      %117 = sbr.rel (%p115) target = $region61
    $region60: #{text_classifier_forward.9} parent=1 // pred_region
      %vm118 = vcmask 261120
      %119 = vst.msk [vmem:[#allocation2] sm:$0xff] %vm118, 0.0
      %120 = vst.msk [vmem:[#allocation2 + $0x8] sm:$0xff] %vm118, 0.0
    $region61: #{text_classifier_forward.9} parent=1 // pred_fallthru
      _
    %v121 = vld [vmem:[#allocation3] sm:$0xff]
    %v122 = vld [vmem:[#allocation3 + $0x8] sm:$0xff]
    %v123 = vld [vmem:[#allocation6] sm:$0xff]
    %v124 = vld [vmem:[#allocation6 + $0x8] sm:$0xff]
    %v125 = vld [vmem:[#allocation6 + $0x10] sm:$0xff]
    %v126 = vld [vmem:[#allocation6 + $0x18] sm:$0xff]
    %v127 = vld [vmem:[#allocation8] sm:$0x1]
    %v129 = vlaneseq
    %v130 = vshrl.u32 %v129, 7
    %v131 = vsub.s32 0, %v130
    %v132 = vrot.slane %v127, %v131
    %vm134 = vcmask 261120
    %v136 = vsel %vm134, %v121, 0
    %v139 = vsel %vm134, %v122, 0
    %141 = vmatprep.subr.mxu0 0.0
    %142 = vmatpush1.msra.mxu0 %v123
    %143 = vmatprep.subr.mxu0 0.0
    %144 = vmatpush1.msra.mxu0 %v124
    %145 = vmatprep.subr.mxu0 0.0
    %146 = vmatpush1.msra.mxu0 %v125
    %147 = vmatprep.subr.mxu0 0.0
    %148 = vmatpush1.msra.mxu0 %v126
    %149 = vmatprep.subr.mxu0 0.0
    %150 = vmatpush1.msra.mxu0 0.0
    %151 = vmatprep.subr.mxu0 0.0
    %152 = vmatpush1.msra.mxu0 0.0
    %153 = vmatprep.subr.mxu0 0.0
    %154 = vmatpush1.msra.mxu0 0.0
    %155 = vmatprep.subr.mxu0 0.0
    %156 = vmatpush1.msra.mxu0 0.0
    %157 = vmatprep.subr.mxu0 0.0
    %158 = vmatpush1.msra.mxu0 0.0
    %159 = vmatprep.subr.mxu0 0.0
    %160 = vmatpush1.msra.mxu0 0.0
    %161 = vmatprep.subr.mxu0 0.0
    %162 = vmatpush1.msra.mxu0 0.0
    %163 = vmatprep.subr.mxu0 0.0
    %164 = vmatpush1.msra.mxu0 0.0
    %165 = vmatprep.subr.mxu0 0.0
    %166 = vmatpush1.msra.mxu0 0.0
    %167 = vmatprep.subr.mxu0 0.0
    %168 = vmatpush1.msra.mxu0 0.0
    %169 = vmatprep.subr.mxu0 0.0
    %170 = vmatpush1.msra.mxu0 0.0
    %171 = vmatprep.subr.mxu0 0.0
    %172 = vmatpush1.msra.mxu0 0.0
    %173 = vmatprep.subr.mxu0 0.0
    %174 = vmatpush1.msra.mxu0 0.0
    %175 = vmatprep.subr.mxu0 0.0
    %176 = vmatpush1.msra.mxu0 0.0
    %177 = vmatprep.subr.mxu0 0.0
    %178 = vmatpush1.msra.mxu0 0.0
    %179 = vmatprep.subr.mxu0 0.0
    %180 = vmatpush1.msra.mxu0 0.0
    %181 = vmatprep.subr.mxu0 0.0
    %182 = vmatpush1.msra.mxu0 0.0
    %183 = vmatprep.subr.mxu0 0.0
    %184 = vmatpush1.msra.mxu0 0.0
    %185 = vmatprep.subr.mxu0 0.0
    %186 = vmatpush1.msra.mxu0 0.0
    %187 = vmatprep.subr.mxu0 0.0
    %188 = vmatpush1.msra.mxu0 0.0
    %189 = vmatprep.subr.mxu0 0.0
    %190 = vmatpush1.msra.mxu0 0.0
    %191 = vmatprep.subr.mxu0 0.0
    %192 = vmatpush1.msra.mxu0 0.0
    %193 = vmatprep.subr.mxu0 0.0
    %194 = vmatpush1.msra.mxu0 0.0
    %195 = vmatprep.subr.mxu0 0.0
    %196 = vmatpush1.msra.mxu0 0.0
    %197 = vmatprep.subr.mxu0 0.0
    %198 = vmatpush1.msra.mxu0 0.0
    %199 = vmatprep.subr.mxu0 0.0
    %200 = vmatpush1.msra.mxu0 0.0
    %201 = vmatprep.subr.mxu0 0.0
    %202 = vmatpush1.msra.mxu0 0.0
    %203 = vmatprep.subr.mxu0 0.0
    %204 = vmatpush1.msra.mxu0 0.0
    %205 = vmatprep.mubr.f32.mxu0 0.0
    %206 = vmatmul.mubr.f32.gmra.mrb[0].mxu0 %v136
    %v207 = vpop.f32.mrb[0].mxu0
    %v208 = vadd.f32 %v132, %v207
    %v209 = vpop.f32.mrb[0].mxu0
    %210 = vmatprep.mubr.f32.mxu0 0.0
    %211 = vmatmul.mubr.f32.gmra.mrb[0].mxu0 %v139
    %v212 = vpop.f32.mrb[0].mxu0
    %v213 = vadd.f32 %v132, %v212
    %v214 = vpop.f32.mrb[0].mxu0
    %215 = vdwg.mxu0
    %v216 = vmax.f32 %v208, 0.0
    %v217 = vmax.f32 %v213, 0.0
    %v218 = vld [vmem:[#allocation2] sm:$0xff]
    %v219 = vld [vmem:[#allocation2 + $0x8] sm:$0xff]
    %v220 = vld [vmem:[#allocation9] sm:$0xff]
    %v221 = vld [vmem:[#allocation9 + $0x8] sm:$0xff]
    %v222 = vld [vmem:[#allocation9 + $0x10] sm:$0xff]
    %v223 = vld [vmem:[#allocation9 + $0x18] sm:$0xff]
    %v224 = vld [vmem:[#allocation9 + $0x20] sm:$0xff]
    %v225 = vld [vmem:[#allocation9 + $0x28] sm:$0xff]
    %v226 = vld [vmem:[#allocation9 + $0x30] sm:$0xff]
    %v227 = vld [vmem:[#allocation9 + $0x38] sm:$0xff]
    %vm228 = vcmask 523264
    %v230 = vsel %vm228, %v216, 0
    %v233 = vsel %vm228, %v217, 0
    %235 = vmatprep.subr.mxu0 0.0
    %236 = vmatpush1.msra.mxu0 %v220
    %237 = vmatprep.subr.mxu0 0.0
    %238 = vmatpush1.msra.mxu0 %v221
    %239 = vmatprep.subr.mxu0 0.0
    %240 = vmatpush1.msra.mxu0 %v222
    %241 = vmatprep.subr.mxu0 0.0
    %242 = vmatpush1.msra.mxu0 %v223
    %243 = vmatprep.subr.mxu0 0.0
    %244 = vmatpush1.msra.mxu0 %v224
    %245 = vmatprep.subr.mxu0 0.0
    %246 = vmatpush1.msra.mxu0 %v225
    %247 = vmatprep.subr.mxu0 0.0
    %248 = vmatpush1.msra.mxu0 %v226
    %249 = vmatprep.subr.mxu0 0.0
    %250 = vmatpush1.msra.mxu0 %v227
    %251 = vmatprep.subr.mxu0 0.0
    %252 = vmatpush1.msra.mxu0 0.0
    %253 = vmatprep.subr.mxu0 0.0
    %254 = vmatpush1.msra.mxu0 0.0
    %255 = vmatprep.subr.mxu0 0.0
    %256 = vmatpush1.msra.mxu0 0.0
    %257 = vmatprep.subr.mxu0 0.0
    %258 = vmatpush1.msra.mxu0 0.0
    %259 = vmatprep.subr.mxu0 0.0
    %260 = vmatpush1.msra.mxu0 0.0
    %261 = vmatprep.subr.mxu0 0.0
    %262 = vmatpush1.msra.mxu0 0.0
    %263 = vmatprep.subr.mxu0 0.0
    %264 = vmatpush1.msra.mxu0 0.0
    %265 = vmatprep.subr.mxu0 0.0
    %266 = vmatpush1.msra.mxu0 0.0
    %267 = vmatprep.subr.mxu0 0.0
    %268 = vmatpush1.msra.mxu0 0.0
    %269 = vmatprep.subr.mxu0 0.0
    %270 = vmatpush1.msra.mxu0 0.0
    %271 = vmatprep.subr.mxu0 0.0
    %272 = vmatpush1.msra.mxu0 0.0
    %273 = vmatprep.subr.mxu0 0.0
    %274 = vmatpush1.msra.mxu0 0.0
    %275 = vmatprep.subr.mxu0 0.0
    %276 = vmatpush1.msra.mxu0 0.0
    %277 = vmatprep.subr.mxu0 0.0
    %278 = vmatpush1.msra.mxu0 0.0
    %279 = vmatprep.subr.mxu0 0.0
    %280 = vmatpush1.msra.mxu0 0.0
    %281 = vmatprep.subr.mxu0 0.0
    %282 = vmatpush1.msra.mxu0 0.0
    %283 = vmatprep.subr.mxu0 0.0
    %284 = vmatpush1.msra.mxu0 0.0
    %285 = vmatprep.subr.mxu0 0.0
    %286 = vmatpush1.msra.mxu0 0.0
    %287 = vmatprep.subr.mxu0 0.0
    %288 = vmatpush1.msra.mxu0 0.0
    %289 = vmatprep.subr.mxu0 0.0
    %290 = vmatpush1.msra.mxu0 0.0
    %291 = vmatprep.subr.mxu0 0.0
    %292 = vmatpush1.msra.mxu0 0.0
    %293 = vmatprep.subr.mxu0 0.0
    %294 = vmatpush1.msra.mxu0 0.0
    %295 = vmatprep.subr.mxu0 0.0
    %296 = vmatpush1.msra.mxu0 0.0
    %297 = vmatprep.subr.mxu0 0.0
    %298 = vmatpush1.msra.mxu0 0.0
    %299 = vmatprep.mubr.f32.mxu0 0.0
    %300 = vmatmul.mubr.f32.gmra.mrb[0].mxu0 %v230
    %v301 = vpop.f32.mrb[0].mxu0
    %v302 = vadd.f32 0.0, %v301
    %v303 = vpop.f32.mrb[0].mxu0
    %304 = vmatprep.mubr.f32.mxu0 0.0
    %305 = vmatmul.mubr.f32.gmra.mrb[0].mxu0 %v233
    %v306 = vpop.f32.mrb[0].mxu0
    %v307 = vadd.f32 0.0, %v306
    %v308 = vpop.f32.mrb[0].mxu0
    %309 = vdwg.mxu0
    %v310 = vadd.f32 %v218, %v302
    %v311 = vadd.f32 %v219, %v307
    %312 = vst.msk [vmem:[#allocation2] sm:$0xff] %vm134, %v310
    %313 = vst.msk [vmem:[#allocation2 + $0x8] sm:$0xff] %vm134, %v311
    // Predicated region
    $region62: #{text_classifier_forward.9} parent=1 // pred_check
      %p314 = pneg %p114
    $region63: #{text_classifier_forward.9} parent=1 // pred_check_branch
      %316 = sbr.rel (%p314) target = $region65
    $region64: #{text_classifier_forward.9} parent=1 // pred_region
      %v317 = vld [vmem:[#allocation2] sm:$0xff]
      %v318 = vld [vmem:[#allocation2 + $0x8] sm:$0xff]
      %v319 = vld [vmem:[#allocation11] sm:$0x1]
      %v321 = vlaneseq
      %v322 = vshrl.u32 %v321, 7
      %v323 = vsub.s32 0, %v322
      %v324 = vrot.slane %v319, %v323
      %v326 = vadd.f32 %v317, %v324
      %v327 = vadd.f32 %v318, %v324
      %v328 = vadd.f32 %v326, %v121
      %v329 = vadd.f32 %v327, %v122
      %v330 = vsel %vm134, %v328, 0.0
      %331 = vadd.xlane.f32.xlu0 %v330
      %v332 = vpop.xlane.xlu0 %331
      %v333 = vsel %vm134, %v329, 0.0
      %334 = vadd.xlane.f32.xlu0 %v333
      %v335 = vpop.xlane.xlu0 %334
      %v336 = vrcp.pop 32.0
      %v337 = vmul.f32 %v332, %v336
      %v338 = vmul.f32 %v335, %v336
      %v339 = vsub.f32 %v328, %v337
      %v340 = vsub.f32 %v329, %v338
      %v341 = vmul.f32 %v339, %v339
      %v342 = vmul.f32 %v340, %v340
      %v343 = vsel %vm134, %v341, 0.0
      %344 = vadd.xlane.f32.xlu0 %v343
      %v345 = vpop.xlane.xlu0 %344
      %v346 = vsel %vm134, %v342, 0.0
      %347 = vadd.xlane.f32.xlu0 %v346
      %v348 = vpop.xlane.xlu0 %347
      %v349 = vmul.f32 %v345, %v336
      %v350 = vmul.f32 %v348, %v336
      %v351 = vadd.f32 %v349, 1e-05
      %v352 = vadd.f32 %v350, 1e-05
      %v353 = vrsqrt.pop %v351
      %v354 = vrsqrt.pop %v352
      %v355 = vmul.f32 %v339, %v353
      %v356 = vmul.f32 %v340, %v354
      %v357 = vld [vmem:[#allocation12] sm:$0x1]
      %v359 = vlaneseq
      %v360 = vshrl.u32 %v359, 7
      %v361 = vsub.s32 0, %v360
      %v362 = vrot.slane %v357, %v361
      %v364 = vmul.f32 %v355, %v362
      %v365 = vmul.f32 %v356, %v362
      %v366 = vld [vmem:[#allocation14] sm:$0x1]
      %v368 = vlaneseq
      %v369 = vshrl.u32 %v368, 7
      %v370 = vsub.s32 0, %v369
      %v371 = vrot.slane %v366, %v370
      %v373 = vadd.f32 %v364, %v371
      %v374 = vadd.f32 %v365, %v371
      %375 = vst.msk [vmem:[#allocation15] sm:$0xff] %vm134, %v373
      %376 = vst.msk [vmem:[#allocation15 + $0x8] sm:$0xff] %vm134, %v374
    $region65: #{text_classifier_forward.9} parent=1 // pred_fallthru
      _
    // Predicated region
    $region66: #{text_classifier_forward.9} parent=1 // pred_check
      _
    $region67: #{text_classifier_forward.9} parent=1 // pred_check_branch
      %378 = sbr.rel (0) target = $region69
    $region68: #{text_classifier_forward.9} parent=1 // pred_region
      %s380 = ssub.s32 256, 256
      %381 = vsyncadd [#allocation5], %s380
      %s382 = sshll.u32 [#allocation15], 4
      %s383 = int_to_ptr.vmem [resolvable:$true] %s382
      %388 = dma.vmem_to_hbm [thread:$0]  %s383, 256, %s7, [#allocation5], 128, 128, 8
    $region69: #{text_classifier_forward.9} parent=1 // pred_fallthru
      _
    // Predicated region
    $region70: #{text_classifier_forward.9} parent=1 // pred_check
      _
    $region71: #{text_classifier_forward.9} parent=1 // pred_check_branch
      %390 = sbr.rel (0) target = $region73
    $region72: #{text_classifier_forward.9} parent=1 // pred_region
      %391 = dma.done [#allocation5], 256
    $region73: #{text_classifier_forward.9} parent=1 // pred_fallthru
      _
    %392 = vsyncpa [#allocation4], 1
    %393 = vsyncpa [#allocation7], 1
    %394 = vsyncpa [#allocation10], 1
    %395 = vsyncpa [#allocation13], 1
    %396 = vsyncpa [#allocation5], 1

// kernel: text_classifier_forward.8
$region0: #{text_classifier_forward.8}
  #allocation0 [shape = 'u32[]', space=smem, size = 0x4, offset = 0x4, fixed_abs, tag = 'smem constant byte address 0x4 - core index']
  #allocation1 [shape = 'u32[144,128]{1,0:T(1,128)}', space=vmem, size = 0x12000, scoped, tag = 'internal scratch']
  %s0 = inlined_call_operand.hbm [shape: f32[2,4,8,8], index: 0, kind: input, shape index: {}]
  %s1 = inlined_call_operand.hbm [shape: f32[2,4,8,8], index: 1, kind: input, shape index: {}]
  %s2 = inlined_call_operand.hbm [shape: f32[2,4,8,8], index: 2, kind: input, shape index: {}]
  %s3 = inlined_call_operand.hbm [shape: f32[2,1,8], index: 3, kind: input, shape index: {}]
  %s4 = inlined_call_operand.hbm [shape: f32[4,8,32], index: 4, kind: input, shape index: {}]
  %s5 = inlined_call_operand.hbm [shape: f32[1,32], index: 5, kind: input, shape index: {}]
  %s6 = inlined_call_operand.hbm [shape: f32[2,8,32], index: 6, kind: input, shape index: {}]
  %s7 = inlined_call_operand.hbm [shape: f32[1,32], index: 7, kind: input, shape index: {}]
  %s8 = inlined_call_operand.hbm [shape: f32[1,32], index: 8, kind: input, shape index: {}]
  %s9 = inlined_call_operand.hbm [shape: f32[2,8,32], index: 9, kind: output, shape index: {}]
  %s10 = sld [smem:[#allocation0]]
  $region105: #{text_classifier_forward.8} parent=0
    _
  %s12 = ssub.s32 1, %s10
  %s13 = scalar_select 0, %s12, %s10
  $region1: #{text_classifier_forward.8} parent=0
    #allocation2 [shape = 'u8[32768]{0}', space=vmem, size = 0x8000, scoped, tag = 'input window, operand 0']
    #allocation3 [shape = 's32[2]{0}', space=sflag, size = 0x8, scoped, tag = 'scoped memory for text_classifier_forward.8']
    #allocation4 [shape = 's32[2]{0}', space=sflag, size = 0x8, scoped, tag = 'scoped memory for text_classifier_forward.8']
    #allocation5 [shape = 'u8[32768]{0}', space=vmem, size = 0x8000, scoped, tag = 'input window, operand 1']
    #allocation6 [shape = 's32[2]{0}', space=sflag, size = 0x8, scoped, tag = 'scoped memory for text_classifier_forward.8']
    #allocation7 [shape = 'u8[32768]{0}', space=vmem, size = 0x8000, scoped, tag = 'input window, operand 2']
    #allocation8 [shape = 'u8[1024]{0}', space=vmem, size = 0x400, scoped, tag = 'input window, operand 3']
    #allocation9 [shape = 's32[2]{0}', space=sflag, size = 0x8, scoped, tag = 'scoped memory for text_classifier_forward.8']
    #allocation10 [shape = 'u8[16384]{0}', space=vmem, size = 0x4000, scoped, tag = 'input window, operand 4, single buffered']
    #allocation11 [shape = 'u8[512]{0}', space=vmem, size = 0x400, scoped, tag = 'input window, operand 5, single buffered']
    #allocation12 [shape = 's32[1]{0}', space=sflag, size = 0x4, scoped, tag = 'scoped memory for text_classifier_forward.8']
    #allocation13 [shape = 'u8[8192]{0}', space=vmem, size = 0x2000, scoped, tag = 'input window, operand 6']
    #allocation14 [shape = 'u8[512]{0}', space=vmem, size = 0x400, scoped, tag = 'input window, operand 7, single buffered']
    #allocation15 [shape = 'u8[512]{0}', space=vmem, size = 0x400, scoped, tag = 'input window, operand 8, single buffered']
    #allocation16 [shape = 'u8[8192]{0}', space=vmem, size = 0x2000, scoped, tag = 'output window, operand 0']
    %14 = vsyncpa [#allocation3], 0
    %s15 = scalar_lea.sflag [#allocation3], 1
    %16 = vsyncpa %s15, 0
    %17 = vsyncpa [#allocation6], 0
    %s18 = scalar_lea.sflag [#allocation6], 1
    %19 = vsyncpa %s18, 0
    %20 = vsyncpa [#allocation9], 0
    %s21 = scalar_lea.sflag [#allocation9], 1
    %22 = vsyncpa %s21, 0
    %23 = vsyncpa [#allocation12], 0
    %24 = vsyncpa [#allocation4], 0
    %s25 = scalar_lea.sflag [#allocation4], 1
    %26 = vsyncpa %s25, 0
    loop: start=0, step=1, limit=4
    $region2: #{text_classifier_forward.8} parent=1 // loop_pre_header
      _
    $region3: #{text_classifier_forward.8} parent=1 // loop_header
      %s28 = sphi 0, %s32
      %p29 = scmp.ge.s32.totalorder %s28, 4
      %s35 = sphi 0, %s47
      %s36 = sphi 0, %s43
      %s37 = sphi 0, %s35
      %s38 = sphi 0, %s36
      %s39 = sphi 0, %s37
      %s40 = sphi 0, %s38
      %s52 = sphi 0, %s54
      %s55 = sphi 0, %s52
      %s56 = sphi 0, %s55
      %s72 = sphi 0, %s56
      %s78 = sphi 0, %s80
      %s81 = sphi 0, %s78
      %s82 = sphi 0, %s81
      %s98 = sphi 0, %s82
      %s104 = sphi 0, %s106
      %s107 = sphi 0, %s104
      %s108 = sphi 0, %s107
      %s124 = sphi 0, %s108
      %s130 = sphi 0, %s132
      %s133 = sphi 0, %s130
      %s134 = sphi 0, %s133
      %s150 = sphi 0, %s134
      %s154 = sphi 0, %s154
      %s156 = sphi 0, %s154
      %s157 = sphi 0, %s156
      %s171 = sphi 0, %s157
      %s175 = sphi 0, %s175
      %s177 = sphi 0, %s175
      %s178 = sphi 0, %s177
      %s192 = sphi 0, %s178
      %s200 = sphi 0, %s202
      %s203 = sphi 0, %s200
      %s204 = sphi 0, %s203
      %s220 = sphi 0, %s204
      %s224 = sphi 0, %s224
      %s226 = sphi 0, %s224
      %s227 = sphi 0, %s226
      %s241 = sphi 0, %s227
      %s245 = sphi 0, %s245
      %s247 = sphi 0, %s245
      %s248 = sphi 0, %s247
      %s262 = sphi 0, %s248
      %s270 = sphi 0, %s272
      %s273 = sphi 0, %s270
      %s274 = sphi 0, %s273
      %s290 = sphi 0, %s274
    $region4: #{text_classifier_forward.8} parent=1 // loop_header_branch
      %31 = sbr.rel (%p29) target = $region8
    $region5: #{text_classifier_forward.8} parent=1 // loop_body
      %s33 = ssub.s32 %s28, 1
      %s34 = ssub.s32 %s28, 2
      %s41 = sadd.s32 1, %s36
      %p42 = scmp.ge.s32.totalorder %s41, 1
      %s43 = scalar_select %p42, 0, %s41
      %s44 = sadd.s32 1, %s35
      %s45 = scalar_select %p42, %s44, %s35
      %p46 = scmp.ge.s32.totalorder %s45, 2
      %s47 = scalar_select %p46, 0, %s45
      %s48 = ssub.s32 %s35, %s47
      %s49 = ssub.s32 %s36, %s43
      %s50 = sor.u32 %s48, %s49
      %p51 = scmp.eq.s32.totalorder %s50, 0
      %s53 = sadd.s32 %s52, 1
      %s54 = scalar_select %p51, %s52, %s53
      %p57 = pneg %p51
      %p58 = scmp.eq.s32.totalorder %s28, 1
      %p59 = por %p57, %p58
      %p60 = scmp.ne.s32.totalorder %s52, %s55
      %p61 = scmp.eq.s32.totalorder %s28, 0
      %p62 = por %p60, %p61
      %p63 = scmp.ne.s32.totalorder %s52, %s55
      %p64 = scmp.eq.s32.totalorder %s33, 1
      %p65 = por %p63, %p64
      %p66 = scmp.ne.s32.totalorder %s55, %s56
      %p67 = scmp.eq.s32.totalorder %s33, 0
      %p68 = por %p66, %p67
      %p69 = scmp.ne.s32.totalorder %s55, %s56
      %p70 = scmp.eq.s32.totalorder %s34, 1
      %p71 = por %p69, %p70
      %p73 = scmp.ne.s32.totalorder %s56, %s72
      %p74 = scmp.eq.s32.totalorder %s34, 0
      %p75 = por %p73, %p74
      %s76 = ssub.s32 %s35, %s47
      %p77 = scmp.eq.s32.totalorder %s76, 0
      %s79 = sadd.s32 %s78, 1
      %s80 = scalar_select %p77, %s78, %s79
      %p83 = pneg %p77
      %p84 = scmp.eq.s32.totalorder %s28, 1
      %p85 = por %p83, %p84
      %p86 = scmp.ne.s32.totalorder %s78, %s81
      %p87 = scmp.eq.s32.totalorder %s28, 0
      %p88 = por %p86, %p87
      %p89 = scmp.ne.s32.totalorder %s78, %s81
      %p90 = scmp.eq.s32.totalorder %s33, 1
      %p91 = por %p89, %p90
      %p92 = scmp.ne.s32.totalorder %s81, %s82
      %p93 = scmp.eq.s32.totalorder %s33, 0
      %p94 = por %p92, %p93
      %p95 = scmp.ne.s32.totalorder %s81, %s82
      %p96 = scmp.eq.s32.totalorder %s34, 1
      %p97 = por %p95, %p96
      %p99 = scmp.ne.s32.totalorder %s82, %s98
      %p100 = scmp.eq.s32.totalorder %s34, 0
      %p101 = por %p99, %p100
      %s102 = ssub.s32 %s35, %s47
      %p103 = scmp.eq.s32.totalorder %s102, 0
      %s105 = sadd.s32 %s104, 1
      %s106 = scalar_select %p103, %s104, %s105
      %p109 = pneg %p103
      %p110 = scmp.eq.s32.totalorder %s28, 1
      %p111 = por %p109, %p110
      %p112 = scmp.ne.s32.totalorder %s104, %s107
      %p113 = scmp.eq.s32.totalorder %s28, 0
      %p114 = por %p112, %p113
      %p115 = scmp.ne.s32.totalorder %s104, %s107
      %p116 = scmp.eq.s32.totalorder %s33, 1
      %p117 = por %p115, %p116
      %p118 = scmp.ne.s32.totalorder %s107, %s108
      %p119 = scmp.eq.s32.totalorder %s33, 0
      %p120 = por %p118, %p119
      %p121 = scmp.ne.s32.totalorder %s107, %s108
      %p122 = scmp.eq.s32.totalorder %s34, 1
      %p123 = por %p121, %p122
      %p125 = scmp.ne.s32.totalorder %s108, %s124
      %p126 = scmp.eq.s32.totalorder %s34, 0
      %p127 = por %p125, %p126
      %s128 = ssub.s32 %s35, %s47
      %p129 = scmp.eq.s32.totalorder %s128, 0
      %s131 = sadd.s32 %s130, 1
      %s132 = scalar_select %p129, %s130, %s131
      %p135 = pneg %p129
      %p136 = scmp.eq.s32.totalorder %s28, 1
      %p137 = por %p135, %p136
      %p138 = scmp.ne.s32.totalorder %s130, %s133
      %p139 = scmp.eq.s32.totalorder %s28, 0
      %p140 = por %p138, %p139
      %p141 = scmp.ne.s32.totalorder %s130, %s133
      %p142 = scmp.eq.s32.totalorder %s33, 1
      %p143 = por %p141, %p142
      %p144 = scmp.ne.s32.totalorder %s133, %s134
      %p145 = scmp.eq.s32.totalorder %s33, 0
      %p146 = por %p144, %p145
      %p147 = scmp.ne.s32.totalorder %s133, %s134
      %p148 = scmp.eq.s32.totalorder %s34, 1
      %p149 = por %p147, %p148
      %p151 = scmp.ne.s32.totalorder %s134, %s150
      %p152 = scmp.eq.s32.totalorder %s34, 0
      %p153 = por %p151, %p152
      %s155 = sadd.s32 %s154, 1
      %p158 = scmp.eq.s32.totalorder %s28, 1
      %p159 = scmp.ne.s32.totalorder %s154, %s156
      %p160 = scmp.eq.s32.totalorder %s28, 0
      %p161 = por %p159, %p160
      %p162 = scmp.ne.s32.totalorder %s154, %s156
      %p163 = scmp.eq.s32.totalorder %s33, 1
      %p164 = por %p162, %p163
      %p165 = scmp.ne.s32.totalorder %s156, %s157
      %p166 = scmp.eq.s32.totalorder %s33, 0
      %p167 = por %p165, %p166
      %p168 = scmp.ne.s32.totalorder %s156, %s157
      %p169 = scmp.eq.s32.totalorder %s34, 1
      %p170 = por %p168, %p169
      %p172 = scmp.ne.s32.totalorder %s157, %s171
      %p173 = scmp.eq.s32.totalorder %s34, 0
      %p174 = por %p172, %p173
      %s176 = sadd.s32 %s175, 1
      %p179 = scmp.eq.s32.totalorder %s28, 1
      %p180 = scmp.ne.s32.totalorder %s175, %s177
      %p181 = scmp.eq.s32.totalorder %s28, 0
      %p182 = por %p180, %p181
      %p183 = scmp.ne.s32.totalorder %s175, %s177
      %p184 = scmp.eq.s32.totalorder %s33, 1
      %p185 = por %p183, %p184
      %p186 = scmp.ne.s32.totalorder %s177, %s178
      %p187 = scmp.eq.s32.totalorder %s33, 0
      %p188 = por %p186, %p187
      %p189 = scmp.ne.s32.totalorder %s177, %s178
      %p190 = scmp.eq.s32.totalorder %s34, 1
      %p191 = por %p189, %p190
      %p193 = scmp.ne.s32.totalorder %s178, %s192
      %p194 = scmp.eq.s32.totalorder %s34, 0
      %p195 = por %p193, %p194
      %s196 = ssub.s32 %s35, %s47
      %s197 = ssub.s32 %s36, %s43
      %s198 = sor.u32 %s196, %s197
      %p199 = scmp.eq.s32.totalorder %s198, 0
      %s201 = sadd.s32 %s200, 1
      %s202 = scalar_select %p199, %s200, %s201
      %p205 = pneg %p199
      %p206 = scmp.eq.s32.totalorder %s28, 1
      %p207 = por %p205, %p206
      %p208 = scmp.ne.s32.totalorder %s200, %s203
      %p209 = scmp.eq.s32.totalorder %s28, 0
      %p210 = por %p208, %p209
      %p211 = scmp.ne.s32.totalorder %s200, %s203
      %p212 = scmp.eq.s32.totalorder %s33, 1
      %p213 = por %p211, %p212
      %p214 = scmp.ne.s32.totalorder %s203, %s204
      %p215 = scmp.eq.s32.totalorder %s33, 0
      %p216 = por %p214, %p215
      %p217 = scmp.ne.s32.totalorder %s203, %s204
      %p218 = scmp.eq.s32.totalorder %s34, 1
      %p219 = por %p217, %p218
      %p221 = scmp.ne.s32.totalorder %s204, %s220
      %p222 = scmp.eq.s32.totalorder %s34, 0
      %p223 = por %p221, %p222
      %s225 = sadd.s32 %s224, 1
      %p228 = scmp.eq.s32.totalorder %s28, 1
      %p229 = scmp.ne.s32.totalorder %s224, %s226
      %p230 = scmp.eq.s32.totalorder %s28, 0
      %p231 = por %p229, %p230
      %p232 = scmp.ne.s32.totalorder %s224, %s226
      %p233 = scmp.eq.s32.totalorder %s33, 1
      %p234 = por %p232, %p233
      %p235 = scmp.ne.s32.totalorder %s226, %s227
      %p236 = scmp.eq.s32.totalorder %s33, 0
      %p237 = por %p235, %p236
      %p238 = scmp.ne.s32.totalorder %s226, %s227
      %p239 = scmp.eq.s32.totalorder %s34, 1
      %p240 = por %p238, %p239
      %p242 = scmp.ne.s32.totalorder %s227, %s241
      %p243 = scmp.eq.s32.totalorder %s34, 0
      %p244 = por %p242, %p243
      %s246 = sadd.s32 %s245, 1
      %p249 = scmp.eq.s32.totalorder %s28, 1
      %p250 = scmp.ne.s32.totalorder %s245, %s247
      %p251 = scmp.eq.s32.totalorder %s28, 0
      %p252 = por %p250, %p251
      %p253 = scmp.ne.s32.totalorder %s245, %s247
      %p254 = scmp.eq.s32.totalorder %s33, 1
      %p255 = por %p253, %p254
      %p256 = scmp.ne.s32.totalorder %s247, %s248
      %p257 = scmp.eq.s32.totalorder %s33, 0
      %p258 = por %p256, %p257
      %p259 = scmp.ne.s32.totalorder %s247, %s248
      %p260 = scmp.eq.s32.totalorder %s34, 1
      %p261 = por %p259, %p260
      %p263 = scmp.ne.s32.totalorder %s248, %s262
      %p264 = scmp.eq.s32.totalorder %s34, 0
      %p265 = por %p263, %p264
      %s266 = ssub.s32 %s35, %s47
      %s267 = ssub.s32 %s36, %s43
      %s268 = sor.u32 %s266, %s267
      %p269 = scmp.eq.s32.totalorder %s268, 0
      %s271 = sadd.s32 %s270, 1
      %s272 = scalar_select %p269, %s270, %s271
      %p275 = pneg %p269
      %p276 = scmp.eq.s32.totalorder %s28, 1
      %p277 = por %p275, %p276
      %p278 = scmp.ne.s32.totalorder %s270, %s273
      %p279 = scmp.eq.s32.totalorder %s28, 0
      %p280 = por %p278, %p279
      %p281 = scmp.ne.s32.totalorder %s270, %s273
      %p282 = scmp.eq.s32.totalorder %s33, 1
      %p283 = por %p281, %p282
      %p284 = scmp.ne.s32.totalorder %s273, %s274
      %p285 = scmp.eq.s32.totalorder %s33, 0
      %p286 = por %p284, %p285
      %p287 = scmp.ne.s32.totalorder %s273, %s274
      %p288 = scmp.eq.s32.totalorder %s34, 1
      %p289 = por %p287, %p288
      %p291 = scmp.ne.s32.totalorder %s274, %s290
      %p292 = scmp.eq.s32.totalorder %s34, 0
      %p293 = por %p291, %p292
      %p294 = scmp.le.s32.totalorder 1, %s28
      %p295 = scmp.lt.s32.totalorder %s28, 3
      %p296 = pnand %p294, %p295
      %p297 = pneg %p296
      // Predicated region
      $region9: #{text_classifier_forward.8} parent=5 // pred_check
        _
      $region10: #{text_classifier_forward.8} parent=5 // pred_check_branch
        %299 = sbr.rel (%p296) target = $region12
      $region11: #{text_classifier_forward.8} parent=5 // pred_region
        %s300 = ssub.s32 %s28, 1
        // Predicated region
        $region13: #{text_classifier_forward.8} parent=11 // pred_check
          %p301 = pneg %p167
        $region14: #{text_classifier_forward.8} parent=11 // pred_check_branch
          %303 = sbr.rel (%p301) target = $region16
        $region15: #{text_classifier_forward.8} parent=11 // pred_region
          %s305 = ssub.s32 512, 512
          %306 = vsyncadd [#allocation9], %s305
          %s307 = sshll.u32 [#allocation10], 4
          %s308 = int_to_ptr.vmem [resolvable:$true] %s307
          %313 = dma.hbm_to_vmem [thread:$0]  %s4, 512, %s308, [#allocation9], 128, 128, 8
        $region16: #{text_classifier_forward.8} parent=11 // pred_fallthru
          _
        // Predicated region
        $region17: #{text_classifier_forward.8} parent=11 // pred_check
          %p314 = pneg %p188
        $region18: #{text_classifier_forward.8} parent=11 // pred_check_branch
          %316 = sbr.rel (%p314) target = $region20
        $region19: #{text_classifier_forward.8} parent=11 // pred_region
          %s318 = ssub.s32 16, 16
          %319 = vsyncadd [#allocation12], %s318
          %s321 = sshll.u32 [#allocation11], 4
          %s322 = int_to_ptr.vmem [resolvable:$true] %s321
          %324 = dma.hbm_to_vmem [thread:$0]  %s5, 16, %s322, [#allocation12]
        $region20: #{text_classifier_forward.8} parent=11 // pred_fallthru
          _
        // Predicated region
        $region21: #{text_classifier_forward.8} parent=11 // pred_check
          %p325 = pneg %p237
        $region22: #{text_classifier_forward.8} parent=11 // pred_check_branch
          %327 = sbr.rel (%p325) target = $region24
        $region23: #{text_classifier_forward.8} parent=11 // pred_region
          %s329 = ssub.s32 16, 16
          %330 = vsyncadd [#allocation6], %s329
          %s332 = sshll.u32 [#allocation14], 4
          %s333 = int_to_ptr.vmem [resolvable:$true] %s332
          %335 = dma.hbm_to_vmem [thread:$0]  %s7, 16, %s333, [#allocation6]
        $region24: #{text_classifier_forward.8} parent=11 // pred_fallthru
          _
        // Predicated region
        $region25: #{text_classifier_forward.8} parent=11 // pred_check
          %p336 = pneg %p258
        $region26: #{text_classifier_forward.8} parent=11 // pred_check_branch
          %338 = sbr.rel (%p336) target = $region28
        $region27: #{text_classifier_forward.8} parent=11 // pred_region
          %s340 = ssub.s32 16, 16
          %341 = vsyncadd [#allocation9], %s340
          %s343 = sshll.u32 [#allocation15], 4
          %s344 = int_to_ptr.vmem [resolvable:$true] %s343
          %346 = dma.hbm_to_vmem [thread:$0]  %s8, 16, %s344, [#allocation9]
        $region28: #{text_classifier_forward.8} parent=11 // pred_fallthru
          _
      $region12: #{text_classifier_forward.8} parent=5 // pred_fallthru
        _
      %p347 = scmp.lt.s32.totalorder %s28, 2
      // Predicated region
      $region29: #{text_classifier_forward.8} parent=5 // pred_check
        %p348 = pneg %p347
      $region30: #{text_classifier_forward.8} parent=5 // pred_check_branch
        %350 = sbr.rel (%p348) target = $region32
      $region31: #{text_classifier_forward.8} parent=5 // pred_region
        // Predicated region
        $region33: #{text_classifier_forward.8} parent=31 // pred_check
          %p351 = pneg %p62
        $region34: #{text_classifier_forward.8} parent=31 // pred_check_branch
          %353 = sbr.rel (%p351) target = $region36
        $region35: #{text_classifier_forward.8} parent=31 // pred_region
          %s354 = sand.u32 %s28, 1
          %s355 = scalar_lea.sflag [#allocation3], %s354
          %s356 = sand.u32 %s52, 1
          %s357 = smul.addr %s356, 32
          %s358 = scalar_lea.vmem [#allocation2], %s357
          %s360 = ssub.s32 512, 512
          %361 = vsyncadd %s355, %s360
          %s362 = smul.addr %s35, 4
          %s363 = sadd.s32 %s36, %s362
          %s364 = smul.addr %s363, 128
          %s365 = scalar_lea.hbm %s0, %s364
          %s366 = sshll.u32 %s358, 4
          %s367 = int_to_ptr.vmem [resolvable:$true] %s366
          %372 = dma.hbm_to_vmem [thread:$0]  %s365, 512, %s367, %s355, 128, 128, 8
        $region36: #{text_classifier_forward.8} parent=31 // pred_fallthru
          _
        // Predicated region
        $region37: #{text_classifier_forward.8} parent=31 // pred_check
          %p373 = pneg %p88
        $region38: #{text_classifier_forward.8} parent=31 // pred_check_branch
          %375 = sbr.rel (%p373) target = $region40
        $region39: #{text_classifier_forward.8} parent=31 // pred_region
          %s376 = sand.u32 %s28, 1
          %s377 = scalar_lea.sflag [#allocation6], %s376
          %s378 = sand.u32 %s78, 1
          %s379 = smul.addr %s378, 32
          %s380 = scalar_lea.vmem [#allocation5], %s379
          %s382 = ssub.s32 512, 512
          %383 = vsyncadd %s377, %s382
          %s384 = smul.addr %s35, 4
          %s385 = smul.addr %s384, 128
          %s386 = scalar_lea.hbm %s1, %s385
          %s387 = sshll.u32 %s380, 4
          %s388 = int_to_ptr.vmem [resolvable:$true] %s387
          %393 = dma.hbm_to_vmem [thread:$0]  %s386, 512, %s388, %s377, 128, 128, 8
        $region40: #{text_classifier_forward.8} parent=31 // pred_fallthru
          _
        // Predicated region
        $region41: #{text_classifier_forward.8} parent=31 // pred_check
          %p394 = pneg %p114
        $region42: #{text_classifier_forward.8} parent=31 // pred_check_branch
          %396 = sbr.rel (%p394) target = $region44
        $region43: #{text_classifier_forward.8} parent=31 // pred_region
          %s397 = sand.u32 %s28, 1
          %s398 = scalar_lea.sflag [#allocation6], %s397
          %s399 = sand.u32 %s104, 1
          %s400 = smul.addr %s399, 32
          %s401 = scalar_lea.vmem [#allocation7], %s400
          %s403 = ssub.s32 512, 512
          %404 = vsyncadd %s398, %s403
          %s405 = smul.addr %s35, 4
          %s406 = smul.addr %s405, 128
          %s407 = scalar_lea.hbm %s2, %s406
          %s408 = sshll.u32 %s401, 4
          %s409 = int_to_ptr.vmem [resolvable:$true] %s408
          %414 = dma.hbm_to_vmem [thread:$0]  %s407, 512, %s409, %s398, 128, 128, 8
        $region44: #{text_classifier_forward.8} parent=31 // pred_fallthru
          _
        // Predicated region
        $region45: #{text_classifier_forward.8} parent=31 // pred_check
          %p415 = pneg %p140
        $region46: #{text_classifier_forward.8} parent=31 // pred_check_branch
          %417 = sbr.rel (%p415) target = $region48
        $region47: #{text_classifier_forward.8} parent=31 // pred_region
          %s418 = sand.u32 %s28, 1
          %s419 = scalar_lea.sflag [#allocation9], %s418
          %s420 = sand.u32 %s130, 1
          %s421 = scalar_lea.vmem [#allocation8], %s420
          %s423 = ssub.s32 16, 16
          %424 = vsyncadd %s419, %s423
          %s425 = smul.addr %s35, 16
          %s426 = scalar_lea.hbm %s3, %s425
          %s428 = sshll.u32 %s421, 4
          %s429 = int_to_ptr.vmem [resolvable:$true] %s428
          %431 = dma.hbm_to_vmem [thread:$0]  %s426, 16, %s429, %s419
        $region48: #{text_classifier_forward.8} parent=31 // pred_fallthru
          _
        // Predicated region
        $region49: #{text_classifier_forward.8} parent=31 // pred_check
          %p432 = pneg %p210
        $region50: #{text_classifier_forward.8} parent=31 // pred_check_branch
          %434 = sbr.rel (%p432) target = $region52
        $region51: #{text_classifier_forward.8} parent=31 // pred_region
          %s435 = sand.u32 %s28, 1
          %s436 = scalar_lea.sflag [#allocation3], %s435
          %s437 = sand.u32 %s200, 1
          %s438 = smul.addr %s437, 8
          %s439 = scalar_lea.vmem [#allocation13], %s438
          %s441 = ssub.s32 128, 128
          %442 = vsyncadd %s436, %s441
          %s443 = sadd.s32 %s36, %s35
          %s444 = smul.addr %s443, 128
          %s445 = scalar_lea.hbm %s6, %s444
          %s447 = sshll.u32 %s439, 4
          %s448 = int_to_ptr.vmem [resolvable:$true] %s447
          %450 = dma.hbm_to_vmem [thread:$0]  %s445, 128, %s448, %s436
        $region52: #{text_classifier_forward.8} parent=31 // pred_fallthru
          _
      $region32: #{text_classifier_forward.8} parent=5 // pred_fallthru
        _
      %p451 = scmp.le.s32.totalorder 1, %s28
      %p452 = scmp.lt.s32.totalorder %s28, 3
      %p453 = pnand %p451, %p452
      %p454 = pneg %p453
      // Predicated region
      $region53: #{text_classifier_forward.8} parent=5 // pred_check
        _
      $region54: #{text_classifier_forward.8} parent=5 // pred_check_branch
        %456 = sbr.rel (%p453) target = $region56
      $region55: #{text_classifier_forward.8} parent=5 // pred_region
        %s457 = ssub.s32 %s28, 1
        %s458 = sand.u32 %s33, 1
        %s459 = scalar_lea.sflag [#allocation3], %s458
        %s460 = sand.u32 %s55, 1
        %s461 = smul.addr %s460, 32
        %s462 = scalar_lea.vmem [#allocation2], %s461
        // Predicated region
        $region57: #{text_classifier_forward.8} parent=55 // pred_check
          %p463 = pneg %p68
        $region58: #{text_classifier_forward.8} parent=55 // pred_check_branch
          %465 = sbr.rel (%p463) target = $region60
        $region59: #{text_classifier_forward.8} parent=55 // pred_region
          %466 = dma.done %s459, 512
        $region60: #{text_classifier_forward.8} parent=55 // pred_fallthru
          _
        %s467 = sand.u32 %s33, 1
        %s468 = scalar_lea.sflag [#allocation6], %s467
        %s469 = sand.u32 %s81, 1
        %s470 = smul.addr %s469, 32
        %s471 = scalar_lea.vmem [#allocation5], %s470
        // Predicated region
        $region61: #{text_classifier_forward.8} parent=55 // pred_check
          %p472 = pneg %p94
        $region62: #{text_classifier_forward.8} parent=55 // pred_check_branch
          %474 = sbr.rel (%p472) target = $region64
        $region63: #{text_classifier_forward.8} parent=55 // pred_region
          %475 = dma.done %s468, 512
        $region64: #{text_classifier_forward.8} parent=55 // pred_fallthru
          _
        %s476 = sand.u32 %s33, 1
        %s477 = scalar_lea.sflag [#allocation6], %s476
        %s478 = sand.u32 %s107, 1
        %s479 = smul.addr %s478, 32
        %s480 = scalar_lea.vmem [#allocation7], %s479
        // Predicated region
        $region65: #{text_classifier_forward.8} parent=55 // pred_check
          %p481 = pneg %p120
        $region66: #{text_classifier_forward.8} parent=55 // pred_check_branch
          %483 = sbr.rel (%p481) target = $region68
        $region67: #{text_classifier_forward.8} parent=55 // pred_region
          %484 = dma.done %s477, 512
        $region68: #{text_classifier_forward.8} parent=55 // pred_fallthru
          _
        %s485 = sand.u32 %s33, 1
        %s486 = scalar_lea.sflag [#allocation9], %s485
        %s487 = sand.u32 %s133, 1
        %s488 = scalar_lea.vmem [#allocation8], %s487
        // Predicated region
        $region69: #{text_classifier_forward.8} parent=55 // pred_check
          %p489 = pneg %p146
        $region70: #{text_classifier_forward.8} parent=55 // pred_check_branch
          %491 = sbr.rel (%p489) target = $region72
        $region71: #{text_classifier_forward.8} parent=55 // pred_region
          %492 = dma.done %s486, 16
        $region72: #{text_classifier_forward.8} parent=55 // pred_fallthru
          _
        // Predicated region
        $region73: #{text_classifier_forward.8} parent=55 // pred_check
          %p493 = pneg %p167
        $region74: #{text_classifier_forward.8} parent=55 // pred_check_branch
          %495 = sbr.rel (%p493) target = $region76
        $region75: #{text_classifier_forward.8} parent=55 // pred_region
          %496 = dma.done [#allocation9], 512
        $region76: #{text_classifier_forward.8} parent=55 // pred_fallthru
          _
        // Predicated region
        $region77: #{text_classifier_forward.8} parent=55 // pred_check
          %p497 = pneg %p188
        $region78: #{text_classifier_forward.8} parent=55 // pred_check_branch
          %499 = sbr.rel (%p497) target = $region80
        $region79: #{text_classifier_forward.8} parent=55 // pred_region
          %500 = dma.done [#allocation12], 16
        $region80: #{text_classifier_forward.8} parent=55 // pred_fallthru
          _
        %s501 = sand.u32 %s33, 1
        %s502 = scalar_lea.sflag [#allocation3], %s501
        %s503 = sand.u32 %s203, 1
        %s504 = smul.addr %s503, 8
        %s505 = scalar_lea.vmem [#allocation13], %s504
        // Predicated region
        $region81: #{text_classifier_forward.8} parent=55 // pred_check
          %p506 = pneg %p216
        $region82: #{text_classifier_forward.8} parent=55 // pred_check_branch
          %508 = sbr.rel (%p506) target = $region84
        $region83: #{text_classifier_forward.8} parent=55 // pred_region
          %509 = dma.done %s502, 128
        $region84: #{text_classifier_forward.8} parent=55 // pred_fallthru
          _
        // Predicated region
        $region85: #{text_classifier_forward.8} parent=55 // pred_check
          %p510 = pneg %p237
        $region86: #{text_classifier_forward.8} parent=55 // pred_check_branch
          %512 = sbr.rel (%p510) target = $region88
        $region87: #{text_classifier_forward.8} parent=55 // pred_region
          %513 = dma.done [#allocation6], 16
        $region88: #{text_classifier_forward.8} parent=55 // pred_fallthru
          _
        // Predicated region
        $region89: #{text_classifier_forward.8} parent=55 // pred_check
          %p514 = pneg %p258
        $region90: #{text_classifier_forward.8} parent=55 // pred_check_branch
          %516 = sbr.rel (%p514) target = $region92
        $region91: #{text_classifier_forward.8} parent=55 // pred_region
          %517 = dma.done [#allocation9], 16
        $region92: #{text_classifier_forward.8} parent=55 // pred_fallthru
          _
        %s518 = sand.u32 %s33, 1
        %s519 = scalar_lea.sflag [#allocation3], %s518
        %s520 = sand.u32 %s55, 1
        %s521 = smul.addr %s520, 32
        %s522 = scalar_lea.vmem [#allocation2], %s521
        %p523 = pneg %p68
        %p524 = pneg %p65
        %s525 = sand.u32 %s33, 1
        %s526 = scalar_lea.sflag [#allocation6], %s525
        %s527 = sand.u32 %s81, 1
        %s528 = smul.addr %s527, 32
        %s529 = scalar_lea.vmem [#allocation5], %s528
        %p530 = pneg %p94
        %p531 = pneg %p91
        %s532 = sand.u32 %s33, 1
        %s533 = scalar_lea.sflag [#allocation6], %s532
        %s534 = sand.u32 %s107, 1
        %s535 = smul.addr %s534, 32
        %s536 = scalar_lea.vmem [#allocation7], %s535
        %p537 = pneg %p120
        %p538 = pneg %p117
        %s539 = sand.u32 %s33, 1
        %s540 = scalar_lea.sflag [#allocation9], %s539
        %s541 = sand.u32 %s133, 1
        %s542 = scalar_lea.vmem [#allocation8], %s541
        %p543 = pneg %p146
        %p544 = pneg %p143
        %p545 = pneg %p167
        %p546 = pneg %p164
        %p547 = pneg %p188
        %p548 = pneg %p185
        %s549 = sand.u32 %s33, 1
        %s550 = scalar_lea.sflag [#allocation3], %s549
        %s551 = sand.u32 %s203, 1
        %s552 = smul.addr %s551, 8
        %s553 = scalar_lea.vmem [#allocation13], %s552
        %p554 = pneg %p216
        %p555 = pneg %p213
        %p556 = pneg %p237
        %p557 = pneg %p234
        %p558 = pneg %p258
        %p559 = pneg %p255
        %p560 = pneg %p286
        %p561 = pneg %p283
        %s562 = sand.u32 %s273, 1
        %s563 = scalar_lea.sflag [#allocation4], %s562
        %s564 = sand.u32 %s273, 1
        %s565 = smul.addr %s564, 8
        %s566 = scalar_lea.vmem [#allocation16], %s565
        %v567 = vld [vmem:[%s462] sm:$0xff]
        %v568 = vld [vmem:[%s462 + $0x8] sm:$0xff]
        %v569 = vld [vmem:[%s462 + $0x10] sm:$0xff]
        %v570 = vld [vmem:[%s462 + $0x18] sm:$0xff]
        %v571 = vld [vmem:[%s471] sm:$0xff]
        %v572 = vld [vmem:[%s471 + $0x8] sm:$0xff]
        %v573 = vld [vmem:[%s471 + $0x10] sm:$0xff]
        %v574 = vld [vmem:[%s471 + $0x18] sm:$0xff]
        %vm575 = vcmask 64512
        %v577 = vsel %vm575, %v567, 0
        %v580 = vsel %vm575, %v571, 0
        %582 = vmatprep.subr.mxu0 0.0
        %583 = vmatpush1.xpose.msra.mxu0 %v580
        %584 = vmatprep.subr.mxu0 0.0
        %585 = vmatpush1.xpose.msra.mxu0 0.0
        %586 = vmatprep.subr.mxu0 0.0
        %587 = vmatpush1.xpose.msra.mxu0 0.0
        %588 = vmatprep.subr.mxu0 0.0
        %589 = vmatpush1.xpose.msra.mxu0 0.0
        %590 = vmatprep.subr.mxu0 0.0
        %591 = vmatpush1.xpose.msra.mxu0 0.0
        %592 = vmatprep.subr.mxu0 0.0
        %593 = vmatpush1.xpose.msra.mxu0 0.0
        %594 = vmatprep.subr.mxu0 0.0
        %595 = vmatpush1.xpose.msra.mxu0 0.0
        %596 = vmatprep.subr.mxu0 0.0
        %597 = vmatpush1.xpose.msra.mxu0 0.0
        %598 = vmatprep.subr.mxu0 0.0
        %599 = vmatpush1.xpose.msra.mxu0 0.0
        %600 = vmatprep.subr.mxu0 0.0
        %601 = vmatpush1.xpose.msra.mxu0 0.0
        %602 = vmatprep.subr.mxu0 0.0
        %603 = vmatpush1.xpose.msra.mxu0 0.0
        %604 = vmatprep.subr.mxu0 0.0
        %605 = vmatpush1.xpose.msra.mxu0 0.0
        %606 = vmatprep.subr.mxu0 0.0
        %607 = vmatpush1.xpose.msra.mxu0 0.0
        %608 = vmatprep.subr.mxu0 0.0
        %609 = vmatpush1.xpose.msra.mxu0 0.0
        %610 = vmatprep.subr.mxu0 0.0
        %611 = vmatpush1.xpose.msra.mxu0 0.0
        %612 = vmatprep.subr.mxu0 0.0
        %613 = vmatpush1.xpose.msra.mxu0 0.0
        %614 = vmatprep.subr.mxu0 0.0
        %615 = vmatpush1.xpose.msra.mxu0 0.0
        %616 = vmatprep.subr.mxu0 0.0
        %617 = vmatpush1.xpose.msra.mxu0 0.0
        %618 = vmatprep.subr.mxu0 0.0
        %619 = vmatpush1.xpose.msra.mxu0 0.0
        %620 = vmatprep.subr.mxu0 0.0
        %621 = vmatpush1.xpose.msra.mxu0 0.0
        %622 = vmatprep.subr.mxu0 0.0
        %623 = vmatpush1.xpose.msra.mxu0 0.0
        %624 = vmatprep.subr.mxu0 0.0
        %625 = vmatpush1.xpose.msra.mxu0 0.0
        %626 = vmatprep.subr.mxu0 0.0
        %627 = vmatpush1.xpose.msra.mxu0 0.0
        %628 = vmatprep.subr.mxu0 0.0
        %629 = vmatpush1.xpose.msra.mxu0 0.0
        %630 = vmatprep.subr.mxu0 0.0
        %631 = vmatpush1.xpose.msra.mxu0 0.0
        %632 = vmatprep.subr.mxu0 0.0
        %633 = vmatpush1.xpose.msra.mxu0 0.0
        %634 = vmatprep.subr.mxu0 0.0
        %635 = vmatpush1.xpose.msra.mxu0 0.0
        %636 = vmatprep.subr.mxu0 0.0
        %637 = vmatpush1.xpose.msra.mxu0 0.0
        %638 = vmatprep.subr.mxu0 0.0
        %639 = vmatpush1.xpose.msra.mxu0 0.0
        %640 = vmatprep.subr.mxu0 0.0
        %641 = vmatpush1.xpose.msra.mxu0 0.0
        %642 = vmatprep.subr.mxu0 0.0
        %643 = vmatpush1.xpose.msra.mxu0 0.0
        %644 = vmatprep.subr.mxu0 0.0
        %645 = vmatpush1.xpose.msra.mxu0 0.0
        %646 = vmatprep.mubr.f32.mxu0 0.0
        %647 = vmatmul.mubr.f32.gmra.mrb[0].mxu0 %v577
        %v648 = vpop.f32.mrb[0].mxu0
        %v649 = vadd.f32 0.0, %v648
        %v650 = vpop.f32.mrb[0].mxu0
        %651 = vdwg.mxu0
        %v653 = vsel %vm575, %v568, 0
        %v656 = vsel %vm575, %v572, 0
        %658 = vmatprep.subr.mxu0 0.0
        %659 = vmatpush1.xpose.msra.mxu0 %v656
        %660 = vmatprep.subr.mxu0 0.0
        %661 = vmatpush1.xpose.msra.mxu0 0.0
        %662 = vmatprep.subr.mxu0 0.0
        %663 = vmatpush1.xpose.msra.mxu0 0.0
        %664 = vmatprep.subr.mxu0 0.0
        %665 = vmatpush1.xpose.msra.mxu0 0.0
        %666 = vmatprep.subr.mxu0 0.0
        %667 = vmatpush1.xpose.msra.mxu0 0.0
        %668 = vmatprep.subr.mxu0 0.0
        %669 = vmatpush1.xpose.msra.mxu0 0.0
        %670 = vmatprep.subr.mxu0 0.0
        %671 = vmatpush1.xpose.msra.mxu0 0.0
        %672 = vmatprep.subr.mxu0 0.0
        %673 = vmatpush1.xpose.msra.mxu0 0.0
        %674 = vmatprep.subr.mxu0 0.0
        %675 = vmatpush1.xpose.msra.mxu0 0.0
        %676 = vmatprep.subr.mxu0 0.0
        %677 = vmatpush1.xpose.msra.mxu0 0.0
        %678 = vmatprep.subr.mxu0 0.0
        %679 = vmatpush1.xpose.msra.mxu0 0.0
        %680 = vmatprep.subr.mxu0 0.0
        %681 = vmatpush1.xpose.msra.mxu0 0.0
        %682 = vmatprep.subr.mxu0 0.0
        %683 = vmatpush1.xpose.msra.mxu0 0.0
        %684 = vmatprep.subr.mxu0 0.0
        %685 = vmatpush1.xpose.msra.mxu0 0.0
        %686 = vmatprep.subr.mxu0 0.0
        %687 = vmatpush1.xpose.msra.mxu0 0.0
        %688 = vmatprep.subr.mxu0 0.0
        %689 = vmatpush1.xpose.msra.mxu0 0.0
        %690 = vmatprep.subr.mxu0 0.0
        %691 = vmatpush1.xpose.msra.mxu0 0.0
        %692 = vmatprep.subr.mxu0 0.0
        %693 = vmatpush1.xpose.msra.mxu0 0.0
        %694 = vmatprep.subr.mxu0 0.0
        %695 = vmatpush1.xpose.msra.mxu0 0.0
        %696 = vmatprep.subr.mxu0 0.0
        %697 = vmatpush1.xpose.msra.mxu0 0.0
        %698 = vmatprep.subr.mxu0 0.0
        %699 = vmatpush1.xpose.msra.mxu0 0.0
        %700 = vmatprep.subr.mxu0 0.0
        %701 = vmatpush1.xpose.msra.mxu0 0.0
        %702 = vmatprep.subr.mxu0 0.0
        %703 = vmatpush1.xpose.msra.mxu0 0.0
        %704 = vmatprep.subr.mxu0 0.0
        %705 = vmatpush1.xpose.msra.mxu0 0.0
        %706 = vmatprep.subr.mxu0 0.0
        %707 = vmatpush1.xpose.msra.mxu0 0.0
        %708 = vmatprep.subr.mxu0 0.0
        %709 = vmatpush1.xpose.msra.mxu0 0.0
        %710 = vmatprep.subr.mxu0 0.0
        %711 = vmatpush1.xpose.msra.mxu0 0.0
        %712 = vmatprep.subr.mxu0 0.0
        %713 = vmatpush1.xpose.msra.mxu0 0.0
        %714 = vmatprep.subr.mxu0 0.0
        %715 = vmatpush1.xpose.msra.mxu0 0.0
        %716 = vmatprep.subr.mxu0 0.0
        %717 = vmatpush1.xpose.msra.mxu0 0.0
        %718 = vmatprep.subr.mxu0 0.0
        %719 = vmatpush1.xpose.msra.mxu0 0.0
        %720 = vmatprep.subr.mxu0 0.0
        %721 = vmatpush1.xpose.msra.mxu0 0.0
        %722 = vmatprep.mubr.f32.mxu0 0.0
        %723 = vmatmul.mubr.f32.gmra.mrb[0].mxu0 %v653
        %v724 = vpop.f32.mrb[0].mxu0
        %v725 = vadd.f32 0.0, %v724
        %v726 = vpop.f32.mrb[0].mxu0
        %727 = vdwg.mxu0
        %v729 = vsel %vm575, %v569, 0
        %v732 = vsel %vm575, %v573, 0
        %734 = vmatprep.subr.mxu0 0.0
        %735 = vmatpush1.xpose.msra.mxu0 %v732
        %736 = vmatprep.subr.mxu0 0.0
        %737 = vmatpush1.xpose.msra.mxu0 0.0
        %738 = vmatprep.subr.mxu0 0.0
        %739 = vmatpush1.xpose.msra.mxu0 0.0
        %740 = vmatprep.subr.mxu0 0.0
        %741 = vmatpush1.xpose.msra.mxu0 0.0
        %742 = vmatprep.subr.mxu0 0.0
        %743 = vmatpush1.xpose.msra.mxu0 0.0
        %744 = vmatprep.subr.mxu0 0.0
        %745 = vmatpush1.xpose.msra.mxu0 0.0
        %746 = vmatprep.subr.mxu0 0.0
        %747 = vmatpush1.xpose.msra.mxu0 0.0
        %748 = vmatprep.subr.mxu0 0.0
        %749 = vmatpush1.xpose.msra.mxu0 0.0
        %750 = vmatprep.subr.mxu0 0.0
        %751 = vmatpush1.xpose.msra.mxu0 0.0
        %752 = vmatprep.subr.mxu0 0.0
        %753 = vmatpush1.xpose.msra.mxu0 0.0
        %754 = vmatprep.subr.mxu0 0.0
        %755 = vmatpush1.xpose.msra.mxu0 0.0
        %756 = vmatprep.subr.mxu0 0.0
        %757 = vmatpush1.xpose.msra.mxu0 0.0
        %758 = vmatprep.subr.mxu0 0.0
        %759 = vmatpush1.xpose.msra.mxu0 0.0
        %760 = vmatprep.subr.mxu0 0.0
        %761 = vmatpush1.xpose.msra.mxu0 0.0
        %762 = vmatprep.subr.mxu0 0.0
        %763 = vmatpush1.xpose.msra.mxu0 0.0
        %764 = vmatprep.subr.mxu0 0.0
        %765 = vmatpush1.xpose.msra.mxu0 0.0
        %766 = vmatprep.subr.mxu0 0.0
        %767 = vmatpush1.xpose.msra.mxu0 0.0
        %768 = vmatprep.subr.mxu0 0.0
        %769 = vmatpush1.xpose.msra.mxu0 0.0
        %770 = vmatprep.subr.mxu0 0.0
        %771 = vmatpush1.xpose.msra.mxu0 0.0
        %772 = vmatprep.subr.mxu0 0.0
        %773 = vmatpush1.xpose.msra.mxu0 0.0
        %774 = vmatprep.subr.mxu0 0.0
        %775 = vmatpush1.xpose.msra.mxu0 0.0
        %776 = vmatprep.subr.mxu0 0.0
        %777 = vmatpush1.xpose.msra.mxu0 0.0
        %778 = vmatprep.subr.mxu0 0.0
        %779 = vmatpush1.xpose.msra.mxu0 0.0
        %780 = vmatprep.subr.mxu0 0.0
        %781 = vmatpush1.xpose.msra.mxu0 0.0
        %782 = vmatprep.subr.mxu0 0.0
        %783 = vmatpush1.xpose.msra.mxu0 0.0
        %784 = vmatprep.subr.mxu0 0.0
        %785 = vmatpush1.xpose.msra.mxu0 0.0
        %786 = vmatprep.subr.mxu0 0.0
        %787 = vmatpush1.xpose.msra.mxu0 0.0
        %788 = vmatprep.subr.mxu0 0.0
        %789 = vmatpush1.xpose.msra.mxu0 0.0
        %790 = vmatprep.subr.mxu0 0.0
        %791 = vmatpush1.xpose.msra.mxu0 0.0
        %792 = vmatprep.subr.mxu0 0.0
        %793 = vmatpush1.xpose.msra.mxu0 0.0
        %794 = vmatprep.subr.mxu0 0.0
        %795 = vmatpush1.xpose.msra.mxu0 0.0
        %796 = vmatprep.subr.mxu0 0.0
        %797 = vmatpush1.xpose.msra.mxu0 0.0
        %798 = vmatprep.mubr.f32.mxu0 0.0
        %799 = vmatmul.mubr.f32.gmra.mrb[0].mxu0 %v729
        %v800 = vpop.f32.mrb[0].mxu0
        %v801 = vadd.f32 0.0, %v800
        %v802 = vpop.f32.mrb[0].mxu0
        %803 = vdwg.mxu0
        %v805 = vsel %vm575, %v570, 0
        %v808 = vsel %vm575, %v574, 0
        %810 = vmatprep.subr.mxu0 0.0
        %811 = vmatpush1.xpose.msra.mxu0 %v808
        %812 = vmatprep.subr.mxu0 0.0
        %813 = vmatpush1.xpose.msra.mxu0 0.0
        %814 = vmatprep.subr.mxu0 0.0
        %815 = vmatpush1.xpose.msra.mxu0 0.0
        %816 = vmatprep.subr.mxu0 0.0
        %817 = vmatpush1.xpose.msra.mxu0 0.0
        %818 = vmatprep.subr.mxu0 0.0
        %819 = vmatpush1.xpose.msra.mxu0 0.0
        %820 = vmatprep.subr.mxu0 0.0
        %821 = vmatpush1.xpose.msra.mxu0 0.0
        %822 = vmatprep.subr.mxu0 0.0
        %823 = vmatpush1.xpose.msra.mxu0 0.0
        %824 = vmatprep.subr.mxu0 0.0
        %825 = vmatpush1.xpose.msra.mxu0 0.0
        %826 = vmatprep.subr.mxu0 0.0
        %827 = vmatpush1.xpose.msra.mxu0 0.0
        %828 = vmatprep.subr.mxu0 0.0
        %829 = vmatpush1.xpose.msra.mxu0 0.0
        %830 = vmatprep.subr.mxu0 0.0
        %831 = vmatpush1.xpose.msra.mxu0 0.0
        %832 = vmatprep.subr.mxu0 0.0
        %833 = vmatpush1.xpose.msra.mxu0 0.0
        %834 = vmatprep.subr.mxu0 0.0
        %835 = vmatpush1.xpose.msra.mxu0 0.0
        %836 = vmatprep.subr.mxu0 0.0
        %837 = vmatpush1.xpose.msra.mxu0 0.0
        %838 = vmatprep.subr.mxu0 0.0
        %839 = vmatpush1.xpose.msra.mxu0 0.0
        %840 = vmatprep.subr.mxu0 0.0
        %841 = vmatpush1.xpose.msra.mxu0 0.0
        %842 = vmatprep.subr.mxu0 0.0
        %843 = vmatpush1.xpose.msra.mxu0 0.0
        %844 = vmatprep.subr.mxu0 0.0
        %845 = vmatpush1.xpose.msra.mxu0 0.0
        %846 = vmatprep.subr.mxu0 0.0
        %847 = vmatpush1.xpose.msra.mxu0 0.0
        %848 = vmatprep.subr.mxu0 0.0
        %849 = vmatpush1.xpose.msra.mxu0 0.0
        %850 = vmatprep.subr.mxu0 0.0
        %851 = vmatpush1.xpose.msra.mxu0 0.0
        %852 = vmatprep.subr.mxu0 0.0
        %853 = vmatpush1.xpose.msra.mxu0 0.0
        %854 = vmatprep.subr.mxu0 0.0
        %855 = vmatpush1.xpose.msra.mxu0 0.0
        %856 = vmatprep.subr.mxu0 0.0
        %857 = vmatpush1.xpose.msra.mxu0 0.0
        %858 = vmatprep.subr.mxu0 0.0
        %859 = vmatpush1.xpose.msra.mxu0 0.0
        %860 = vmatprep.subr.mxu0 0.0
        %861 = vmatpush1.xpose.msra.mxu0 0.0
        %862 = vmatprep.subr.mxu0 0.0
        %863 = vmatpush1.xpose.msra.mxu0 0.0
        %864 = vmatprep.subr.mxu0 0.0
        %865 = vmatpush1.xpose.msra.mxu0 0.0
        %866 = vmatprep.subr.mxu0 0.0
        %867 = vmatpush1.xpose.msra.mxu0 0.0
        %868 = vmatprep.subr.mxu0 0.0
        %869 = vmatpush1.xpose.msra.mxu0 0.0
        %870 = vmatprep.subr.mxu0 0.0
        %871 = vmatpush1.xpose.msra.mxu0 0.0
        %872 = vmatprep.subr.mxu0 0.0
        %873 = vmatpush1.xpose.msra.mxu0 0.0
        %874 = vmatprep.mubr.f32.mxu0 0.0
        %875 = vmatmul.mubr.f32.gmra.mrb[0].mxu0 %v805
        %v876 = vpop.f32.mrb[0].mxu0
        %v877 = vadd.f32 0.0, %v876
        %v878 = vpop.f32.mrb[0].mxu0
        %879 = vdwg.mxu0
        %v880 = vmul.f32 %v649, 0.35355338
        %v881 = vmul.f32 %v725, 0.35355338
        %v882 = vmul.f32 %v801, 0.35355338
        %v883 = vmul.f32 %v877, 0.35355338
        %v884 = vld [vmem:[%s488] sm:$0x1]
        %v886 = vlaneseq
        %v887 = vshrl.u32 %v886, 7
        %v888 = vsub.s32 0, %v887
        %v889 = vrot.slane %v884, %v888
        %v891 = vadd.f32 %v880, %v889
        %v892 = vadd.f32 %v881, %v889
        %v893 = vadd.f32 %v882, %v889
        %v894 = vadd.f32 %v883, %v889
        %v895 = vsel %vm575, %v891, -inf
        %896 = vmax.xlane.f32.xlu0 %v895
        %v897 = vpop.xlane.xlu0 %896
        %v898 = vsel %vm575, %v892, -inf
        %899 = vmax.xlane.f32.xlu0 %v898
        %v900 = vpop.xlane.xlu0 %899
        %v901 = vsel %vm575, %v893, -inf
        %902 = vmax.xlane.f32.xlu0 %v901
        %v903 = vpop.xlane.xlu0 %902
        %v904 = vsel %vm575, %v894, -inf
        %905 = vmax.xlane.f32.xlu0 %v904
        %v906 = vpop.xlane.xlu0 %905
        %v907 = vsub.f32 %v891, %v897
        %v908 = vsub.f32 %v892, %v900
        %v909 = vsub.f32 %v893, %v903
        %v910 = vsub.f32 %v894, %v906
        %v911 = vmul.f32 %v907, 1.442695
        %v912 = vpow.pop %v911
        %v913 = vmul.f32 %v908, 1.442695
        %v914 = vpow.pop %v913
        %v915 = vmul.f32 %v909, 1.442695
        %v916 = vpow.pop %v915
        %v917 = vmul.f32 %v910, 1.442695
        %v918 = vpow.pop %v917
        %v919 = vsel %vm575, %v912, 0.0
        %920 = vadd.xlane.f32.xlu0 %v919
        %v921 = vpop.xlane.xlu0 %920
        %v922 = vsel %vm575, %v914, 0.0
        %923 = vadd.xlane.f32.xlu0 %v922
        %v924 = vpop.xlane.xlu0 %923
        %v925 = vsel %vm575, %v916, 0.0
        %926 = vadd.xlane.f32.xlu0 %v925
        %v927 = vpop.xlane.xlu0 %926
        %v928 = vsel %vm575, %v918, 0.0
        %929 = vadd.xlane.f32.xlu0 %v928
        %v930 = vpop.xlane.xlu0 %929
        %v931 = vrcp.pop %v921
        %v932 = vrcp.pop %v924
        %v933 = vrcp.pop %v927
        %v934 = vrcp.pop %v930
        %v935 = vmul.f32 %v921, %v931
        %v936 = vmul.f32 %v924, %v932
        %v937 = vmul.f32 %v927, %v933
        %v938 = vmul.f32 %v930, %v934
        %v939 = vsub.f32 2.0, %v935
        %v940 = vsub.f32 2.0, %v936
        %v941 = vsub.f32 2.0, %v937
        %v942 = vsub.f32 2.0, %v938
        %v943 = vmul.f32 %v931, %v939
        %v944 = vmul.f32 %v932, %v940
        %v945 = vmul.f32 %v933, %v941
        %v946 = vmul.f32 %v934, %v942
        %v947 = vmul.f32 %v912, %v943
        %v948 = vmul.f32 %v914, %v944
        %v949 = vmul.f32 %v916, %v945
        %v950 = vmul.f32 %v918, %v946
        %v951 = vld [vmem:[%s480] sm:$0xff]
        %v952 = vld [vmem:[%s480 + $0x8] sm:$0xff]
        %v953 = vld [vmem:[%s480 + $0x10] sm:$0xff]
        %v954 = vld [vmem:[%s480 + $0x18] sm:$0xff]
        %v956 = vsel %vm575, %v947, 0
        %958 = vmatprep.subr.mxu0 0.0
        %959 = vmatpush1.msra.mxu0 %v951
        %960 = vmatprep.subr.mxu0 0.0
        %961 = vmatpush1.msra.mxu0 0.0
        %962 = vmatprep.subr.mxu0 0.0
        %963 = vmatpush1.msra.mxu0 0.0
        %964 = vmatprep.subr.mxu0 0.0
        %965 = vmatpush1.msra.mxu0 0.0
        %966 = vmatprep.subr.mxu0 0.0
        %967 = vmatpush1.msra.mxu0 0.0
        %968 = vmatprep.subr.mxu0 0.0
        %969 = vmatpush1.msra.mxu0 0.0
        %970 = vmatprep.subr.mxu0 0.0
        %971 = vmatpush1.msra.mxu0 0.0
        %972 = vmatprep.subr.mxu0 0.0
        %973 = vmatpush1.msra.mxu0 0.0
        %974 = vmatprep.subr.mxu0 0.0
        %975 = vmatpush1.msra.mxu0 0.0
        %976 = vmatprep.subr.mxu0 0.0
        %977 = vmatpush1.msra.mxu0 0.0
        %978 = vmatprep.subr.mxu0 0.0
        %979 = vmatpush1.msra.mxu0 0.0
        %980 = vmatprep.subr.mxu0 0.0
        %981 = vmatpush1.msra.mxu0 0.0
        %982 = vmatprep.subr.mxu0 0.0
        %983 = vmatpush1.msra.mxu0 0.0
        %984 = vmatprep.subr.mxu0 0.0
        %985 = vmatpush1.msra.mxu0 0.0
        %986 = vmatprep.subr.mxu0 0.0
        %987 = vmatpush1.msra.mxu0 0.0
        %988 = vmatprep.subr.mxu0 0.0
        %989 = vmatpush1.msra.mxu0 0.0
        %990 = vmatprep.subr.mxu0 0.0
        %991 = vmatpush1.msra.mxu0 0.0
        %992 = vmatprep.subr.mxu0 0.0
        %993 = vmatpush1.msra.mxu0 0.0
        %994 = vmatprep.subr.mxu0 0.0
        %995 = vmatpush1.msra.mxu0 0.0
        %996 = vmatprep.subr.mxu0 0.0
        %997 = vmatpush1.msra.mxu0 0.0
        %998 = vmatprep.subr.mxu0 0.0
        %999 = vmatpush1.msra.mxu0 0.0
        %1000 = vmatprep.subr.mxu0 0.0
        %1001 = vmatpush1.msra.mxu0 0.0
        %1002 = vmatprep.subr.mxu0 0.0
        %1003 = vmatpush1.msra.mxu0 0.0
        %1004 = vmatprep.subr.mxu0 0.0
        %1005 = vmatpush1.msra.mxu0 0.0
        %1006 = vmatprep.subr.mxu0 0.0
        %1007 = vmatpush1.msra.mxu0 0.0
        %1008 = vmatprep.subr.mxu0 0.0
        %1009 = vmatpush1.msra.mxu0 0.0
        %1010 = vmatprep.subr.mxu0 0.0
        %1011 = vmatpush1.msra.mxu0 0.0
        %1012 = vmatprep.subr.mxu0 0.0
        %1013 = vmatpush1.msra.mxu0 0.0
        %1014 = vmatprep.subr.mxu0 0.0
        %1015 = vmatpush1.msra.mxu0 0.0
        %1016 = vmatprep.subr.mxu0 0.0
        %1017 = vmatpush1.msra.mxu0 0.0
        %1018 = vmatprep.subr.mxu0 0.0
        %1019 = vmatpush1.msra.mxu0 0.0
        %1020 = vmatprep.subr.mxu0 0.0
        %1021 = vmatpush1.msra.mxu0 0.0
        %1022 = vmatprep.mubr.f32.mxu0 0.0
        %1023 = vmatmul.mubr.f32.gmra.mrb[0].mxu0 %v956
        %v1024 = vpop.f32.mrb[0].mxu0
        %v1025 = vadd.f32 0.0, %v1024
        %v1026 = vpop.f32.mrb[0].mxu0
        %1027 = vdwg.mxu0
        %v1029 = vsel %vm575, %v948, 0
        %1031 = vmatprep.subr.mxu0 0.0
        %1032 = vmatpush1.msra.mxu0 %v952
        %1033 = vmatprep.subr.mxu0 0.0
        %1034 = vmatpush1.msra.mxu0 0.0
        %1035 = vmatprep.subr.mxu0 0.0
        %1036 = vmatpush1.msra.mxu0 0.0
        %1037 = vmatprep.subr.mxu0 0.0
        %1038 = vmatpush1.msra.mxu0 0.0
        %1039 = vmatprep.subr.mxu0 0.0
        %1040 = vmatpush1.msra.mxu0 0.0
        %1041 = vmatprep.subr.mxu0 0.0
        %1042 = vmatpush1.msra.mxu0 0.0
        %1043 = vmatprep.subr.mxu0 0.0
        %1044 = vmatpush1.msra.mxu0 0.0
        %1045 = vmatprep.subr.mxu0 0.0
        %1046 = vmatpush1.msra.mxu0 0.0
        %1047 = vmatprep.subr.mxu0 0.0
        %1048 = vmatpush1.msra.mxu0 0.0
        %1049 = vmatprep.subr.mxu0 0.0
        %1050 = vmatpush1.msra.mxu0 0.0
        %1051 = vmatprep.subr.mxu0 0.0
        %1052 = vmatpush1.msra.mxu0 0.0
        %1053 = vmatprep.subr.mxu0 0.0
        %1054 = vmatpush1.msra.mxu0 0.0
        %1055 = vmatprep.subr.mxu0 0.0
        %1056 = vmatpush1.msra.mxu0 0.0
        %1057 = vmatprep.subr.mxu0 0.0
        %1058 = vmatpush1.msra.mxu0 0.0
        %1059 = vmatprep.subr.mxu0 0.0
        %1060 = vmatpush1.msra.mxu0 0.0
        %1061 = vmatprep.subr.mxu0 0.0
        %1062 = vmatpush1.msra.mxu0 0.0
        %1063 = vmatprep.subr.mxu0 0.0
        %1064 = vmatpush1.msra.mxu0 0.0
        %1065 = vmatprep.subr.mxu0 0.0
        %1066 = vmatpush1.msra.mxu0 0.0
        %1067 = vmatprep.subr.mxu0 0.0
        %1068 = vmatpush1.msra.mxu0 0.0
        %1069 = vmatprep.subr.mxu0 0.0
        %1070 = vmatpush1.msra.mxu0 0.0
        %1071 = vmatprep.subr.mxu0 0.0
        %1072 = vmatpush1.msra.mxu0 0.0
        %1073 = vmatprep.subr.mxu0 0.0
        %1074 = vmatpush1.msra.mxu0 0.0
        %1075 = vmatprep.subr.mxu0 0.0
        %1076 = vmatpush1.msra.mxu0 0.0
        %1077 = vmatprep.subr.mxu0 0.0
        %1078 = vmatpush1.msra.mxu0 0.0
        %1079 = vmatprep.subr.mxu0 0.0
        %1080 = vmatpush1.msra.mxu0 0.0
        %1081 = vmatprep.subr.mxu0 0.0
        %1082 = vmatpush1.msra.mxu0 0.0
        %1083 = vmatprep.subr.mxu0 0.0
        %1084 = vmatpush1.msra.mxu0 0.0
        %1085 = vmatprep.subr.mxu0 0.0
        %1086 = vmatpush1.msra.mxu0 0.0
        %1087 = vmatprep.subr.mxu0 0.0
        %1088 = vmatpush1.msra.mxu0 0.0
        %1089 = vmatprep.subr.mxu0 0.0
        %1090 = vmatpush1.msra.mxu0 0.0
        %1091 = vmatprep.subr.mxu0 0.0
        %1092 = vmatpush1.msra.mxu0 0.0
        %1093 = vmatprep.subr.mxu0 0.0
        %1094 = vmatpush1.msra.mxu0 0.0
        %1095 = vmatprep.mubr.f32.mxu0 0.0
        %1096 = vmatmul.mubr.f32.gmra.mrb[0].mxu0 %v1029
        %v1097 = vpop.f32.mrb[0].mxu0
        %v1098 = vadd.f32 0.0, %v1097
        %v1099 = vpop.f32.mrb[0].mxu0
        %1100 = vdwg.mxu0
        %v1102 = vsel %vm575, %v949, 0
        %1104 = vmatprep.subr.mxu0 0.0
        %1105 = vmatpush1.msra.mxu0 %v953
        %1106 = vmatprep.subr.mxu0 0.0
        %1107 = vmatpush1.msra.mxu0 0.0
        %1108 = vmatprep.subr.mxu0 0.0
        %1109 = vmatpush1.msra.mxu0 0.0
        %1110 = vmatprep.subr.mxu0 0.0
        %1111 = vmatpush1.msra.mxu0 0.0
        %1112 = vmatprep.subr.mxu0 0.0
        %1113 = vmatpush1.msra.mxu0 0.0
        %1114 = vmatprep.subr.mxu0 0.0
        %1115 = vmatpush1.msra.mxu0 0.0
        %1116 = vmatprep.subr.mxu0 0.0
        %1117 = vmatpush1.msra.mxu0 0.0
        %1118 = vmatprep.subr.mxu0 0.0
        %1119 = vmatpush1.msra.mxu0 0.0
        %1120 = vmatprep.subr.mxu0 0.0
        %1121 = vmatpush1.msra.mxu0 0.0
        %1122 = vmatprep.subr.mxu0 0.0
        %1123 = vmatpush1.msra.mxu0 0.0
        %1124 = vmatprep.subr.mxu0 0.0
        %1125 = vmatpush1.msra.mxu0 0.0
        %1126 = vmatprep.subr.mxu0 0.0
        %1127 = vmatpush1.msra.mxu0 0.0
        %1128 = vmatprep.subr.mxu0 0.0
        %1129 = vmatpush1.msra.mxu0 0.0
        %1130 = vmatprep.subr.mxu0 0.0
        %1131 = vmatpush1.msra.mxu0 0.0
        %1132 = vmatprep.subr.mxu0 0.0
        %1133 = vmatpush1.msra.mxu0 0.0
        %1134 = vmatprep.subr.mxu0 0.0
        %1135 = vmatpush1.msra.mxu0 0.0
        %1136 = vmatprep.subr.mxu0 0.0
        %1137 = vmatpush1.msra.mxu0 0.0
        %1138 = vmatprep.subr.mxu0 0.0
        %1139 = vmatpush1.msra.mxu0 0.0
        %1140 = vmatprep.subr.mxu0 0.0
        %1141 = vmatpush1.msra.mxu0 0.0
        %1142 = vmatprep.subr.mxu0 0.0
        %1143 = vmatpush1.msra.mxu0 0.0
        %1144 = vmatprep.subr.mxu0 0.0
        %1145 = vmatpush1.msra.mxu0 0.0
        %1146 = vmatprep.subr.mxu0 0.0
        %1147 = vmatpush1.msra.mxu0 0.0
        %1148 = vmatprep.subr.mxu0 0.0
        %1149 = vmatpush1.msra.mxu0 0.0
        %1150 = vmatprep.subr.mxu0 0.0
        %1151 = vmatpush1.msra.mxu0 0.0
        %1152 = vmatprep.subr.mxu0 0.0
        %1153 = vmatpush1.msra.mxu0 0.0
        %1154 = vmatprep.subr.mxu0 0.0
        %1155 = vmatpush1.msra.mxu0 0.0
        %1156 = vmatprep.subr.mxu0 0.0
        %1157 = vmatpush1.msra.mxu0 0.0
        %1158 = vmatprep.subr.mxu0 0.0
        %1159 = vmatpush1.msra.mxu0 0.0
        %1160 = vmatprep.subr.mxu0 0.0
        %1161 = vmatpush1.msra.mxu0 0.0
        %1162 = vmatprep.subr.mxu0 0.0
        %1163 = vmatpush1.msra.mxu0 0.0
        %1164 = vmatprep.subr.mxu0 0.0
        %1165 = vmatpush1.msra.mxu0 0.0
        %1166 = vmatprep.subr.mxu0 0.0
        %1167 = vmatpush1.msra.mxu0 0.0
        %1168 = vmatprep.mubr.f32.mxu0 0.0
        %1169 = vmatmul.mubr.f32.gmra.mrb[0].mxu0 %v1102
        %v1170 = vpop.f32.mrb[0].mxu0
        %v1171 = vadd.f32 0.0, %v1170
        %v1172 = vpop.f32.mrb[0].mxu0
        %1173 = vdwg.mxu0
        %v1175 = vsel %vm575, %v950, 0
        %1177 = vmatprep.subr.mxu0 0.0
        %1178 = vmatpush1.msra.mxu0 %v954
        %1179 = vmatprep.subr.mxu0 0.0
        %1180 = vmatpush1.msra.mxu0 0.0
        %1181 = vmatprep.subr.mxu0 0.0
        %1182 = vmatpush1.msra.mxu0 0.0
        %1183 = vmatprep.subr.mxu0 0.0
        %1184 = vmatpush1.msra.mxu0 0.0
        %1185 = vmatprep.subr.mxu0 0.0
        %1186 = vmatpush1.msra.mxu0 0.0
        %1187 = vmatprep.subr.mxu0 0.0
        %1188 = vmatpush1.msra.mxu0 0.0
        %1189 = vmatprep.subr.mxu0 0.0
        %1190 = vmatpush1.msra.mxu0 0.0
        %1191 = vmatprep.subr.mxu0 0.0
        %1192 = vmatpush1.msra.mxu0 0.0
        %1193 = vmatprep.subr.mxu0 0.0
        %1194 = vmatpush1.msra.mxu0 0.0
        %1195 = vmatprep.subr.mxu0 0.0
        %1196 = vmatpush1.msra.mxu0 0.0
        %1197 = vmatprep.subr.mxu0 0.0
        %1198 = vmatpush1.msra.mxu0 0.0
        %1199 = vmatprep.subr.mxu0 0.0
        %1200 = vmatpush1.msra.mxu0 0.0
        %1201 = vmatprep.subr.mxu0 0.0
        %1202 = vmatpush1.msra.mxu0 0.0
        %1203 = vmatprep.subr.mxu0 0.0
        %1204 = vmatpush1.msra.mxu0 0.0
        %1205 = vmatprep.subr.mxu0 0.0
        %1206 = vmatpush1.msra.mxu0 0.0
        %1207 = vmatprep.subr.mxu0 0.0
        %1208 = vmatpush1.msra.mxu0 0.0
        %1209 = vmatprep.subr.mxu0 0.0
        %1210 = vmatpush1.msra.mxu0 0.0
        %1211 = vmatprep.subr.mxu0 0.0
        %1212 = vmatpush1.msra.mxu0 0.0
        %1213 = vmatprep.subr.mxu0 0.0
        %1214 = vmatpush1.msra.mxu0 0.0
        %1215 = vmatprep.subr.mxu0 0.0
        %1216 = vmatpush1.msra.mxu0 0.0
        %1217 = vmatprep.subr.mxu0 0.0
        %1218 = vmatpush1.msra.mxu0 0.0
        %1219 = vmatprep.subr.mxu0 0.0
        %1220 = vmatpush1.msra.mxu0 0.0
        %1221 = vmatprep.subr.mxu0 0.0
        %1222 = vmatpush1.msra.mxu0 0.0
        %1223 = vmatprep.subr.mxu0 0.0
        %1224 = vmatpush1.msra.mxu0 0.0
        %1225 = vmatprep.subr.mxu0 0.0
        %1226 = vmatpush1.msra.mxu0 0.0
        %1227 = vmatprep.subr.mxu0 0.0
        %1228 = vmatpush1.msra.mxu0 0.0
        %1229 = vmatprep.subr.mxu0 0.0
        %1230 = vmatpush1.msra.mxu0 0.0
        %1231 = vmatprep.subr.mxu0 0.0
        %1232 = vmatpush1.msra.mxu0 0.0
        %1233 = vmatprep.subr.mxu0 0.0
        %1234 = vmatpush1.msra.mxu0 0.0
        %1235 = vmatprep.subr.mxu0 0.0
        %1236 = vmatpush1.msra.mxu0 0.0
        %1237 = vmatprep.subr.mxu0 0.0
        %1238 = vmatpush1.msra.mxu0 0.0
        %1239 = vmatprep.subr.mxu0 0.0
        %1240 = vmatpush1.msra.mxu0 0.0
        %1241 = vmatprep.mubr.f32.mxu0 0.0
        %1242 = vmatmul.mubr.f32.gmra.mrb[0].mxu0 %v1175
        %v1243 = vpop.f32.mrb[0].mxu0
        %v1244 = vadd.f32 0.0, %v1243
        %v1245 = vpop.f32.mrb[0].mxu0
        %1246 = vdwg.mxu0
        %v1247 = vld [vmem:[%s505] sm:$0xff]
        %v1248 = vld [vmem:[#allocation11] sm:$0x1]
        %v1250 = vlaneseq
        %v1251 = vshrl.u32 %v1250, 7
        %v1252 = vsub.s32 0, %v1251
        %v1253 = vrot.slane %v1248, %v1252
        %v1255 = vadd.f32 %v1247, %v1253
        %v1256 = vld [vmem:[#allocation10] sm:$0xff]
        %v1257 = vld [vmem:[#allocation10 + $0x8] sm:$0xff]
        %v1258 = vld [vmem:[#allocation10 + $0x10] sm:$0xff]
        %v1259 = vld [vmem:[#allocation10 + $0x18] sm:$0xff]
        %v1261 = vsel %vm575, %v1025, 0
        %1263 = vmatprep.subr.mxu0 0.0
        %1264 = vmatpush1.msra.mxu0 %v1256
        %1265 = vmatprep.subr.mxu0 0.0
        %1266 = vmatpush1.msra.mxu0 0.0
        %1267 = vmatprep.subr.mxu0 0.0
        %1268 = vmatpush1.msra.mxu0 0.0
        %1269 = vmatprep.subr.mxu0 0.0
        %1270 = vmatpush1.msra.mxu0 0.0
        %1271 = vmatprep.subr.mxu0 0.0
        %1272 = vmatpush1.msra.mxu0 0.0
        %1273 = vmatprep.subr.mxu0 0.0
        %1274 = vmatpush1.msra.mxu0 0.0
        %1275 = vmatprep.subr.mxu0 0.0
        %1276 = vmatpush1.msra.mxu0 0.0
        %1277 = vmatprep.subr.mxu0 0.0
        %1278 = vmatpush1.msra.mxu0 0.0
        %1279 = vmatprep.subr.mxu0 0.0
        %1280 = vmatpush1.msra.mxu0 0.0
        %1281 = vmatprep.subr.mxu0 0.0
        %1282 = vmatpush1.msra.mxu0 0.0
        %1283 = vmatprep.subr.mxu0 0.0
        %1284 = vmatpush1.msra.mxu0 0.0
        %1285 = vmatprep.subr.mxu0 0.0
        %1286 = vmatpush1.msra.mxu0 0.0
        %1287 = vmatprep.subr.mxu0 0.0
        %1288 = vmatpush1.msra.mxu0 0.0
        %1289 = vmatprep.subr.mxu0 0.0
        %1290 = vmatpush1.msra.mxu0 0.0
        %1291 = vmatprep.subr.mxu0 0.0
        %1292 = vmatpush1.msra.mxu0 0.0
        %1293 = vmatprep.subr.mxu0 0.0
        %1294 = vmatpush1.msra.mxu0 0.0
        %1295 = vmatprep.subr.mxu0 0.0
        %1296 = vmatpush1.msra.mxu0 0.0
        %1297 = vmatprep.subr.mxu0 0.0
        %1298 = vmatpush1.msra.mxu0 0.0
        %1299 = vmatprep.subr.mxu0 0.0
        %1300 = vmatpush1.msra.mxu0 0.0
        %1301 = vmatprep.subr.mxu0 0.0
        %1302 = vmatpush1.msra.mxu0 0.0
        %1303 = vmatprep.subr.mxu0 0.0
        %1304 = vmatpush1.msra.mxu0 0.0
        %1305 = vmatprep.subr.mxu0 0.0
        %1306 = vmatpush1.msra.mxu0 0.0
        %1307 = vmatprep.subr.mxu0 0.0
        %1308 = vmatpush1.msra.mxu0 0.0
        %1309 = vmatprep.subr.mxu0 0.0
        %1310 = vmatpush1.msra.mxu0 0.0
        %1311 = vmatprep.subr.mxu0 0.0
        %1312 = vmatpush1.msra.mxu0 0.0
        %1313 = vmatprep.subr.mxu0 0.0
        %1314 = vmatpush1.msra.mxu0 0.0
        %1315 = vmatprep.subr.mxu0 0.0
        %1316 = vmatpush1.msra.mxu0 0.0
        %1317 = vmatprep.subr.mxu0 0.0
        %1318 = vmatpush1.msra.mxu0 0.0
        %1319 = vmatprep.subr.mxu0 0.0
        %1320 = vmatpush1.msra.mxu0 0.0
        %1321 = vmatprep.subr.mxu0 0.0
        %1322 = vmatpush1.msra.mxu0 0.0
        %1323 = vmatprep.subr.mxu0 0.0
        %1324 = vmatpush1.msra.mxu0 0.0
        %1325 = vmatprep.subr.mxu0 0.0
        %1326 = vmatpush1.msra.mxu0 0.0
        %1327 = vmatprep.mubr.f32.mxu0 0.0
        %1328 = vmatmul.mubr.f32.gmra.mrb[0].mxu0 %v1261
        %v1329 = vpop.f32.mrb[0].mxu0
        %v1330 = vadd.f32 0.0, %v1329
        %v1331 = vpop.f32.mrb[0].mxu0
        %1332 = vdwg.mxu0
        %v1333 = vadd.f32 %v1255, %v1330
        %v1335 = vsel %vm575, %v1098, 0
        %1337 = vmatprep.subr.mxu0 0.0
        %1338 = vmatpush1.msra.mxu0 %v1257
        %1339 = vmatprep.subr.mxu0 0.0
        %1340 = vmatpush1.msra.mxu0 0.0
        %1341 = vmatprep.subr.mxu0 0.0
        %1342 = vmatpush1.msra.mxu0 0.0
        %1343 = vmatprep.subr.mxu0 0.0
        %1344 = vmatpush1.msra.mxu0 0.0
        %1345 = vmatprep.subr.mxu0 0.0
        %1346 = vmatpush1.msra.mxu0 0.0
        %1347 = vmatprep.subr.mxu0 0.0
        %1348 = vmatpush1.msra.mxu0 0.0
        %1349 = vmatprep.subr.mxu0 0.0
        %1350 = vmatpush1.msra.mxu0 0.0
        %1351 = vmatprep.subr.mxu0 0.0
        %1352 = vmatpush1.msra.mxu0 0.0
        %1353 = vmatprep.subr.mxu0 0.0
        %1354 = vmatpush1.msra.mxu0 0.0
        %1355 = vmatprep.subr.mxu0 0.0
        %1356 = vmatpush1.msra.mxu0 0.0
        %1357 = vmatprep.subr.mxu0 0.0
        %1358 = vmatpush1.msra.mxu0 0.0
        %1359 = vmatprep.subr.mxu0 0.0
        %1360 = vmatpush1.msra.mxu0 0.0
        %1361 = vmatprep.subr.mxu0 0.0
        %1362 = vmatpush1.msra.mxu0 0.0
        %1363 = vmatprep.subr.mxu0 0.0
        %1364 = vmatpush1.msra.mxu0 0.0
        %1365 = vmatprep.subr.mxu0 0.0
        %1366 = vmatpush1.msra.mxu0 0.0
        %1367 = vmatprep.subr.mxu0 0.0
        %1368 = vmatpush1.msra.mxu0 0.0
        %1369 = vmatprep.subr.mxu0 0.0
        %1370 = vmatpush1.msra.mxu0 0.0
        %1371 = vmatprep.subr.mxu0 0.0
        %1372 = vmatpush1.msra.mxu0 0.0
        %1373 = vmatprep.subr.mxu0 0.0
        %1374 = vmatpush1.msra.mxu0 0.0
        %1375 = vmatprep.subr.mxu0 0.0
        %1376 = vmatpush1.msra.mxu0 0.0
        %1377 = vmatprep.subr.mxu0 0.0
        %1378 = vmatpush1.msra.mxu0 0.0
        %1379 = vmatprep.subr.mxu0 0.0
        %1380 = vmatpush1.msra.mxu0 0.0
        %1381 = vmatprep.subr.mxu0 0.0
        %1382 = vmatpush1.msra.mxu0 0.0
        %1383 = vmatprep.subr.mxu0 0.0
        %1384 = vmatpush1.msra.mxu0 0.0
        %1385 = vmatprep.subr.mxu0 0.0
        %1386 = vmatpush1.msra.mxu0 0.0
        %1387 = vmatprep.subr.mxu0 0.0
        %1388 = vmatpush1.msra.mxu0 0.0
        %1389 = vmatprep.subr.mxu0 0.0
        %1390 = vmatpush1.msra.mxu0 0.0
        %1391 = vmatprep.subr.mxu0 0.0
        %1392 = vmatpush1.msra.mxu0 0.0
        %1393 = vmatprep.subr.mxu0 0.0
        %1394 = vmatpush1.msra.mxu0 0.0
        %1395 = vmatprep.subr.mxu0 0.0
        %1396 = vmatpush1.msra.mxu0 0.0
        %1397 = vmatprep.subr.mxu0 0.0
        %1398 = vmatpush1.msra.mxu0 0.0
        %1399 = vmatprep.subr.mxu0 0.0
        %1400 = vmatpush1.msra.mxu0 0.0
        %1401 = vmatprep.mubr.f32.mxu0 0.0
        %1402 = vmatmul.mubr.f32.gmra.mrb[0].mxu0 %v1335
        %v1403 = vpop.f32.mrb[0].mxu0
        %v1404 = vadd.f32 0.0, %v1403
        %v1405 = vpop.f32.mrb[0].mxu0
        %1406 = vdwg.mxu0
        %v1407 = vadd.f32 %v1333, %v1404
        %v1409 = vsel %vm575, %v1171, 0
        %1411 = vmatprep.subr.mxu0 0.0
        %1412 = vmatpush1.msra.mxu0 %v1258
        %1413 = vmatprep.subr.mxu0 0.0
        %1414 = vmatpush1.msra.mxu0 0.0
        %1415 = vmatprep.subr.mxu0 0.0
        %1416 = vmatpush1.msra.mxu0 0.0
        %1417 = vmatprep.subr.mxu0 0.0
        %1418 = vmatpush1.msra.mxu0 0.0
        %1419 = vmatprep.subr.mxu0 0.0
        %1420 = vmatpush1.msra.mxu0 0.0
        %1421 = vmatprep.subr.mxu0 0.0
        %1422 = vmatpush1.msra.mxu0 0.0
        %1423 = vmatprep.subr.mxu0 0.0
        %1424 = vmatpush1.msra.mxu0 0.0
        %1425 = vmatprep.subr.mxu0 0.0
        %1426 = vmatpush1.msra.mxu0 0.0
        %1427 = vmatprep.subr.mxu0 0.0
        %1428 = vmatpush1.msra.mxu0 0.0
        %1429 = vmatprep.subr.mxu0 0.0
        %1430 = vmatpush1.msra.mxu0 0.0
        %1431 = vmatprep.subr.mxu0 0.0
        %1432 = vmatpush1.msra.mxu0 0.0
        %1433 = vmatprep.subr.mxu0 0.0
        %1434 = vmatpush1.msra.mxu0 0.0
        %1435 = vmatprep.subr.mxu0 0.0
        %1436 = vmatpush1.msra.mxu0 0.0
        %1437 = vmatprep.subr.mxu0 0.0
        %1438 = vmatpush1.msra.mxu0 0.0
        %1439 = vmatprep.subr.mxu0 0.0
        %1440 = vmatpush1.msra.mxu0 0.0
        %1441 = vmatprep.subr.mxu0 0.0
        %1442 = vmatpush1.msra.mxu0 0.0
        %1443 = vmatprep.subr.mxu0 0.0
        %1444 = vmatpush1.msra.mxu0 0.0
        %1445 = vmatprep.subr.mxu0 0.0
        %1446 = vmatpush1.msra.mxu0 0.0
        %1447 = vmatprep.subr.mxu0 0.0
        %1448 = vmatpush1.msra.mxu0 0.0
        %1449 = vmatprep.subr.mxu0 0.0
        %1450 = vmatpush1.msra.mxu0 0.0
        %1451 = vmatprep.subr.mxu0 0.0
        %1452 = vmatpush1.msra.mxu0 0.0
        %1453 = vmatprep.subr.mxu0 0.0
        %1454 = vmatpush1.msra.mxu0 0.0
        %1455 = vmatprep.subr.mxu0 0.0
        %1456 = vmatpush1.msra.mxu0 0.0
        %1457 = vmatprep.subr.mxu0 0.0
        %1458 = vmatpush1.msra.mxu0 0.0
        %1459 = vmatprep.subr.mxu0 0.0
        %1460 = vmatpush1.msra.mxu0 0.0
        %1461 = vmatprep.subr.mxu0 0.0
        %1462 = vmatpush1.msra.mxu0 0.0
        %1463 = vmatprep.subr.mxu0 0.0
        %1464 = vmatpush1.msra.mxu0 0.0
        %1465 = vmatprep.subr.mxu0 0.0
        %1466 = vmatpush1.msra.mxu0 0.0
        %1467 = vmatprep.subr.mxu0 0.0
        %1468 = vmatpush1.msra.mxu0 0.0
        %1469 = vmatprep.subr.mxu0 0.0
        %1470 = vmatpush1.msra.mxu0 0.0
        %1471 = vmatprep.subr.mxu0 0.0
        %1472 = vmatpush1.msra.mxu0 0.0
        %1473 = vmatprep.subr.mxu0 0.0
        %1474 = vmatpush1.msra.mxu0 0.0
        %1475 = vmatprep.mubr.f32.mxu0 0.0
        %1476 = vmatmul.mubr.f32.gmra.mrb[0].mxu0 %v1409
        %v1477 = vpop.f32.mrb[0].mxu0
        %v1478 = vadd.f32 0.0, %v1477
        %v1479 = vpop.f32.mrb[0].mxu0
        %1480 = vdwg.mxu0
        %v1481 = vadd.f32 %v1407, %v1478
        %v1483 = vsel %vm575, %v1244, 0
        %1485 = vmatprep.subr.mxu0 0.0
        %1486 = vmatpush1.msra.mxu0 %v1259
        %1487 = vmatprep.subr.mxu0 0.0
        %1488 = vmatpush1.msra.mxu0 0.0
        %1489 = vmatprep.subr.mxu0 0.0
        %1490 = vmatpush1.msra.mxu0 0.0
        %1491 = vmatprep.subr.mxu0 0.0
        %1492 = vmatpush1.msra.mxu0 0.0
        %1493 = vmatprep.subr.mxu0 0.0
        %1494 = vmatpush1.msra.mxu0 0.0
        %1495 = vmatprep.subr.mxu0 0.0
        %1496 = vmatpush1.msra.mxu0 0.0
        %1497 = vmatprep.subr.mxu0 0.0
        %1498 = vmatpush1.msra.mxu0 0.0
        %1499 = vmatprep.subr.mxu0 0.0
        %1500 = vmatpush1.msra.mxu0 0.0
        %1501 = vmatprep.subr.mxu0 0.0
        %1502 = vmatpush1.msra.mxu0 0.0
        %1503 = vmatprep.subr.mxu0 0.0
        %1504 = vmatpush1.msra.mxu0 0.0
        %1505 = vmatprep.subr.mxu0 0.0
        %1506 = vmatpush1.msra.mxu0 0.0
        %1507 = vmatprep.subr.mxu0 0.0
        %1508 = vmatpush1.msra.mxu0 0.0
        %1509 = vmatprep.subr.mxu0 0.0
        %1510 = vmatpush1.msra.mxu0 0.0
        %1511 = vmatprep.subr.mxu0 0.0
        %1512 = vmatpush1.msra.mxu0 0.0
        %1513 = vmatprep.subr.mxu0 0.0
        %1514 = vmatpush1.msra.mxu0 0.0
        %1515 = vmatprep.subr.mxu0 0.0
        %1516 = vmatpush1.msra.mxu0 0.0
        %1517 = vmatprep.subr.mxu0 0.0
        %1518 = vmatpush1.msra.mxu0 0.0
        %1519 = vmatprep.subr.mxu0 0.0
        %1520 = vmatpush1.msra.mxu0 0.0
        %1521 = vmatprep.subr.mxu0 0.0
        %1522 = vmatpush1.msra.mxu0 0.0
        %1523 = vmatprep.subr.mxu0 0.0
        %1524 = vmatpush1.msra.mxu0 0.0
        %1525 = vmatprep.subr.mxu0 0.0
        %1526 = vmatpush1.msra.mxu0 0.0
        %1527 = vmatprep.subr.mxu0 0.0
        %1528 = vmatpush1.msra.mxu0 0.0
        %1529 = vmatprep.subr.mxu0 0.0
        %1530 = vmatpush1.msra.mxu0 0.0
        %1531 = vmatprep.subr.mxu0 0.0
        %1532 = vmatpush1.msra.mxu0 0.0
        %1533 = vmatprep.subr.mxu0 0.0
        %1534 = vmatpush1.msra.mxu0 0.0
        %1535 = vmatprep.subr.mxu0 0.0
        %1536 = vmatpush1.msra.mxu0 0.0
        %1537 = vmatprep.subr.mxu0 0.0
        %1538 = vmatpush1.msra.mxu0 0.0
        %1539 = vmatprep.subr.mxu0 0.0
        %1540 = vmatpush1.msra.mxu0 0.0
        %1541 = vmatprep.subr.mxu0 0.0
        %1542 = vmatpush1.msra.mxu0 0.0
        %1543 = vmatprep.subr.mxu0 0.0
        %1544 = vmatpush1.msra.mxu0 0.0
        %1545 = vmatprep.subr.mxu0 0.0
        %1546 = vmatpush1.msra.mxu0 0.0
        %1547 = vmatprep.subr.mxu0 0.0
        %1548 = vmatpush1.msra.mxu0 0.0
        %1549 = vmatprep.mubr.f32.mxu0 0.0
        %1550 = vmatmul.mubr.f32.gmra.mrb[0].mxu0 %v1483
        %v1551 = vpop.f32.mrb[0].mxu0
        %v1552 = vadd.f32 0.0, %v1551
        %v1553 = vpop.f32.mrb[0].mxu0
        %1554 = vdwg.mxu0
        %v1555 = vadd.f32 %v1481, %v1552
        %vm1556 = vcmask 261120
        %v1557 = vsel %vm1556, %v1555, 0.0
        %1558 = vadd.xlane.f32.xlu0 %v1557
        %v1559 = vpop.xlane.xlu0 %1558
        %v1560 = vrcp.pop 32.0
        %v1561 = vmul.f32 %v1559, %v1560
        %v1562 = vsub.f32 %v1555, %v1561
        %v1563 = vmul.f32 %v1562, %v1562
        %v1564 = vsel %vm1556, %v1563, 0.0
        %1565 = vadd.xlane.f32.xlu0 %v1564
        %v1566 = vpop.xlane.xlu0 %1565
        %v1567 = vmul.f32 %v1566, %v1560
        %v1568 = vadd.f32 %v1567, 1e-05
        %v1569 = vrsqrt.pop %v1568
        %v1570 = vmul.f32 %v1562, %v1569
        %v1571 = vld [vmem:[#allocation14] sm:$0x1]
        %v1573 = vlaneseq
        %v1574 = vshrl.u32 %v1573, 7
        %v1575 = vsub.s32 0, %v1574
        %v1576 = vrot.slane %v1571, %v1575
        %v1578 = vmul.f32 %v1570, %v1576
        %v1579 = vld [vmem:[#allocation15] sm:$0x1]
        %v1581 = vlaneseq
        %v1582 = vshrl.u32 %v1581, 7
        %v1583 = vsub.s32 0, %v1582
        %v1584 = vrot.slane %v1579, %v1583
        %v1586 = vadd.f32 %v1578, %v1584
        %1587 = vst.msk [vmem:[%s566] sm:$0xff] %vm1556, %v1586
        %s1588 = sand.u32 %s273, 1
        %s1589 = scalar_lea.sflag [#allocation4], %s1588
        %s1590 = sand.u32 %s273, 1
        %s1591 = smul.addr %s1590, 8
        %s1592 = scalar_lea.vmem [#allocation16], %s1591
        // Predicated region
        $region93: #{text_classifier_forward.8} parent=55 // pred_check
          %p1593 = pneg %p283
        $region94: #{text_classifier_forward.8} parent=55 // pred_check_branch
          %1595 = sbr.rel (%p1593) target = $region96
        $region95: #{text_classifier_forward.8} parent=55 // pred_region
          %s1597 = ssub.s32 128, 128
          %1598 = vsyncadd %s1589, %s1597
          %s1599 = sadd.s32 %s38, %s37
          %s1600 = smul.addr %s1599, 128
          %s1601 = scalar_lea.hbm %s9, %s1600
          %s1603 = sshll.u32 %s1592, 4
          %s1604 = int_to_ptr.vmem [resolvable:$true] %s1603
          %1606 = dma.vmem_to_hbm [thread:$0]  %s1604, 128, %s1601, %s1589
        $region96: #{text_classifier_forward.8} parent=55 // pred_fallthru
          _
      $region56: #{text_classifier_forward.8} parent=5 // pred_fallthru
        _
      %p1607 = scmp.le.s32.totalorder 2, %s28
      // Predicated region
      $region97: #{text_classifier_forward.8} parent=5 // pred_check
        %p1608 = pneg %p1607
      $region98: #{text_classifier_forward.8} parent=5 // pred_check_branch
        %1610 = sbr.rel (%p1608) target = $region100
      $region99: #{text_classifier_forward.8} parent=5 // pred_region
        %s1611 = ssub.s32 %s28, 2
        // Predicated region
        $region101: #{text_classifier_forward.8} parent=99 // pred_check
          %p1612 = pneg %p289
        $region102: #{text_classifier_forward.8} parent=99 // pred_check_branch
          %1614 = sbr.rel (%p1612) target = $region104
        $region103: #{text_classifier_forward.8} parent=99 // pred_region
          %s1615 = sand.u32 %s274, 1
          %s1616 = scalar_lea.sflag [#allocation4], %s1615
          %s1617 = sand.u32 %s274, 1
          %s1618 = smul.addr %s1617, 8
          %s1619 = scalar_lea.vmem [#allocation16], %s1618
          %1620 = dma.done %s1616, 128
        $region104: #{text_classifier_forward.8} parent=99 // pred_fallthru
          _
      $region100: #{text_classifier_forward.8} parent=5 // pred_fallthru
        _
    $region6: #{text_classifier_forward.8} parent=1 // loop_footer
      %s32 = sadd.s32 1, %s28
    $region7: #{text_classifier_forward.8} parent=1 // loop_footer_branch
      %27 = sbr.rel target = $region3
    $region8: #{text_classifier_forward.8} parent=1 // loop_exit
      _
    %1621 = vsyncpa [#allocation3], 1
    %s1622 = scalar_lea.sflag [#allocation3], 1
    %1623 = vsyncpa %s1622, 1
    %1624 = vsyncpa [#allocation6], 1
    %s1625 = scalar_lea.sflag [#allocation6], 1
    %1626 = vsyncpa %s1625, 1
    %1627 = vsyncpa [#allocation9], 1
    %s1628 = scalar_lea.sflag [#allocation9], 1
    %1629 = vsyncpa %s1628, 1
    %1630 = vsyncpa [#allocation12], 1
    %1631 = vsyncpa [#allocation4], 1
    %s1632 = scalar_lea.sflag [#allocation4], 1
    %1633 = vsyncpa %s1632, 1

</llo_original>
